<compile_context>
chip_gen: v5e
topology: v5e:2x2
jax: 0.10.0
libtpu: 0.0.40
codegen_flags: <defaults>
</compile_context>

<pallas_src>
import functools

import numpy as np
import jax
import jax.numpy as jnp
from jax.experimental import pallas as pl
from jax.experimental.pallas import tpu as pltpu


# --------------------------------------------------------------------------
# positional encoding table (same formula as position_encoding_init)
# --------------------------------------------------------------------------
def position_encoding_init(n_position, d_model):
    pe = np.array(
        [
            [pos / np.power(10000.0, 2 * (j // 2) / d_model) for j in range(d_model)]
            if pos != 0
            else np.zeros(d_model)
            for pos in range(n_position)
        ],
        dtype=np.float32,
    )
    pe[1:, 0::2] = np.sin(pe[1:, 0::2])
    pe[1:, 1::2] = np.cos(pe[1:, 1::2])
    return jnp.asarray(pe, dtype=jnp.float32)


# --------------------------------------------------------------------------
# small helpers
# --------------------------------------------------------------------------
def _layer_norm(v, g, b, eps=1e-6):
    # f32 LayerNorm (eps matches the PyTorch module's explicit eps=1e-06)
    mu = jnp.mean(v, axis=-1, keepdims=True)
    var = jnp.mean(jnp.square(v - mu), axis=-1, keepdims=True)
    return (v - mu) * jax.lax.rsqrt(var + eps) * g + b


def _pick_batch_tile(batch, seq_len, target_rows=512):
    """Largest divisor of `batch` with nb*seq_len <= target_rows, preferring a
    grid of >= 2 programs (v7x has 2 TensorCores/chip) when that is possible.

    target_rows=512 is a v7x-safe default; on v5e/v6e (128 MiB VMEM) it can be
    raised to 1024-2048 to amortise per-grid-step overhead further."""
    divs = [d for d in range(1, batch + 1) if batch % d == 0]
    cand = [d for d in divs if d * seq_len <= target_rows] or [1]
    nb = max(cand)
    if batch // nb < 2:
        smaller = [d for d in cand if batch // d >= 2]
        if smaller:
            # prefer tiles whose row count is a multiple of 16 (bf16 sublane packing)
            nice = [d for d in smaller if (d * seq_len) % 16 == 0]
            nb = max(nice) if nice else max(smaller)
    return nb


# --------------------------------------------------------------------------
# fused linear_align + positional-embedding kernel
# --------------------------------------------------------------------------
def _align_pos_kernel(x_ref, pos_ref, w_ref, b_ref, o_ref, *, seq_len):
    x = x_ref[...]                                    # (nb*S, in_dim) f32
    rows = x.shape[0]
    nb = rows // seq_len
    y = (
        jnp.dot(x.astype(jnp.bfloat16), w_ref[...],
                preferred_element_type=jnp.float32)
        + b_ref[...]
    )                                                 # (nb*S, D) f32
    # broadcast-add the (S, D) positional table to every sequence in the tile
    y = y.reshape(nb, seq_len, y.shape[-1]) + pos_ref[...]
    o_ref[...] = y.reshape(rows, -1).astype(o_ref.dtype)


def align_pos(x_flat, pos_table, w, b, *, seq_len, batch_per_tile):
    rows, in_dim = x_flat.shape
    d_model = w.shape[1]
    tm = batch_per_tile * seq_len
    kernel = functools.partial(_align_pos_kernel, seq_len=seq_len)
    return pl.pallas_call(
        kernel,
        out_shape=jax.ShapeDtypeStruct((rows, d_model), jnp.bfloat16),
        grid=(rows // tm,),
        in_specs=[
            pl.BlockSpec((tm, in_dim), lambda i: (i, 0)),
            pl.BlockSpec((seq_len, d_model), lambda i: (0, 0)),   # pos table (once)
            pl.BlockSpec((in_dim, d_model), lambda i: (0, 0)),
            pl.BlockSpec((1, d_model), lambda i: (0, 0)),
        ],
        out_specs=pl.BlockSpec((tm, d_model), lambda i: (i, 0)),
        compiler_params=pltpu.CompilerParams(dimension_semantics=("parallel",)),
    )(x_flat, pos_table, w, b)


# --------------------------------------------------------------------------
# fused pre-LN encoder layer kernel
# --------------------------------------------------------------------------
def _split_heads(mat, nb, seq_len, heads, dk):
    # (nb*S, H*dk) -> (H*nb, S, dk): H static lane slices + one axis-0 stack
    parts = [
        mat[:, h * dk:(h + 1) * dk].reshape(nb, seq_len, dk) for h in range(heads)
    ]
    return jnp.stack(parts, axis=0).reshape(heads * nb, seq_len, dk)


def _encoder_layer_kernel(
    x_ref, mask_ref,
    ln1_g, ln1_b, wqkv, bqkv, wo, bo,
    ln2_g, ln2_b, w1, b1, w2, b2,
    fln_g, fln_b,
    o_ref, *, heads, seq_len, apply_final_ln,
):
    """One pre-LN transformer encoder layer for a tile of `nb` batch elems."""
    S, H = seq_len, heads
    x = x_ref[...].astype(jnp.float32)                # (rows, D); bf16 inter-layer acts
    rows, D = x.shape
    nb = rows // S
    dk = D // H

    # ---- self-attention block (pre-LN); 1/sqrt(dk) folded into Wq at init ----
    xn = _layer_norm(x, ln1_g[...], ln1_b[...])
    qkv = (
        jnp.dot(xn.astype(jnp.bfloat16), wqkv[...],
                preferred_element_type=jnp.float32)
        + bqkv[...]
    )                                                 # (rows, 3D) f32

    # lane-boundary (128-wide) Q/K/V slices, then one head split each
    qh = _split_heads(qkv[:, :D], nb, S, H, dk).astype(jnp.bfloat16)       # (H*nb,S,dk)
    kh = _split_heads(qkv[:, D:2 * D], nb, S, H, dk).astype(jnp.bfloat16)
    vh = _split_heads(qkv[:, 2 * D:], nb, S, H, dk).astype(jnp.bfloat16)

    # all (head, batch) pairs in one batched contraction
    s = jnp.einsum("bqd,bkd->bqk", qh, kh,
                   preferred_element_type=jnp.float32)                      # (H*nb,S,S)
    # additive key mask (0 / -1e30), tiled head-major so row h*nb+b gets mask[b]
    s = s + jnp.tile(mask_ref[...], (H, 1, 1))
    m = jnp.max(s, axis=-1, keepdims=True)
    e = jnp.exp(s - m)
    # TODO(synk): approx reciprocal (EUP slot) deviates slightly from exact
    # softmax; use approx=False for bit-tight parity tests vs. PyTorch.
    p = e * pl.reciprocal(jnp.sum(e, axis=-1, keepdims=True), approx=True)

    ctx = jnp.einsum("bqk,bkd->bqd", p.astype(jnp.bfloat16), vh,
                     preferred_element_type=jnp.float32)                    # (H*nb,S,dk)

    # merge heads back to a lane-dense (rows, D) slab -> one K=D Wo matmul
    ctx_flat = jnp.concatenate(
        [ctx[h * nb:(h + 1) * nb].reshape(rows, dk) for h in range(H)], axis=-1
    )
    attn = (
        jnp.dot(ctx_flat.astype(jnp.bfloat16), wo[...],
                preferred_element_type=jnp.float32)
        + bo[...]
    )
    x = x + attn                                      # residual (dropout = identity)

    # ---- position-wise feed-forward block (pre-LN) ----
    xn = _layer_norm(x, ln2_g[...], ln2_b[...])
    h1 = jnp.maximum(
        jnp.dot(xn.astype(jnp.bfloat16), w1[...],
                preferred_element_type=jnp.float32) + b1[...],
        0.0,
    )
    ff = jnp.dot(h1.astype(jnp.bfloat16), w2[...],
                 preferred_element_type=jnp.float32) + b2[...]
    out = x + ff

    if apply_final_ln:                                # final encoder LayerNorm fused in
        out = _layer_norm(out, fln_g[...], fln_b[...])
    o_ref[...] = out.astype(o_ref.dtype)


def encoder_layer(x_flat, mask_add, lp, final_ln, *, heads, seq_len,
                  batch_per_tile, apply_final_ln, out_dtype):
    rows, D = x_flat.shape
    B = mask_add.shape[0]
    nb = batch_per_tile
    H = heads
    d_ff = lp["w1"].shape[1]
    row_tile = nb * seq_len

    def full(shape):
        n = len(shape)
        return pl.BlockSpec(shape, lambda g, n=n: (0,) * n)

    in_specs = [
        pl.BlockSpec((row_tile, D), lambda g: (g, 0)),          # x (rows of B*S)
        pl.BlockSpec((nb, 1, seq_len), lambda g: (g, 0, 0)),    # additive key mask
        full((1, D)), full((1, D)),                             # ln1 gamma/beta
        full((D, 3 * D)), full((1, 3 * D)),                     # fused Wqkv, bqkv
        full((D, D)), full((1, D)),                             # Wo, bo
        full((1, D)), full((1, D)),                             # ln2 gamma/beta
        full((D, d_ff)), full((1, d_ff)),                       # W1, b1
        full((d_ff, D)), full((1, D)),                          # W2, b2
        full((1, D)), full((1, D)),                             # final LN gamma/beta
    ]
    # TODO(synk): for large d_model/d_ff, stream W1/W2 over a K/N grid axis
    # instead of requiring full weight residency (matters on v7x's 64 MiB VMEM).

    # VMEM budget: resident weights + per-step temporaries
    #   x/xn/residual (~4*D f32), qkv (3D f32 + 3D bf16), ffn hidden (d_ff f32+bf16),
    #   scores/probs/ctx (~3 * nb*H*S*S f32). Capped at 48 MiB (v7x-safe).
    weight_bytes = sum(
        int(a.size) * a.dtype.itemsize
        for a in (lp["wqkv"], lp["wo"], lp["w1"], lp["w2"])
    )
    act_bytes = (row_tile * (4 * D * 4 + 3 * D * 6 + d_ff * 6)
                 + 3 * nb * H * seq_len * seq_len * 4)
    vmem_limit = int(min(max(2 * weight_bytes + 3 * act_bytes, 16 << 20), 48 << 20))

    kernel = functools.partial(
        _encoder_layer_kernel, heads=heads, seq_len=seq_len,
        apply_final_ln=apply_final_ln,
    )
    return pl.pallas_call(
        kernel,
        out_shape=jax.ShapeDtypeStruct((rows, D), out_dtype),
        grid=(B // nb,),
        in_specs=in_specs,
        out_specs=pl.BlockSpec((row_tile, D), lambda g: (g, 0)),
        compiler_params=pltpu.CompilerParams(
            dimension_semantics=("parallel",),
            vmem_limit_bytes=vmem_limit,
        ),
    )(
        x_flat, mask_add,
        lp["ln1_g"], lp["ln1_b"], lp["wqkv"], lp["bqkv"], lp["wo"], lp["bo"],
        lp["ln2_g"], lp["ln2_b"], lp["w1"], lp["b1"], lp["w2"], lp["b2"],
        final_ln[0], final_ln[1],
    )


# --------------------------------------------------------------------------
# parameter init (deterministic, synthetic).  MXU weights stored in bf16.
# --------------------------------------------------------------------------
def _dense(key, fan_in, fan_out):
    kw, kb = jax.random.split(key)
    w = jax.random.normal(kw, (fan_in, fan_out), jnp.float32) * 0.05
    b = jax.random.normal(kb, (1, fan_out), jnp.float32) * 0.01
    return w, b


def init_params(key, num_layers, input_dim, d_model, heads, d_ff, n_position=1000):
    dk = d_model // heads
    scale = 1.0 / float(np.sqrt(dk))
    keys = jax.random.split(key, num_layers + 1)
    align_w, align_b = _dense(keys[0], input_dim, d_model)
    layers = []
    for li in range(num_layers):
        lk = jax.random.split(keys[li + 1], 6)
        wq, bq = _dense(lk[0], d_model, d_model)
        wk, bk = _dense(lk[1], d_model, d_model)
        wv, bv = _dense(lk[2], d_model, d_model)
        wo, bo = _dense(lk[3], d_model, d_model)
        w1, b1 = _dense(lk[4], d_model, d_ff)
        w2, b2 = _dense(lk[5], d_ff, d_model)
        layers.append(dict(
            ln1_g=jnp.ones((1, d_model), jnp.float32),
            ln1_b=jnp.zeros((1, d_model), jnp.float32),
            # fused QKV; the 1/sqrt(dk) attention scale is folded into Wq/bq
            wqkv=jnp.concatenate([wq * scale, wk, wv], axis=1).astype(jnp.bfloat16),
            bqkv=jnp.concatenate([bq * scale, bk, bv], axis=1),
            wo=wo.astype(jnp.bfloat16), bo=bo,
            ln2_g=jnp.ones((1, d_model), jnp.float32),
            ln2_b=jnp.zeros((1, d_model), jnp.float32),
            w1=w1.astype(jnp.bfloat16), b1=b1,
            w2=w2.astype(jnp.bfloat16), b2=b2,
        ))
    return dict(
        align_w=align_w.astype(jnp.bfloat16), align_b=align_b,
        layers=layers,
        final_g=jnp.ones((1, d_model), jnp.float32),
        final_b=jnp.zeros((1, d_model), jnp.float32),
        pos_table=position_encoding_init(n_position, d_model),
    )


# --------------------------------------------------------------------------
# full forward pass
# --------------------------------------------------------------------------
def transformer_encoder_forward(src, lengths, params, heads):
    S, B, in_dim = src.shape
    D = params["align_w"].shape[1]
    rows = B * S

    # layout glue (plain JAX): (S, B, in) -> batch-major flattened (B*S, in)
    # TODO(synk): this small input transpose stays in XLA; folding it into the
    # align kernel's out_spec would need sub-(8,128) blocks.
    x_flat = jnp.transpose(src, (1, 0, 2)).reshape(rows, in_dim)

    nb = _pick_batch_tile(B, S)

    # fused: linear_align + positional-embedding add (bf16 inter-layer acts)
    out = align_pos(x_flat, params["pos_table"][:S], params["align_w"],
                    params["align_b"], seq_len=S, batch_per_tile=nb)

    # additive key mask: 0 where t < lengths[b], else -1e30 (added to scores)
    # NOTE: lengths[b] == 0 degenerates to uniform attention over padding.
    valid = jnp.arange(S, dtype=jnp.int32)[None, :] < lengths[:, None]
    mask_add = jnp.where(valid, 0.0, -1e30).astype(jnp.float32)[:, None, :]  # (B,1,S)

    n_layers = len(params["layers"])
    final_ln = (params["final_g"], params["final_b"])
    # TODO(synk): per-layer weight DMA is serialized at pallas_call boundaries;
    # a layer grid axis / cross-call prefetch would hide it under compute.
    for li, lp in enumerate(params["layers"]):
        last = li == n_layers - 1
        out = encoder_layer(
            out, mask_add, lp, final_ln,
            heads=heads, seq_len=S, batch_per_tile=nb,
            apply_final_ln=last,                 # final LayerNorm fused into last layer
            out_dtype=jnp.float32 if last else jnp.bfloat16,
        )
    return out.reshape(B, S, D)


# --------------------------------------------------------------------------
if __name__ == "__main__":
    SEQ, BATCH, INPUT_DIM = 8, 4, 16
    # d_model = 128 so every kernel block is lane-dense (full 128-lane rows)
    D_MODEL, HEADS, D_FF, NUM_LAYERS = 128, 4, 256, 2
    # TODO(synk): dropout is modelled as identity (inference mode), like .eval().

    key = jax.random.PRNGKey(0)
    k_src, k_par = jax.random.split(key)

    src = jax.random.normal(k_src, (SEQ, BATCH, INPUT_DIM), jnp.float32)
    lengths = jnp.array([8, 5, 3, 8], dtype=jnp.int32)

    params = init_params(k_par, NUM_LAYERS, INPUT_DIM, D_MODEL, HEADS, D_FF)

    fwd = jax.jit(functools.partial(transformer_encoder_forward, heads=HEADS))
    out = fwd(src, lengths, params)
    out = jax.block_until_ready(out)

    assert out.shape == (BATCH, SEQ, D_MODEL)
    assert bool(jnp.all(jnp.isfinite(out)))
    print("KERNEL_OK")
</pallas_src>

<mosaic_0001>
module attributes {stable_mosaic.version = 11 : i64} {
  func.func @_align_pos_kernel(%arg0: i32, %arg1: memref<16x16xf32, #tpu.memory_space<vmem>>, %arg2: memref<8x128xf32, #tpu.memory_space<vmem>>, %arg3: memref<16x128xbf16, #tpu.memory_space<vmem>>, %arg4: memref<1x128xf32, #tpu.memory_space<vmem>>, %arg5: memref<16x128xbf16, #tpu.memory_space<vmem>>) attributes {dimension_semantics = [#tpu.dimension_semantics<parallel>], iteration_bounds = array<i64: 2>, scalar_prefetch = 0 : i64, scratch_operands = 0 : i64, tpu.core_type = #tpu.core_type<tc>, window_params = [{transform_indices = @transform_0, window_bounds = array<i64: 16, 16>}, {pipeline_mode = #tpu.pipeline_mode<synchronous>, transform_indices = @transform_1, window_bounds = array<i64: 8, 128>}, {pipeline_mode = #tpu.pipeline_mode<synchronous>, transform_indices = @transform_2, window_bounds = array<i64: 16, 128>}, {pipeline_mode = #tpu.pipeline_mode<synchronous>, transform_indices = @transform_3, window_bounds = array<i64: 1, 128>}, {transform_indices = @transform_4, window_bounds = array<i64: 16, 128>}]} {
    %c0 = arith.constant 0 : index
    %c0_0 = arith.constant 0 : index
    %0 = vector.load %arg1[%c0, %c0_0] : memref<16x16xf32, #tpu.memory_space<vmem>>, vector<16x16xf32>
    %1 = arith.truncf %0 : vector<16x16xf32> to vector<16x16xbf16>
    %c0_1 = arith.constant 0 : index
    %c0_2 = arith.constant 0 : index
    %2 = vector.load %arg3[%c0_1, %c0_2] : memref<16x128xbf16, #tpu.memory_space<vmem>>, vector<16x128xbf16>
    %cst = arith.constant dense<0.000000e+00> : vector<16x128xf32>
    %3 = tpu.matmul %1, %2, %cst {dimension_numbers = #tpu.dot_dimension_numbers<[1], [0], [0], [1], [0, 0, 1, 1], [], []>} : vector<16x16xbf16>, vector<16x128xbf16>, vector<16x128xf32> -> vector<16x128xf32>
    %c0_3 = arith.constant 0 : index
    %c0_4 = arith.constant 0 : index
    %4 = vector.load %arg4[%c0_3, %c0_4] : memref<1x128xf32, #tpu.memory_space<vmem>>, vector<1x128xf32>
    %5 = vector.broadcast %4 : vector<1x128xf32> to vector<16x128xf32>
    %6 = arith.addf %3, %5 : vector<16x128xf32>
    %7 = vector.shape_cast %6 : vector<16x128xf32> to vector<2x8x128xf32>
    %c0_5 = arith.constant 0 : index
    %c0_6 = arith.constant 0 : index
    %8 = vector.load %arg2[%c0_5, %c0_6] : memref<8x128xf32, #tpu.memory_space<vmem>>, vector<8x128xf32>
    %9 = vector.shape_cast %8 : vector<8x128xf32> to vector<1x8x128xf32>
    %10 = vector.broadcast %9 : vector<1x8x128xf32> to vector<2x8x128xf32>
    %11 = arith.addf %7, %10 : vector<2x8x128xf32>
    %12 = vector.shape_cast %11 : vector<2x8x128xf32> to vector<16x128xf32>
    %13 = arith.truncf %12 : vector<16x128xf32> to vector<16x128xbf16>
    %c0_7 = arith.constant 0 : index
    %c0_8 = arith.constant 0 : index
    %14 = vector.load %arg5[%c0_7, %c0_8] : memref<16x128xbf16, #tpu.memory_space<vmem>>, vector<16x128xbf16>
    tpu.vector_store %arg5[%c0_7, %c0_8], %13 {strides = array<i32>} : memref<16x128xbf16, #tpu.memory_space<vmem>>, vector<16x128xbf16>,
    return
  }
  func.func @transform_0(%arg0: i32) -> (i32, i32) {
    %c0_i32 = arith.constant 0 : i32
    %c0_i32_0 = arith.constant 0 : i32
    return %arg0, %c0_i32 : i32, i32
  }
  func.func @transform_1(%arg0: i32) -> (i32, i32) {
    %c0_i32 = arith.constant 0 : i32
    %c0_i32_0 = arith.constant 0 : i32
    %c0_i32_1 = arith.constant 0 : i32
    return %c0_i32, %c0_i32_0 : i32, i32
  }
  func.func @transform_2(%arg0: i32) -> (i32, i32) {
    %c0_i32 = arith.constant 0 : i32
    %c0_i32_0 = arith.constant 0 : i32
    %c0_i32_1 = arith.constant 0 : i32
    return %c0_i32, %c0_i32_0 : i32, i32
  }
  func.func @transform_3(%arg0: i32) -> (i32, i32) {
    %c0_i32 = arith.constant 0 : i32
    %c0_i32_0 = arith.constant 0 : i32
    %c0_i32_1 = arith.constant 0 : i32
    return %c0_i32, %c0_i32_0 : i32, i32
  }
  func.func @transform_4(%arg0: i32) -> (i32, i32) {
    %c0_i32 = arith.constant 0 : i32
    %c0_i32_0 = arith.constant 0 : i32
    return %arg0, %c0_i32 : i32, i32
  }
}

module attributes {stable_mosaic.version = 11 : i64} {
  func.func @_encoder_layer_kernel(%arg0: i32, %arg1: memref<16x128xbf16, #tpu.memory_space<vmem>>, %arg2: memref<2x1x8xf32, #tpu.memory_space<vmem>>, %arg3: memref<1x128xf32, #tpu.memory_space<vmem>>, %arg4: memref<1x128xf32, #tpu.memory_space<vmem>>, %arg5: memref<128x384xbf16, #tpu.memory_space<vmem>>, %arg6: memref<1x384xf32, #tpu.memory_space<vmem>>, %arg7: memref<128x128xbf16, #tpu.memory_space<vmem>>, %arg8: memref<1x128xf32, #tpu.memory_space<vmem>>, %arg9: memref<1x128xf32, #tpu.memory_space<vmem>>, %arg10: memref<1x128xf32, #tpu.memory_space<vmem>>, %arg11: memref<128x256xbf16, #tpu.memory_space<vmem>>, %arg12: memref<1x256xf32, #tpu.memory_space<vmem>>, %arg13: memref<256x128xbf16, #tpu.memory_space<vmem>>, %arg14: memref<1x128xf32, #tpu.memory_space<vmem>>, %arg15: memref<1x128xf32, #tpu.memory_space<vmem>>, %arg16: memref<1x128xf32, #tpu.memory_space<vmem>>, %arg17: memref<16x128xbf16, #tpu.memory_space<vmem>>) attributes {dimension_semantics = [#tpu.dimension_semantics<parallel>], iteration_bounds = array<i64: 2>, scalar_prefetch = 0 : i64, scratch_operands = 0 : i64, tpu.core_type = #tpu.core_type<tc>, window_params = [{transform_indices = @transform_0, window_bounds = array<i64: 16, 128>}, {transform_indices = @transform_1, window_bounds = array<i64: 2, 1, 8>}, {pipeline_mode = #tpu.pipeline_mode<synchronous>, transform_indices = @transform_2, window_bounds = array<i64: 1, 128>}, {pipeline_mode = #tpu.pipeline_mode<synchronous>, transform_indices = @transform_3, window_bounds = array<i64: 1, 128>}, {pipeline_mode = #tpu.pipeline_mode<synchronous>, transform_indices = @transform_4, window_bounds = array<i64: 128, 384>}, {pipeline_mode = #tpu.pipeline_mode<synchronous>, transform_indices = @transform_5, window_bounds = array<i64: 1, 384>}, {pipeline_mode = #tpu.pipeline_mode<synchronous>, transform_indices = @transform_6, window_bounds = array<i64: 128, 128>}, {pipeline_mode = #tpu.pipeline_mode<synchronous>, transform_indices = @transform_7, window_bounds = array<i64: 1, 128>}, {pipeline_mode = #tpu.pipeline_mode<synchronous>, transform_indices = @transform_8, window_bounds = array<i64: 1, 128>}, {pipeline_mode = #tpu.pipeline_mode<synchronous>, transform_indices = @transform_9, window_bounds = array<i64: 1, 128>}, {pipeline_mode = #tpu.pipeline_mode<synchronous>, transform_indices = @transform_10, window_bounds = array<i64: 128, 256>}, {pipeline_mode = #tpu.pipeline_mode<synchronous>, transform_indices = @transform_11, window_bounds = array<i64: 1, 256>}, {pipeline_mode = #tpu.pipeline_mode<synchronous>, transform_indices = @transform_12, window_bounds = array<i64: 256, 128>}, {pipeline_mode = #tpu.pipeline_mode<synchronous>, transform_indices = @transform_13, window_bounds = array<i64: 1, 128>}, {pipeline_mode = #tpu.pipeline_mode<synchronous>, transform_indices = @transform_14, window_bounds = array<i64: 1, 128>}, {pipeline_mode = #tpu.pipeline_mode<synchronous>, transform_indices = @transform_15, window_bounds = array<i64: 1, 128>}, {transform_indices = @transform_16, window_bounds = array<i64: 16, 128>}]} {
    %c0 = arith.constant 0 : index
    %c0_0 = arith.constant 0 : index
    %0 = vector.load %arg1[%c0, %c0_0] : memref<16x128xbf16, #tpu.memory_space<vmem>>, vector<16x128xbf16>
    %1 = arith.extf %0 : vector<16x128xbf16> to vector<16x128xf32>
    %c0_1 = arith.constant 0 : index
    %c0_2 = arith.constant 0 : index
    %2 = vector.load %arg3[%c0_1, %c0_2] : memref<1x128xf32, #tpu.memory_space<vmem>>, vector<1x128xf32>
    %c0_3 = arith.constant 0 : index
    %c0_4 = arith.constant 0 : index
    %3 = vector.load %arg4[%c0_3, %c0_4] : memref<1x128xf32, #tpu.memory_space<vmem>>, vector<1x128xf32>
    %cst = arith.constant dense<0.000000e+00> : vector<16xf32>
    %4 = vector.multi_reduction <add>, %1, %cst [1] : vector<16x128xf32> to vector<16xf32>
    %5 = vector.shape_cast %4 : vector<16xf32> to vector<16x1xf32>
    %cst_5 = arith.constant 1.280000e+02 : f32
    %6 = vector.broadcast %cst_5 : f32 to vector<16x1xf32>
    %7 = arith.divf %5, %6 : vector<16x1xf32>
    %8 = vector.broadcast %7 : vector<16x1xf32> to vector<16x128xf32>
    %9 = arith.subf %1, %8 : vector<16x128xf32>
    %10 = arith.mulf %9, %9 : vector<16x128xf32>
    %cst_6 = arith.constant dense<0.000000e+00> : vector<16xf32>
    %11 = vector.multi_reduction <add>, %10, %cst_6 [1] : vector<16x128xf32> to vector<16xf32>
    %12 = vector.shape_cast %11 : vector<16xf32> to vector<16x1xf32>
    %cst_7 = arith.constant 1.280000e+02 : f32
    %13 = vector.broadcast %cst_7 : f32 to vector<16x1xf32>
    %14 = arith.divf %12, %13 : vector<16x1xf32>
    %15 = vector.broadcast %7 : vector<16x1xf32> to vector<16x128xf32>
    %16 = arith.subf %1, %15 : vector<16x128xf32>
    %cst_8 = arith.constant 9.99999997E-7 : f32
    %17 = vector.broadcast %cst_8 : f32 to vector<16x1xf32>
    %18 = arith.addf %14, %17 : vector<16x1xf32>
    %19 = math.rsqrt %18 : vector<16x1xf32>
    %20 = vector.broadcast %19 : vector<16x1xf32> to vector<16x128xf32>
    %21 = arith.mulf %16, %20 : vector<16x128xf32>
    %22 = vector.broadcast %2 : vector<1x128xf32> to vector<16x128xf32>
    %23 = arith.mulf %21, %22 : vector<16x128xf32>
    %24 = vector.broadcast %3 : vector<1x128xf32> to vector<16x128xf32>
    %25 = arith.addf %23, %24 : vector<16x128xf32>
    %26 = arith.truncf %25 : vector<16x128xf32> to vector<16x128xbf16>
    %c0_9 = arith.constant 0 : index
    %c0_10 = arith.constant 0 : index
    %27 = vector.load %arg5[%c0_9, %c0_10] : memref<128x384xbf16, #tpu.memory_space<vmem>>, vector<128x384xbf16>
    %cst_11 = arith.constant dense<0.000000e+00> : vector<16x384xf32>
    %28 = tpu.matmul %26, %27, %cst_11 {dimension_numbers = #tpu.dot_dimension_numbers<[1], [0], [0], [1], [0, 0, 1, 1], [], []>} : vector<16x128xbf16>, vector<128x384xbf16>, vector<16x384xf32> -> vector<16x384xf32>
    %c0_12 = arith.constant 0 : index
    %c0_13 = arith.constant 0 : index
    %29 = vector.load %arg6[%c0_12, %c0_13] : memref<1x384xf32, #tpu.memory_space<vmem>>, vector<1x384xf32>
    %30 = vector.broadcast %29 : vector<1x384xf32> to vector<16x384xf32>
    %31 = arith.addf %28, %30 : vector<16x384xf32>
    %32 = vector.extract_strided_slice %31 {offsets = [0, 0], sizes = [16, 128], strides = [1, 1]} : vector<16x384xf32> to vector<16x128xf32>
    %33 = vector.extract_strided_slice %32 {offsets = [0, 0], sizes = [16, 32], strides = [1, 1]} : vector<16x128xf32> to vector<16x32xf32>
    %34 = vector.shape_cast %33 : vector<16x32xf32> to vector<2x8x32xf32>
    %35 = vector.extract_strided_slice %32 {offsets = [0, 32], sizes = [16, 32], strides = [1, 1]} : vector<16x128xf32> to vector<16x32xf32>
    %36 = vector.shape_cast %35 : vector<16x32xf32> to vector<2x8x32xf32>
    %37 = vector.extract_strided_slice %32 {offsets = [0, 64], sizes = [16, 32], strides = [1, 1]} : vector<16x128xf32> to vector<16x32xf32>
    %38 = vector.shape_cast %37 : vector<16x32xf32> to vector<2x8x32xf32>
    %39 = vector.extract_strided_slice %32 {offsets = [0, 96], sizes = [16, 32], strides = [1, 1]} : vector<16x128xf32> to vector<16x32xf32>
    %40 = vector.shape_cast %39 : vector<16x32xf32> to vector<2x8x32xf32>
    %41 = vector.shape_cast %34 : vector<2x8x32xf32> to vector<1x2x8x32xf32>
    %42 = vector.shape_cast %36 : vector<2x8x32xf32> to vector<1x2x8x32xf32>
    %43 = vector.shape_cast %38 : vector<2x8x32xf32> to vector<1x2x8x32xf32>
    %44 = vector.shape_cast %40 : vector<2x8x32xf32> to vector<1x2x8x32xf32>
    %45 = tpu.concatenate %41, %42, %43, %44 in 0 : vector<1x2x8x32xf32>, vector<1x2x8x32xf32>, vector<1x2x8x32xf32>, vector<1x2x8x32xf32> -> vector<4x2x8x32xf32>
    %46 = vector.shape_cast %45 : vector<4x2x8x32xf32> to vector<8x8x32xf32>
    %47 = arith.truncf %46 : vector<8x8x32xf32> to vector<8x8x32xbf16>
    %48 = vector.extract_strided_slice %31 {offsets = [0, 128], sizes = [16, 128], strides = [1, 1]} : vector<16x384xf32> to vector<16x128xf32>
    %49 = vector.extract_strided_slice %48 {offsets = [0, 0], sizes = [16, 32], strides = [1, 1]} : vector<16x128xf32> to vector<16x32xf32>
    %50 = vector.shape_cast %49 : vector<16x32xf32> to vector<2x8x32xf32>
    %51 = vector.extract_strided_slice %48 {offsets = [0, 32], sizes = [16, 32], strides = [1, 1]} : vector<16x128xf32> to vector<16x32xf32>
    %52 = vector.shape_cast %51 : vector<16x32xf32> to vector<2x8x32xf32>
    %53 = vector.extract_strided_slice %48 {offsets = [0, 64], sizes = [16, 32], strides = [1, 1]} : vector<16x128xf32> to vector<16x32xf32>
    %54 = vector.shape_cast %53 : vector<16x32xf32> to vector<2x8x32xf32>
    %55 = vector.extract_strided_slice %48 {offsets = [0, 96], sizes = [16, 32], strides = [1, 1]} : vector<16x128xf32> to vector<16x32xf32>
    %56 = vector.shape_cast %55 : vector<16x32xf32> to vector<2x8x32xf32>
    %57 = vector.shape_cast %50 : vector<2x8x32xf32> to vector<1x2x8x32xf32>
    %58 = vector.shape_cast %52 : vector<2x8x32xf32> to vector<1x2x8x32xf32>
    %59 = vector.shape_cast %54 : vector<2x8x32xf32> to vector<1x2x8x32xf32>
    %60 = vector.shape_cast %56 : vector<2x8x32xf32> to vector<1x2x8x32xf32>
    %61 = tpu.concatenate %57, %58, %59, %60 in 0 : vector<1x2x8x32xf32>, vector<1x2x8x32xf32>, vector<1x2x8x32xf32>, vector<1x2x8x32xf32> -> vector<4x2x8x32xf32>
    %62 = vector.shape_cast %61 : vector<4x2x8x32xf32> to vector<8x8x32xf32>
    %63 = arith.truncf %62 : vector<8x8x32xf32> to vector<8x8x32xbf16>
    %64 = vector.extract_strided_slice %31 {offsets = [0, 256], sizes = [16, 128], strides = [1, 1]} : vector<16x384xf32> to vector<16x128xf32>
    %65 = vector.extract_strided_slice %64 {offsets = [0, 0], sizes = [16, 32], strides = [1, 1]} : vector<16x128xf32> to vector<16x32xf32>
    %66 = vector.shape_cast %65 : vector<16x32xf32> to vector<2x8x32xf32>
    %67 = vector.extract_strided_slice %64 {offsets = [0, 32], sizes = [16, 32], strides = [1, 1]} : vector<16x128xf32> to vector<16x32xf32>
    %68 = vector.shape_cast %67 : vector<16x32xf32> to vector<2x8x32xf32>
    %69 = vector.extract_strided_slice %64 {offsets = [0, 64], sizes = [16, 32], strides = [1, 1]} : vector<16x128xf32> to vector<16x32xf32>
    %70 = vector.shape_cast %69 : vector<16x32xf32> to vector<2x8x32xf32>
    %71 = vector.extract_strided_slice %64 {offsets = [0, 96], sizes = [16, 32], strides = [1, 1]} : vector<16x128xf32> to vector<16x32xf32>
    %72 = vector.shape_cast %71 : vector<16x32xf32> to vector<2x8x32xf32>
    %73 = vector.shape_cast %66 : vector<2x8x32xf32> to vector<1x2x8x32xf32>
    %74 = vector.shape_cast %68 : vector<2x8x32xf32> to vector<1x2x8x32xf32>
    %75 = vector.shape_cast %70 : vector<2x8x32xf32> to vector<1x2x8x32xf32>
    %76 = vector.shape_cast %72 : vector<2x8x32xf32> to vector<1x2x8x32xf32>
    %77 = tpu.concatenate %73, %74, %75, %76 in 0 : vector<1x2x8x32xf32>, vector<1x2x8x32xf32>, vector<1x2x8x32xf32>, vector<1x2x8x32xf32> -> vector<4x2x8x32xf32>
    %78 = vector.shape_cast %77 : vector<4x2x8x32xf32> to vector<8x8x32xf32>
    %79 = arith.truncf %78 : vector<8x8x32xf32> to vector<8x8x32xbf16>
    "tpu.trace_start"() <{level = 10 : i32, message = "bqd,bkd->bqk"}> : () -> ()
    %cst_14 = arith.constant dense<0.000000e+00> : vector<8x8x8xf32>
    %80 = tpu.matmul %47, %63, %cst_14 {dimension_numbers = #tpu.dot_dimension_numbers<[2], [2], [1], [1], [0, 0, 0, 1, 1, 1], [0], [0]>} : vector<8x8x32xbf16>, vector<8x8x32xbf16>, vector<8x8x8xf32> -> vector<8x8x8xf32>
    "tpu.trace_stop"() : () -> ()
    %c0_15 = arith.constant 0 : index
    %c0_16 = arith.constant 0 : index
    %c0_17 = arith.constant 0 : index
    %81 = vector.load %arg2[%c0_15, %c0_16, %c0_17] : memref<2x1x8xf32, #tpu.memory_space<vmem>>, vector<2x1x8xf32>
    %82 = tpu.concatenate %81, %81, %81, %81 in 0 : vector<2x1x8xf32>, vector<2x1x8xf32>, vector<2x1x8xf32>, vector<2x1x8xf32> -> vector<8x1x8xf32>
    %83 = vector.broadcast %82 : vector<8x1x8xf32> to vector<8x8x8xf32>
    %84 = arith.addf %80, %83 : vector<8x8x8xf32>
    %cst_18 = arith.constant dense<0xFF800000> : vector<8x8xf32>
    %85 = vector.multi_reduction <maximumf>, %84, %cst_18 [2] : vector<8x8x8xf32> to vector<8x8xf32>
    %86 = vector.shape_cast %85 : vector<8x8xf32> to vector<8x8x1xf32>
    %87 = vector.broadcast %86 : vector<8x8x1xf32> to vector<8x8x8xf32>
    %88 = arith.subf %84, %87 : vector<8x8x8xf32>
    %89 = math.exp %88 : vector<8x8x8xf32>
    %cst_19 = arith.constant dense<0.000000e+00> : vector<8x8xf32>
    %90 = vector.multi_reduction <add>, %89, %cst_19 [2] : vector<8x8x8xf32> to vector<8x8xf32>
    %91 = vector.shape_cast %90 : vector<8x8xf32> to vector<8x8x1xf32>
    %92 = tpu.reciprocal %91 {approx = true} : vector<8x8x1xf32> -> vector<8x8x1xf32>
    %93 = vector.broadcast %92 : vector<8x8x1xf32> to vector<8x8x8xf32>
    %94 = arith.mulf %89, %93 : vector<8x8x8xf32>
    %95 = arith.truncf %94 : vector<8x8x8xf32> to vector<8x8x8xbf16>
    "tpu.trace_start"() <{level = 10 : i32, message = "bqk,bkd->bqd"}> : () -> ()
    %cst_20 = arith.constant dense<0.000000e+00> : vector<8x8x32xf32>
    %96 = tpu.matmul %95, %79, %cst_20 {dimension_numbers = #tpu.dot_dimension_numbers<[2], [1], [1], [2], [0, 0, 0, 1, 1, 2], [0], [0]>} : vector<8x8x8xbf16>, vector<8x8x32xbf16>, vector<8x8x32xf32> -> vector<8x8x32xf32>
    "tpu.trace_stop"() : () -> ()
    %97 = vector.extract_strided_slice %96 {offsets = [0, 0, 0], sizes = [2, 8, 32], strides = [1, 1, 1]} : vector<8x8x32xf32> to vector<2x8x32xf32>
    %98 = vector.shape_cast %97 : vector<2x8x32xf32> to vector<16x32xf32>
    %99 = vector.extract_strided_slice %96 {offsets = [2, 0, 0], sizes = [2, 8, 32], strides = [1, 1, 1]} : vector<8x8x32xf32> to vector<2x8x32xf32>
    %100 = vector.shape_cast %99 : vector<2x8x32xf32> to vector<16x32xf32>
    %101 = vector.extract_strided_slice %96 {offsets = [4, 0, 0], sizes = [2, 8, 32], strides = [1, 1, 1]} : vector<8x8x32xf32> to vector<2x8x32xf32>
    %102 = vector.shape_cast %101 : vector<2x8x32xf32> to vector<16x32xf32>
    %103 = vector.extract_strided_slice %96 {offsets = [6, 0, 0], sizes = [2, 8, 32], strides = [1, 1, 1]} : vector<8x8x32xf32> to vector<2x8x32xf32>
    %104 = vector.shape_cast %103 : vector<2x8x32xf32> to vector<16x32xf32>
    %105 = tpu.concatenate %98, %100, %102, %104 in 1 : vector<16x32xf32>, vector<16x32xf32>, vector<16x32xf32>, vector<16x32xf32> -> vector<16x128xf32>
    %106 = arith.truncf %105 : vector<16x128xf32> to vector<16x128xbf16>
    %c0_21 = arith.constant 0 : index
    %c0_22 = arith.constant 0 : index
    %107 = vector.load %arg7[%c0_21, %c0_22] : memref<128x128xbf16, #tpu.memory_space<vmem>>, vector<128x128xbf16>
    %cst_23 = arith.constant dense<0.000000e+00> : vector<16x128xf32>
    %108 = tpu.matmul %106, %107, %cst_23 {dimension_numbers = #tpu.dot_dimension_numbers<[1], [0], [0], [1], [0, 0, 1, 1], [], []>} : vector<16x128xbf16>, vector<128x128xbf16>, vector<16x128xf32> -> vector<16x128xf32>
    %c0_24 = arith.constant 0 : index
    %c0_25 = arith.constant 0 : index
    %109 = vector.load %arg8[%c0_24, %c0_25] : memref<1x128xf32, #tpu.memory_space<vmem>>, vector<1x128xf32>
    %110 = vector.broadcast %109 : vector<1x128xf32> to vector<16x128xf32>
    %111 = arith.addf %108, %110 : vector<16x128xf32>
    %112 = arith.addf %1, %111 : vector<16x128xf32>
    %c0_26 = arith.constant 0 : index
    %c0_27 = arith.constant 0 : index
    %113 = vector.load %arg9[%c0_26, %c0_27] : memref<1x128xf32, #tpu.memory_space<vmem>>, vector<1x128xf32>
    %c0_28 = arith.constant 0 : index
    %c0_29 = arith.constant 0 : index
    %114 = vector.load %arg10[%c0_28, %c0_29] : memref<1x128xf32, #tpu.memory_space<vmem>>, vector<1x128xf32>
    %cst_30 = arith.constant dense<0.000000e+00> : vector<16xf32>
    %115 = vector.multi_reduction <add>, %112, %cst_30 [1] : vector<16x128xf32> to vector<16xf32>
    %116 = vector.shape_cast %115 : vector<16xf32> to vector<16x1xf32>
    %cst_31 = arith.constant 1.280000e+02 : f32
    %117 = vector.broadcast %cst_31 : f32 to vector<16x1xf32>
    %118 = arith.divf %116, %117 : vector<16x1xf32>
    %119 = vector.broadcast %118 : vector<16x1xf32> to vector<16x128xf32>
    %120 = arith.subf %112, %119 : vector<16x128xf32>
    %121 = arith.mulf %120, %120 : vector<16x128xf32>
    %cst_32 = arith.constant dense<0.000000e+00> : vector<16xf32>
    %122 = vector.multi_reduction <add>, %121, %cst_32 [1] : vector<16x128xf32> to vector<16xf32>
    %123 = vector.shape_cast %122 : vector<16xf32> to vector<16x1xf32>
    %cst_33 = arith.constant 1.280000e+02 : f32
    %124 = vector.broadcast %cst_33 : f32 to vector<16x1xf32>
    %125 = arith.divf %123, %124 : vector<16x1xf32>
    %126 = vector.broadcast %118 : vector<16x1xf32> to vector<16x128xf32>
    %127 = arith.subf %112, %126 : vector<16x128xf32>
    %cst_34 = arith.constant 9.99999997E-7 : f32
    %128 = vector.broadcast %cst_34 : f32 to vector<16x1xf32>
    %129 = arith.addf %125, %128 : vector<16x1xf32>
    %130 = math.rsqrt %129 : vector<16x1xf32>
    %131 = vector.broadcast %130 : vector<16x1xf32> to vector<16x128xf32>
    %132 = arith.mulf %127, %131 : vector<16x128xf32>
    %133 = vector.broadcast %113 : vector<1x128xf32> to vector<16x128xf32>
    %134 = arith.mulf %132, %133 : vector<16x128xf32>
    %135 = vector.broadcast %114 : vector<1x128xf32> to vector<16x128xf32>
    %136 = arith.addf %134, %135 : vector<16x128xf32>
    %137 = arith.truncf %136 : vector<16x128xf32> to vector<16x128xbf16>
    %c0_35 = arith.constant 0 : index
    %c0_36 = arith.constant 0 : index
    %138 = vector.load %arg11[%c0_35, %c0_36] : memref<128x256xbf16, #tpu.memory_space<vmem>>, vector<128x256xbf16>
    %cst_37 = arith.constant dense<0.000000e+00> : vector<16x256xf32>
    %139 = tpu.matmul %137, %138, %cst_37 {dimension_numbers = #tpu.dot_dimension_numbers<[1], [0], [0], [1], [0, 0, 1, 1], [], []>} : vector<16x128xbf16>, vector<128x256xbf16>, vector<16x256xf32> -> vector<16x256xf32>
    %c0_38 = arith.constant 0 : index
    %c0_39 = arith.constant 0 : index
    %140 = vector.load %arg12[%c0_38, %c0_39] : memref<1x256xf32, #tpu.memory_space<vmem>>, vector<1x256xf32>
    %141 = vector.broadcast %140 : vector<1x256xf32> to vector<16x256xf32>
    %142 = arith.addf %139, %141 : vector<16x256xf32>
    %cst_40 = arith.constant 0.000000e+00 : f32
    %143 = vector.broadcast %cst_40 : f32 to vector<16x256xf32>
    %144 = arith.maximumf %142, %143 : vector<16x256xf32>
    %145 = arith.truncf %144 : vector<16x256xf32> to vector<16x256xbf16>
    %c0_41 = arith.constant 0 : index
    %c0_42 = arith.constant 0 : index
    %146 = vector.load %arg13[%c0_41, %c0_42] : memref<256x128xbf16, #tpu.memory_space<vmem>>, vector<256x128xbf16>
    %cst_43 = arith.constant dense<0.000000e+00> : vector<16x128xf32>
    %147 = tpu.matmul %145, %146, %cst_43 {dimension_numbers = #tpu.dot_dimension_numbers<[1], [0], [0], [1], [0, 0, 1, 1], [], []>} : vector<16x256xbf16>, vector<256x128xbf16>, vector<16x128xf32> -> vector<16x128xf32>
    %c0_44 = arith.constant 0 : index
    %c0_45 = arith.constant 0 : index
    %148 = vector.load %arg14[%c0_44, %c0_45] : memref<1x128xf32, #tpu.memory_space<vmem>>, vector<1x128xf32>
    %149 = vector.broadcast %148 : vector<1x128xf32> to vector<16x128xf32>
    %150 = arith.addf %147, %149 : vector<16x128xf32>
    %151 = arith.addf %112, %150 : vector<16x128xf32>
    %152 = arith.truncf %151 : vector<16x128xf32> to vector<16x128xbf16>
    %c0_46 = arith.constant 0 : index
    %c0_47 = arith.constant 0 : index
    %153 = vector.load %arg17[%c0_46, %c0_47] : memref<16x128xbf16, #tpu.memory_space<vmem>>, vector<16x128xbf16>
    tpu.vector_store %arg17[%c0_46, %c0_47], %152 {strides = array<i32>} : memref<16x128xbf16, #tpu.memory_space<vmem>>, vector<16x128xbf16>,
    return
  }
  func.func @transform_0(%arg0: i32) -> (i32, i32) {
    %c0_i32 = arith.constant 0 : i32
    %c0_i32_0 = arith.constant 0 : i32
    return %arg0, %c0_i32 : i32, i32
  }
  func.func @transform_1(%arg0: i32) -> (i32, i32, i32) {
    %c0_i32 = arith.constant 0 : i32
    %c0_i32_0 = arith.constant 0 : i32
    %c0_i32_1 = arith.constant 0 : i32
    return %arg0, %c0_i32, %c0_i32_0 : i32, i32, i32
  }
  func.func @transform_2(%arg0: i32) -> (i32, i32) {
    %c0_i32 = arith.constant 0 : i32
    %c0_i32_0 = arith.constant 0 : i32
    %c0_i32_1 = arith.constant 0 : i32
    return %c0_i32, %c0_i32_0 : i32, i32
  }
  func.func @transform_3(%arg0: i32) -> (i32, i32) {
    %c0_i32 = arith.constant 0 : i32
    %c0_i32_0 = arith.constant 0 : i32
    %c0_i32_1 = arith.constant 0 : i32
    return %c0_i32, %c0_i32_0 : i32, i32
  }
  func.func @transform_4(%arg0: i32) -> (i32, i32) {
    %c0_i32 = arith.constant 0 : i32
    %c0_i32_0 = arith.constant 0 : i32
    %c0_i32_1 = arith.constant 0 : i32
    return %c0_i32, %c0_i32_0 : i32, i32
  }
  func.func @transform_5(%arg0: i32) -> (i32, i32) {
    %c0_i32 = arith.constant 0 : i32
    %c0_i32_0 = arith.constant 0 : i32
    %c0_i32_1 = arith.constant 0 : i32
    return %c0_i32, %c0_i32_0 : i32, i32
  }
  func.func @transform_6(%arg0: i32) -> (i32, i32) {
    %c0_i32 = arith.constant 0 : i32
    %c0_i32_0 = arith.constant 0 : i32
    %c0_i32_1 = arith.constant 0 : i32
    return %c0_i32, %c0_i32_0 : i32, i32
  }
  func.func @transform_7(%arg0: i32) -> (i32, i32) {
    %c0_i32 = arith.constant 0 : i32
    %c0_i32_0 = arith.constant 0 : i32
    %c0_i32_1 = arith.constant 0 : i32
    return %c0_i32, %c0_i32_0 : i32, i32
  }
  func.func @transform_8(%arg0: i32) -> (i32, i32) {
    %c0_i32 = arith.constant 0 : i32
    %c0_i32_0 = arith.constant 0 : i32
    %c0_i32_1 = arith.constant 0 : i32
    return %c0_i32, %c0_i32_0 : i32, i32
  }
  func.func @transform_9(%arg0: i32) -> (i32, i32) {
    %c0_i32 = arith.constant 0 : i32
    %c0_i32_0 = arith.constant 0 : i32
    %c0_i32_1 = arith.constant 0 : i32
    return %c0_i32, %c0_i32_0 : i32, i32
  }
  func.func @transform_10(%arg0: i32) -> (i32, i32) {
    %c0_i32 = arith.constant 0 : i32
    %c0_i32_0 = arith.constant 0 : i32
    %c0_i32_1 = arith.constant 0 : i32
    return %c0_i32, %c0_i32_0 : i32, i32
  }
  func.func @transform_11(%arg0: i32) -> (i32, i32) {
    %c0_i32 = arith.constant 0 : i32
    %c0_i32_0 = arith.constant 0 : i32
    %c0_i32_1 = arith.constant 0 : i32
    return %c0_i32, %c0_i32_0 : i32, i32
  }
  func.func @transform_12(%arg0: i32) -> (i32, i32) {
    %c0_i32 = arith.constant 0 : i32
    %c0_i32_0 = arith.constant 0 : i32
    %c0_i32_1 = arith.constant 0 : i32
    return %c0_i32, %c0_i32_0 : i32, i32
  }
  func.func @transform_13(%arg0: i32) -> (i32, i32) {
    %c0_i32 = arith.constant 0 : i32
    %c0_i32_0 = arith.constant 0 : i32
    %c0_i32_1 = arith.constant 0 : i32
    return %c0_i32, %c0_i32_0 : i32, i32
  }
  func.func @transform_14(%arg0: i32) -> (i32, i32) {
    %c0_i32 = arith.constant 0 : i32
    %c0_i32_0 = arith.constant 0 : i32
    %c0_i32_1 = arith.constant 0 : i32
    return %c0_i32, %c0_i32_0 : i32, i32
  }
  func.func @transform_15(%arg0: i32) -> (i32, i32) {
    %c0_i32 = arith.constant 0 : i32
    %c0_i32_0 = arith.constant 0 : i32
    %c0_i32_1 = arith.constant 0 : i32
    return %c0_i32, %c0_i32_0 : i32, i32
  }
  func.func @transform_16(%arg0: i32) -> (i32, i32) {
    %c0_i32 = arith.constant 0 : i32
    %c0_i32_0 = arith.constant 0 : i32
    return %arg0, %c0_i32 : i32, i32
  }
}

module attributes {stable_mosaic.version = 11 : i64} {
  func.func @_encoder_layer_kernel(%arg0: i32, %arg1: memref<16x128xbf16, #tpu.memory_space<vmem>>, %arg2: memref<2x1x8xf32, #tpu.memory_space<vmem>>, %arg3: memref<1x128xf32, #tpu.memory_space<vmem>>, %arg4: memref<1x128xf32, #tpu.memory_space<vmem>>, %arg5: memref<128x384xbf16, #tpu.memory_space<vmem>>, %arg6: memref<1x384xf32, #tpu.memory_space<vmem>>, %arg7: memref<128x128xbf16, #tpu.memory_space<vmem>>, %arg8: memref<1x128xf32, #tpu.memory_space<vmem>>, %arg9: memref<1x128xf32, #tpu.memory_space<vmem>>, %arg10: memref<1x128xf32, #tpu.memory_space<vmem>>, %arg11: memref<128x256xbf16, #tpu.memory_space<vmem>>, %arg12: memref<1x256xf32, #tpu.memory_space<vmem>>, %arg13: memref<256x128xbf16, #tpu.memory_space<vmem>>, %arg14: memref<1x128xf32, #tpu.memory_space<vmem>>, %arg15: memref<1x128xf32, #tpu.memory_space<vmem>>, %arg16: memref<1x128xf32, #tpu.memory_space<vmem>>, %arg17: memref<16x128xf32, #tpu.memory_space<vmem>>) attributes {dimension_semantics = [#tpu.dimension_semantics<parallel>], iteration_bounds = array<i64: 2>, scalar_prefetch = 0 : i64, scratch_operands = 0 : i64, tpu.core_type = #tpu.core_type<tc>, window_params = [{transform_indices = @transform_0, window_bounds = array<i64: 16, 128>}, {transform_indices = @transform_1, window_bounds = array<i64: 2, 1, 8>}, {pipeline_mode = #tpu.pipeline_mode<synchronous>, transform_indices = @transform_2, window_bounds = array<i64: 1, 128>}, {pipeline_mode = #tpu.pipeline_mode<synchronous>, transform_indices = @transform_3, window_bounds = array<i64: 1, 128>}, {pipeline_mode = #tpu.pipeline_mode<synchronous>, transform_indices = @transform_4, window_bounds = array<i64: 128, 384>}, {pipeline_mode = #tpu.pipeline_mode<synchronous>, transform_indices = @transform_5, window_bounds = array<i64: 1, 384>}, {pipeline_mode = #tpu.pipeline_mode<synchronous>, transform_indices = @transform_6, window_bounds = array<i64: 128, 128>}, {pipeline_mode = #tpu.pipeline_mode<synchronous>, transform_indices = @transform_7, window_bounds = array<i64: 1, 128>}, {pipeline_mode = #tpu.pipeline_mode<synchronous>, transform_indices = @transform_8, window_bounds = array<i64: 1, 128>}, {pipeline_mode = #tpu.pipeline_mode<synchronous>, transform_indices = @transform_9, window_bounds = array<i64: 1, 128>}, {pipeline_mode = #tpu.pipeline_mode<synchronous>, transform_indices = @transform_10, window_bounds = array<i64: 128, 256>}, {pipeline_mode = #tpu.pipeline_mode<synchronous>, transform_indices = @transform_11, window_bounds = array<i64: 1, 256>}, {pipeline_mode = #tpu.pipeline_mode<synchronous>, transform_indices = @transform_12, window_bounds = array<i64: 256, 128>}, {pipeline_mode = #tpu.pipeline_mode<synchronous>, transform_indices = @transform_13, window_bounds = array<i64: 1, 128>}, {pipeline_mode = #tpu.pipeline_mode<synchronous>, transform_indices = @transform_14, window_bounds = array<i64: 1, 128>}, {pipeline_mode = #tpu.pipeline_mode<synchronous>, transform_indices = @transform_15, window_bounds = array<i64: 1, 128>}, {transform_indices = @transform_16, window_bounds = array<i64: 16, 128>}]} {
    %c0 = arith.constant 0 : index
    %c0_0 = arith.constant 0 : index
    %0 = vector.load %arg1[%c0, %c0_0] : memref<16x128xbf16, #tpu.memory_space<vmem>>, vector<16x128xbf16>
    %1 = arith.extf %0 : vector<16x128xbf16> to vector<16x128xf32>
    %c0_1 = arith.constant 0 : index
    %c0_2 = arith.constant 0 : index
    %2 = vector.load %arg3[%c0_1, %c0_2] : memref<1x128xf32, #tpu.memory_space<vmem>>, vector<1x128xf32>
    %c0_3 = arith.constant 0 : index
    %c0_4 = arith.constant 0 : index
    %3 = vector.load %arg4[%c0_3, %c0_4] : memref<1x128xf32, #tpu.memory_space<vmem>>, vector<1x128xf32>
    %cst = arith.constant dense<0.000000e+00> : vector<16xf32>
    %4 = vector.multi_reduction <add>, %1, %cst [1] : vector<16x128xf32> to vector<16xf32>
    %5 = vector.shape_cast %4 : vector<16xf32> to vector<16x1xf32>
    %cst_5 = arith.constant 1.280000e+02 : f32
    %6 = vector.broadcast %cst_5 : f32 to vector<16x1xf32>
    %7 = arith.divf %5, %6 : vector<16x1xf32>
    %8 = vector.broadcast %7 : vector<16x1xf32> to vector<16x128xf32>
    %9 = arith.subf %1, %8 : vector<16x128xf32>
    %10 = arith.mulf %9, %9 : vector<16x128xf32>
    %cst_6 = arith.constant dense<0.000000e+00> : vector<16xf32>
    %11 = vector.multi_reduction <add>, %10, %cst_6 [1] : vector<16x128xf32> to vector<16xf32>
    %12 = vector.shape_cast %11 : vector<16xf32> to vector<16x1xf32>
    %cst_7 = arith.constant 1.280000e+02 : f32
    %13 = vector.broadcast %cst_7 : f32 to vector<16x1xf32>
    %14 = arith.divf %12, %13 : vector<16x1xf32>
    %15 = vector.broadcast %7 : vector<16x1xf32> to vector<16x128xf32>
    %16 = arith.subf %1, %15 : vector<16x128xf32>
    %cst_8 = arith.constant 9.99999997E-7 : f32
    %17 = vector.broadcast %cst_8 : f32 to vector<16x1xf32>
    %18 = arith.addf %14, %17 : vector<16x1xf32>
    %19 = math.rsqrt %18 : vector<16x1xf32>
    %20 = vector.broadcast %19 : vector<16x1xf32> to vector<16x128xf32>
    %21 = arith.mulf %16, %20 : vector<16x128xf32>
    %22 = vector.broadcast %2 : vector<1x128xf32> to vector<16x128xf32>
    %23 = arith.mulf %21, %22 : vector<16x128xf32>
    %24 = vector.broadcast %3 : vector<1x128xf32> to vector<16x128xf32>
    %25 = arith.addf %23, %24 : vector<16x128xf32>
    %26 = arith.truncf %25 : vector<16x128xf32> to vector<16x128xbf16>
    %c0_9 = arith.constant 0 : index
    %c0_10 = arith.constant 0 : index
    %27 = vector.load %arg5[%c0_9, %c0_10] : memref<128x384xbf16, #tpu.memory_space<vmem>>, vector<128x384xbf16>
    %cst_11 = arith.constant dense<0.000000e+00> : vector<16x384xf32>
    %28 = tpu.matmul %26, %27, %cst_11 {dimension_numbers = #tpu.dot_dimension_numbers<[1], [0], [0], [1], [0, 0, 1, 1], [], []>} : vector<16x128xbf16>, vector<128x384xbf16>, vector<16x384xf32> -> vector<16x384xf32>
    %c0_12 = arith.constant 0 : index
    %c0_13 = arith.constant 0 : index
    %29 = vector.load %arg6[%c0_12, %c0_13] : memref<1x384xf32, #tpu.memory_space<vmem>>, vector<1x384xf32>
    %30 = vector.broadcast %29 : vector<1x384xf32> to vector<16x384xf32>
    %31 = arith.addf %28, %30 : vector<16x384xf32>
    %32 = vector.extract_strided_slice %31 {offsets = [0, 0], sizes = [16, 128], strides = [1, 1]} : vector<16x384xf32> to vector<16x128xf32>
    %33 = vector.extract_strided_slice %32 {offsets = [0, 0], sizes = [16, 32], strides = [1, 1]} : vector<16x128xf32> to vector<16x32xf32>
    %34 = vector.shape_cast %33 : vector<16x32xf32> to vector<2x8x32xf32>
    %35 = vector.extract_strided_slice %32 {offsets = [0, 32], sizes = [16, 32], strides = [1, 1]} : vector<16x128xf32> to vector<16x32xf32>
    %36 = vector.shape_cast %35 : vector<16x32xf32> to vector<2x8x32xf32>
    %37 = vector.extract_strided_slice %32 {offsets = [0, 64], sizes = [16, 32], strides = [1, 1]} : vector<16x128xf32> to vector<16x32xf32>
    %38 = vector.shape_cast %37 : vector<16x32xf32> to vector<2x8x32xf32>
    %39 = vector.extract_strided_slice %32 {offsets = [0, 96], sizes = [16, 32], strides = [1, 1]} : vector<16x128xf32> to vector<16x32xf32>
    %40 = vector.shape_cast %39 : vector<16x32xf32> to vector<2x8x32xf32>
    %41 = vector.shape_cast %34 : vector<2x8x32xf32> to vector<1x2x8x32xf32>
    %42 = vector.shape_cast %36 : vector<2x8x32xf32> to vector<1x2x8x32xf32>
    %43 = vector.shape_cast %38 : vector<2x8x32xf32> to vector<1x2x8x32xf32>
    %44 = vector.shape_cast %40 : vector<2x8x32xf32> to vector<1x2x8x32xf32>
    %45 = tpu.concatenate %41, %42, %43, %44 in 0 : vector<1x2x8x32xf32>, vector<1x2x8x32xf32>, vector<1x2x8x32xf32>, vector<1x2x8x32xf32> -> vector<4x2x8x32xf32>
    %46 = vector.shape_cast %45 : vector<4x2x8x32xf32> to vector<8x8x32xf32>
    %47 = arith.truncf %46 : vector<8x8x32xf32> to vector<8x8x32xbf16>
    %48 = vector.extract_strided_slice %31 {offsets = [0, 128], sizes = [16, 128], strides = [1, 1]} : vector<16x384xf32> to vector<16x128xf32>
    %49 = vector.extract_strided_slice %48 {offsets = [0, 0], sizes = [16, 32], strides = [1, 1]} : vector<16x128xf32> to vector<16x32xf32>
    %50 = vector.shape_cast %49 : vector<16x32xf32> to vector<2x8x32xf32>
    %51 = vector.extract_strided_slice %48 {offsets = [0, 32], sizes = [16, 32], strides = [1, 1]} : vector<16x128xf32> to vector<16x32xf32>
    %52 = vector.shape_cast %51 : vector<16x32xf32> to vector<2x8x32xf32>
    %53 = vector.extract_strided_slice %48 {offsets = [0, 64], sizes = [16, 32], strides = [1, 1]} : vector<16x128xf32> to vector<16x32xf32>
    %54 = vector.shape_cast %53 : vector<16x32xf32> to vector<2x8x32xf32>
    %55 = vector.extract_strided_slice %48 {offsets = [0, 96], sizes = [16, 32], strides = [1, 1]} : vector<16x128xf32> to vector<16x32xf32>
    %56 = vector.shape_cast %55 : vector<16x32xf32> to vector<2x8x32xf32>
    %57 = vector.shape_cast %50 : vector<2x8x32xf32> to vector<1x2x8x32xf32>
    %58 = vector.shape_cast %52 : vector<2x8x32xf32> to vector<1x2x8x32xf32>
    %59 = vector.shape_cast %54 : vector<2x8x32xf32> to vector<1x2x8x32xf32>
    %60 = vector.shape_cast %56 : vector<2x8x32xf32> to vector<1x2x8x32xf32>
    %61 = tpu.concatenate %57, %58, %59, %60 in 0 : vector<1x2x8x32xf32>, vector<1x2x8x32xf32>, vector<1x2x8x32xf32>, vector<1x2x8x32xf32> -> vector<4x2x8x32xf32>
    %62 = vector.shape_cast %61 : vector<4x2x8x32xf32> to vector<8x8x32xf32>
    %63 = arith.truncf %62 : vector<8x8x32xf32> to vector<8x8x32xbf16>
    %64 = vector.extract_strided_slice %31 {offsets = [0, 256], sizes = [16, 128], strides = [1, 1]} : vector<16x384xf32> to vector<16x128xf32>
    %65 = vector.extract_strided_slice %64 {offsets = [0, 0], sizes = [16, 32], strides = [1, 1]} : vector<16x128xf32> to vector<16x32xf32>
    %66 = vector.shape_cast %65 : vector<16x32xf32> to vector<2x8x32xf32>
    %67 = vector.extract_strided_slice %64 {offsets = [0, 32], sizes = [16, 32], strides = [1, 1]} : vector<16x128xf32> to vector<16x32xf32>
    %68 = vector.shape_cast %67 : vector<16x32xf32> to vector<2x8x32xf32>
    %69 = vector.extract_strided_slice %64 {offsets = [0, 64], sizes = [16, 32], strides = [1, 1]} : vector<16x128xf32> to vector<16x32xf32>
    %70 = vector.shape_cast %69 : vector<16x32xf32> to vector<2x8x32xf32>
    %71 = vector.extract_strided_slice %64 {offsets = [0, 96], sizes = [16, 32], strides = [1, 1]} : vector<16x128xf32> to vector<16x32xf32>
    %72 = vector.shape_cast %71 : vector<16x32xf32> to vector<2x8x32xf32>
    %73 = vector.shape_cast %66 : vector<2x8x32xf32> to vector<1x2x8x32xf32>
    %74 = vector.shape_cast %68 : vector<2x8x32xf32> to vector<1x2x8x32xf32>
    %75 = vector.shape_cast %70 : vector<2x8x32xf32> to vector<1x2x8x32xf32>
    %76 = vector.shape_cast %72 : vector<2x8x32xf32> to vector<1x2x8x32xf32>
    %77 = tpu.concatenate %73, %74, %75, %76 in 0 : vector<1x2x8x32xf32>, vector<1x2x8x32xf32>, vector<1x2x8x32xf32>, vector<1x2x8x32xf32> -> vector<4x2x8x32xf32>
    %78 = vector.shape_cast %77 : vector<4x2x8x32xf32> to vector<8x8x32xf32>
    %79 = arith.truncf %78 : vector<8x8x32xf32> to vector<8x8x32xbf16>
    "tpu.trace_start"() <{level = 10 : i32, message = "bqd,bkd->bqk"}> : () -> ()
    %cst_14 = arith.constant dense<0.000000e+00> : vector<8x8x8xf32>
    %80 = tpu.matmul %47, %63, %cst_14 {dimension_numbers = #tpu.dot_dimension_numbers<[2], [2], [1], [1], [0, 0, 0, 1, 1, 1], [0], [0]>} : vector<8x8x32xbf16>, vector<8x8x32xbf16>, vector<8x8x8xf32> -> vector<8x8x8xf32>
    "tpu.trace_stop"() : () -> ()
    %c0_15 = arith.constant 0 : index
    %c0_16 = arith.constant 0 : index
    %c0_17 = arith.constant 0 : index
    %81 = vector.load %arg2[%c0_15, %c0_16, %c0_17] : memref<2x1x8xf32, #tpu.memory_space<vmem>>, vector<2x1x8xf32>
    %82 = tpu.concatenate %81, %81, %81, %81 in 0 : vector<2x1x8xf32>, vector<2x1x8xf32>, vector<2x1x8xf32>, vector<2x1x8xf32> -> vector<8x1x8xf32>
    %83 = vector.broadcast %82 : vector<8x1x8xf32> to vector<8x8x8xf32>
    %84 = arith.addf %80, %83 : vector<8x8x8xf32>
    %cst_18 = arith.constant dense<0xFF800000> : vector<8x8xf32>
    %85 = vector.multi_reduction <maximumf>, %84, %cst_18 [2] : vector<8x8x8xf32> to vector<8x8xf32>
    %86 = vector.shape_cast %85 : vector<8x8xf32> to vector<8x8x1xf32>
    %87 = vector.broadcast %86 : vector<8x8x1xf32> to vector<8x8x8xf32>
    %88 = arith.subf %84, %87 : vector<8x8x8xf32>
    %89 = math.exp %88 : vector<8x8x8xf32>
    %cst_19 = arith.constant dense<0.000000e+00> : vector<8x8xf32>
    %90 = vector.multi_reduction <add>, %89, %cst_19 [2] : vector<8x8x8xf32> to vector<8x8xf32>
    %91 = vector.shape_cast %90 : vector<8x8xf32> to vector<8x8x1xf32>
    %92 = tpu.reciprocal %91 {approx = true} : vector<8x8x1xf32> -> vector<8x8x1xf32>
    %93 = vector.broadcast %92 : vector<8x8x1xf32> to vector<8x8x8xf32>
    %94 = arith.mulf %89, %93 : vector<8x8x8xf32>
    %95 = arith.truncf %94 : vector<8x8x8xf32> to vector<8x8x8xbf16>
    "tpu.trace_start"() <{level = 10 : i32, message = "bqk,bkd->bqd"}> : () -> ()
    %cst_20 = arith.constant dense<0.000000e+00> : vector<8x8x32xf32>
    %96 = tpu.matmul %95, %79, %cst_20 {dimension_numbers = #tpu.dot_dimension_numbers<[2], [1], [1], [2], [0, 0, 0, 1, 1, 2], [0], [0]>} : vector<8x8x8xbf16>, vector<8x8x32xbf16>, vector<8x8x32xf32> -> vector<8x8x32xf32>
    "tpu.trace_stop"() : () -> ()
    %97 = vector.extract_strided_slice %96 {offsets = [0, 0, 0], sizes = [2, 8, 32], strides = [1, 1, 1]} : vector<8x8x32xf32> to vector<2x8x32xf32>
    %98 = vector.shape_cast %97 : vector<2x8x32xf32> to vector<16x32xf32>
    %99 = vector.extract_strided_slice %96 {offsets = [2, 0, 0], sizes = [2, 8, 32], strides = [1, 1, 1]} : vector<8x8x32xf32> to vector<2x8x32xf32>
    %100 = vector.shape_cast %99 : vector<2x8x32xf32> to vector<16x32xf32>
    %101 = vector.extract_strided_slice %96 {offsets = [4, 0, 0], sizes = [2, 8, 32], strides = [1, 1, 1]} : vector<8x8x32xf32> to vector<2x8x32xf32>
    %102 = vector.shape_cast %101 : vector<2x8x32xf32> to vector<16x32xf32>
    %103 = vector.extract_strided_slice %96 {offsets = [6, 0, 0], sizes = [2, 8, 32], strides = [1, 1, 1]} : vector<8x8x32xf32> to vector<2x8x32xf32>
    %104 = vector.shape_cast %103 : vector<2x8x32xf32> to vector<16x32xf32>
    %105 = tpu.concatenate %98, %100, %102, %104 in 1 : vector<16x32xf32>, vector<16x32xf32>, vector<16x32xf32>, vector<16x32xf32> -> vector<16x128xf32>
    %106 = arith.truncf %105 : vector<16x128xf32> to vector<16x128xbf16>
    %c0_21 = arith.constant 0 : index
    %c0_22 = arith.constant 0 : index
    %107 = vector.load %arg7[%c0_21, %c0_22] : memref<128x128xbf16, #tpu.memory_space<vmem>>, vector<128x128xbf16>
    %cst_23 = arith.constant dense<0.000000e+00> : vector<16x128xf32>
    %108 = tpu.matmul %106, %107, %cst_23 {dimension_numbers = #tpu.dot_dimension_numbers<[1], [0], [0], [1], [0, 0, 1, 1], [], []>} : vector<16x128xbf16>, vector<128x128xbf16>, vector<16x128xf32> -> vector<16x128xf32>
    %c0_24 = arith.constant 0 : index
    %c0_25 = arith.constant 0 : index
    %109 = vector.load %arg8[%c0_24, %c0_25] : memref<1x128xf32, #tpu.memory_space<vmem>>, vector<1x128xf32>
    %110 = vector.broadcast %109 : vector<1x128xf32> to vector<16x128xf32>
    %111 = arith.addf %108, %110 : vector<16x128xf32>
    %112 = arith.addf %1, %111 : vector<16x128xf32>
    %c0_26 = arith.constant 0 : index
    %c0_27 = arith.constant 0 : index
    %113 = vector.load %arg9[%c0_26, %c0_27] : memref<1x128xf32, #tpu.memory_space<vmem>>, vector<1x128xf32>
    %c0_28 = arith.constant 0 : index
    %c0_29 = arith.constant 0 : index
    %114 = vector.load %arg10[%c0_28, %c0_29] : memref<1x128xf32, #tpu.memory_space<vmem>>, vector<1x128xf32>
    %cst_30 = arith.constant dense<0.000000e+00> : vector<16xf32>
    %115 = vector.multi_reduction <add>, %112, %cst_30 [1] : vector<16x128xf32> to vector<16xf32>
    %116 = vector.shape_cast %115 : vector<16xf32> to vector<16x1xf32>
    %cst_31 = arith.constant 1.280000e+02 : f32
    %117 = vector.broadcast %cst_31 : f32 to vector<16x1xf32>
    %118 = arith.divf %116, %117 : vector<16x1xf32>
    %119 = vector.broadcast %118 : vector<16x1xf32> to vector<16x128xf32>
    %120 = arith.subf %112, %119 : vector<16x128xf32>
    %121 = arith.mulf %120, %120 : vector<16x128xf32>
    %cst_32 = arith.constant dense<0.000000e+00> : vector<16xf32>
    %122 = vector.multi_reduction <add>, %121, %cst_32 [1] : vector<16x128xf32> to vector<16xf32>
    %123 = vector.shape_cast %122 : vector<16xf32> to vector<16x1xf32>
    %cst_33 = arith.constant 1.280000e+02 : f32
    %124 = vector.broadcast %cst_33 : f32 to vector<16x1xf32>
    %125 = arith.divf %123, %124 : vector<16x1xf32>
    %126 = vector.broadcast %118 : vector<16x1xf32> to vector<16x128xf32>
    %127 = arith.subf %112, %126 : vector<16x128xf32>
    %cst_34 = arith.constant 9.99999997E-7 : f32
    %128 = vector.broadcast %cst_34 : f32 to vector<16x1xf32>
    %129 = arith.addf %125, %128 : vector<16x1xf32>
    %130 = math.rsqrt %129 : vector<16x1xf32>
    %131 = vector.broadcast %130 : vector<16x1xf32> to vector<16x128xf32>
    %132 = arith.mulf %127, %131 : vector<16x128xf32>
    %133 = vector.broadcast %113 : vector<1x128xf32> to vector<16x128xf32>
    %134 = arith.mulf %132, %133 : vector<16x128xf32>
    %135 = vector.broadcast %114 : vector<1x128xf32> to vector<16x128xf32>
    %136 = arith.addf %134, %135 : vector<16x128xf32>
    %137 = arith.truncf %136 : vector<16x128xf32> to vector<16x128xbf16>
    %c0_35 = arith.constant 0 : index
    %c0_36 = arith.constant 0 : index
    %138 = vector.load %arg11[%c0_35, %c0_36] : memref<128x256xbf16, #tpu.memory_space<vmem>>, vector<128x256xbf16>
    %cst_37 = arith.constant dense<0.000000e+00> : vector<16x256xf32>
    %139 = tpu.matmul %137, %138, %cst_37 {dimension_numbers = #tpu.dot_dimension_numbers<[1], [0], [0], [1], [0, 0, 1, 1], [], []>} : vector<16x128xbf16>, vector<128x256xbf16>, vector<16x256xf32> -> vector<16x256xf32>
    %c0_38 = arith.constant 0 : index
    %c0_39 = arith.constant 0 : index
    %140 = vector.load %arg12[%c0_38, %c0_39] : memref<1x256xf32, #tpu.memory_space<vmem>>, vector<1x256xf32>
    %141 = vector.broadcast %140 : vector<1x256xf32> to vector<16x256xf32>
    %142 = arith.addf %139, %141 : vector<16x256xf32>
    %cst_40 = arith.constant 0.000000e+00 : f32
    %143 = vector.broadcast %cst_40 : f32 to vector<16x256xf32>
    %144 = arith.maximumf %142, %143 : vector<16x256xf32>
    %145 = arith.truncf %144 : vector<16x256xf32> to vector<16x256xbf16>
    %c0_41 = arith.constant 0 : index
    %c0_42 = arith.constant 0 : index
    %146 = vector.load %arg13[%c0_41, %c0_42] : memref<256x128xbf16, #tpu.memory_space<vmem>>, vector<256x128xbf16>
    %cst_43 = arith.constant dense<0.000000e+00> : vector<16x128xf32>
    %147 = tpu.matmul %145, %146, %cst_43 {dimension_numbers = #tpu.dot_dimension_numbers<[1], [0], [0], [1], [0, 0, 1, 1], [], []>} : vector<16x256xbf16>, vector<256x128xbf16>, vector<16x128xf32> -> vector<16x128xf32>
    %c0_44 = arith.constant 0 : index
    %c0_45 = arith.constant 0 : index
    %148 = vector.load %arg14[%c0_44, %c0_45] : memref<1x128xf32, #tpu.memory_space<vmem>>, vector<1x128xf32>
    %149 = vector.broadcast %148 : vector<1x128xf32> to vector<16x128xf32>
    %150 = arith.addf %147, %149 : vector<16x128xf32>
    %151 = arith.addf %112, %150 : vector<16x128xf32>
    %c0_46 = arith.constant 0 : index
    %c0_47 = arith.constant 0 : index
    %152 = vector.load %arg15[%c0_46, %c0_47] : memref<1x128xf32, #tpu.memory_space<vmem>>, vector<1x128xf32>
    %c0_48 = arith.constant 0 : index
    %c0_49 = arith.constant 0 : index
    %153 = vector.load %arg16[%c0_48, %c0_49] : memref<1x128xf32, #tpu.memory_space<vmem>>, vector<1x128xf32>
    %cst_50 = arith.constant dense<0.000000e+00> : vector<16xf32>
    %154 = vector.multi_reduction <add>, %151, %cst_50 [1] : vector<16x128xf32> to vector<16xf32>
    %155 = vector.shape_cast %154 : vector<16xf32> to vector<16x1xf32>
    %cst_51 = arith.constant 1.280000e+02 : f32
    %156 = vector.broadcast %cst_51 : f32 to vector<16x1xf32>
    %157 = arith.divf %155, %156 : vector<16x1xf32>
    %158 = vector.broadcast %157 : vector<16x1xf32> to vector<16x128xf32>
    %159 = arith.subf %151, %158 : vector<16x128xf32>
    %160 = arith.mulf %159, %159 : vector<16x128xf32>
    %cst_52 = arith.constant dense<0.000000e+00> : vector<16xf32>
    %161 = vector.multi_reduction <add>, %160, %cst_52 [1] : vector<16x128xf32> to vector<16xf32>
    %162 = vector.shape_cast %161 : vector<16xf32> to vector<16x1xf32>
    %cst_53 = arith.constant 1.280000e+02 : f32
    %163 = vector.broadcast %cst_53 : f32 to vector<16x1xf32>
    %164 = arith.divf %162, %163 : vector<16x1xf32>
    %165 = vector.broadcast %157 : vector<16x1xf32> to vector<16x128xf32>
    %166 = arith.subf %151, %165 : vector<16x128xf32>
    %cst_54 = arith.constant 9.99999997E-7 : f32
    %167 = vector.broadcast %cst_54 : f32 to vector<16x1xf32>
    %168 = arith.addf %164, %167 : vector<16x1xf32>
    %169 = math.rsqrt %168 : vector<16x1xf32>
    %170 = vector.broadcast %169 : vector<16x1xf32> to vector<16x128xf32>
    %171 = arith.mulf %166, %170 : vector<16x128xf32>
    %172 = vector.broadcast %152 : vector<1x128xf32> to vector<16x128xf32>
    %173 = arith.mulf %171, %172 : vector<16x128xf32>
    %174 = vector.broadcast %153 : vector<1x128xf32> to vector<16x128xf32>
    %175 = arith.addf %173, %174 : vector<16x128xf32>
    %c0_55 = arith.constant 0 : index
    %c0_56 = arith.constant 0 : index
    %176 = vector.load %arg17[%c0_55, %c0_56] : memref<16x128xf32, #tpu.memory_space<vmem>>, vector<16x128xf32>
    tpu.vector_store %arg17[%c0_55, %c0_56], %175 {strides = array<i32>} : memref<16x128xf32, #tpu.memory_space<vmem>>, vector<16x128xf32>,
    return
  }
  func.func @transform_0(%arg0: i32) -> (i32, i32) {
    %c0_i32 = arith.constant 0 : i32
    %c0_i32_0 = arith.constant 0 : i32
    return %arg0, %c0_i32 : i32, i32
  }
  func.func @transform_1(%arg0: i32) -> (i32, i32, i32) {
    %c0_i32 = arith.constant 0 : i32
    %c0_i32_0 = arith.constant 0 : i32
    %c0_i32_1 = arith.constant 0 : i32
    return %arg0, %c0_i32, %c0_i32_0 : i32, i32, i32
  }
  func.func @transform_2(%arg0: i32) -> (i32, i32) {
    %c0_i32 = arith.constant 0 : i32
    %c0_i32_0 = arith.constant 0 : i32
    %c0_i32_1 = arith.constant 0 : i32
    return %c0_i32, %c0_i32_0 : i32, i32
  }
  func.func @transform_3(%arg0: i32) -> (i32, i32) {
    %c0_i32 = arith.constant 0 : i32
    %c0_i32_0 = arith.constant 0 : i32
    %c0_i32_1 = arith.constant 0 : i32
    return %c0_i32, %c0_i32_0 : i32, i32
  }
  func.func @transform_4(%arg0: i32) -> (i32, i32) {
    %c0_i32 = arith.constant 0 : i32
    %c0_i32_0 = arith.constant 0 : i32
    %c0_i32_1 = arith.constant 0 : i32
    return %c0_i32, %c0_i32_0 : i32, i32
  }
  func.func @transform_5(%arg0: i32) -> (i32, i32) {
    %c0_i32 = arith.constant 0 : i32
    %c0_i32_0 = arith.constant 0 : i32
    %c0_i32_1 = arith.constant 0 : i32
    return %c0_i32, %c0_i32_0 : i32, i32
  }
  func.func @transform_6(%arg0: i32) -> (i32, i32) {
    %c0_i32 = arith.constant 0 : i32
    %c0_i32_0 = arith.constant 0 : i32
    %c0_i32_1 = arith.constant 0 : i32
    return %c0_i32, %c0_i32_0 : i32, i32
  }
  func.func @transform_7(%arg0: i32) -> (i32, i32) {
    %c0_i32 = arith.constant 0 : i32
    %c0_i32_0 = arith.constant 0 : i32
    %c0_i32_1 = arith.constant 0 : i32
    return %c0_i32, %c0_i32_0 : i32, i32
  }
  func.func @transform_8(%arg0: i32) -> (i32, i32) {
    %c0_i32 = arith.constant 0 : i32
    %c0_i32_0 = arith.constant 0 : i32
    %c0_i32_1 = arith.constant 0 : i32
    return %c0_i32, %c0_i32_0 : i32, i32
  }
  func.func @transform_9(%arg0: i32) -> (i32, i32) {
    %c0_i32 = arith.constant 0 : i32
    %c0_i32_0 = arith.constant 0 : i32
    %c0_i32_1 = arith.constant 0 : i32
    return %c0_i32, %c0_i32_0 : i32, i32
  }
  func.func @transform_10(%arg0: i32) -> (i32, i32) {
    %c0_i32 = arith.constant 0 : i32
    %c0_i32_0 = arith.constant 0 : i32
    %c0_i32_1 = arith.constant 0 : i32
    return %c0_i32, %c0_i32_0 : i32, i32
  }
  func.func @transform_11(%arg0: i32) -> (i32, i32) {
    %c0_i32 = arith.constant 0 : i32
    %c0_i32_0 = arith.constant 0 : i32
    %c0_i32_1 = arith.constant 0 : i32
    return %c0_i32, %c0_i32_0 : i32, i32
  }
  func.func @transform_12(%arg0: i32) -> (i32, i32) {
    %c0_i32 = arith.constant 0 : i32
    %c0_i32_0 = arith.constant 0 : i32
    %c0_i32_1 = arith.constant 0 : i32
    return %c0_i32, %c0_i32_0 : i32, i32
  }
  func.func @transform_13(%arg0: i32) -> (i32, i32) {
    %c0_i32 = arith.constant 0 : i32
    %c0_i32_0 = arith.constant 0 : i32
    %c0_i32_1 = arith.constant 0 : i32
    return %c0_i32, %c0_i32_0 : i32, i32
  }
  func.func @transform_14(%arg0: i32) -> (i32, i32) {
    %c0_i32 = arith.constant 0 : i32
    %c0_i32_0 = arith.constant 0 : i32
    %c0_i32_1 = arith.constant 0 : i32
    return %c0_i32, %c0_i32_0 : i32, i32
  }
  func.func @transform_15(%arg0: i32) -> (i32, i32) {
    %c0_i32 = arith.constant 0 : i32
    %c0_i32_0 = arith.constant 0 : i32
    %c0_i32_1 = arith.constant 0 : i32
    return %c0_i32, %c0_i32_0 : i32, i32
  }
  func.func @transform_16(%arg0: i32) -> (i32, i32) {
    %c0_i32 = arith.constant 0 : i32
    %c0_i32_0 = arith.constant 0 : i32
    return %arg0, %c0_i32 : i32, i32
  }
}

</mosaic_0001>

<llo_original>
// kernel: transformer_encoder_forward.3
$region0: #{transformer_encoder_forward.3}
  #allocation0 [shape = 'u32[]', space=smem, size = 0x4, offset = 0x4, fixed_abs, tag = 'smem constant byte address 0x4 - core index']
  #allocation1 [shape = 'u32[72,128]{1,0:T(1,128)}', space=vmem, size = 0x9000, scoped, tag = 'internal scratch']
  %s0 = inlined_call_operand.vmem [shape: f32[32,16], index: 0, kind: input, shape index: {}]
  %s1 = inlined_call_operand.vmem [shape: f32[8,128], index: 1, kind: input, shape index: {}]
  %s2 = inlined_call_operand.vmem [shape: bf16[16,128], index: 2, kind: input, shape index: {}]
  %s3 = inlined_call_operand.vmem [shape: f32[1,128], index: 3, kind: input, shape index: {}]
  %s4 = inlined_call_operand.vmem [shape: bf16[32,128], index: 4, kind: output, shape index: {}]
  %s5 = sld [smem:[#allocation0]]
  $region49: #{transformer_encoder_forward.3} parent=0
    _
  %s7 = ssub.s32 1, %s5
  %s8 = scalar_select 0, %s7, %s5
  loop: start=0, step=1, limit=4
  $region2: #{transformer_encoder_forward.3} parent=0 // loop_pre_header
    _
  $region3: #{transformer_encoder_forward.3} parent=0 // loop_header
    %s10 = sphi 0, %s14
    %p11 = scmp.ge.s32.totalorder %s10, 4
    %s20 = sphi 0, %s22
    %s23 = sphi 0, %s20
    %s24 = sphi 0, %s23
    %s40 = sphi 0, %s24
    %s44 = sphi 0, %s44
    %s46 = sphi 0, %s44
    %s47 = sphi 0, %s46
    %s61 = sphi 0, %s47
    %s65 = sphi 0, %s65
    %s67 = sphi 0, %s65
    %s68 = sphi 0, %s67
    %s82 = sphi 0, %s68
    %s86 = sphi 0, %s86
    %s88 = sphi 0, %s86
    %s89 = sphi 0, %s88
    %s103 = sphi 0, %s89
    %s109 = sphi 0, %s111
    %s112 = sphi 0, %s109
    %s113 = sphi 0, %s112
    %s129 = sphi 0, %s113
  $region4: #{transformer_encoder_forward.3} parent=0 // loop_header_branch
    %13 = sbr.rel (%p11) target = $region8
  $region5: #{transformer_encoder_forward.3} parent=0 // loop_body
    %s15 = ssub.s32 %s10, 1
    %s16 = ssub.s32 %s10, 2
    %s17 = sadd.s32 %s10, 1
    %s18 = ssub.s32 %s10, %s17
    %p19 = scmp.eq.s32.totalorder %s18, 0
    %s21 = sadd.s32 %s20, 1
    %s22 = scalar_select %p19, %s20, %s21
    %p25 = pneg %p19
    %p26 = scmp.eq.s32.totalorder %s10, 1
    %p27 = por %p25, %p26
    %p28 = scmp.ne.s32.totalorder %s20, %s23
    %p29 = scmp.eq.s32.totalorder %s10, 0
    %p30 = por %p28, %p29
    %p31 = scmp.ne.s32.totalorder %s20, %s23
    %p32 = scmp.eq.s32.totalorder %s15, 1
    %p33 = por %p31, %p32
    %p34 = scmp.ne.s32.totalorder %s23, %s24
    %p35 = scmp.eq.s32.totalorder %s15, 0
    %p36 = por %p34, %p35
    %p37 = scmp.ne.s32.totalorder %s23, %s24
    %p38 = scmp.eq.s32.totalorder %s16, 1
    %p39 = por %p37, %p38
    %p41 = scmp.ne.s32.totalorder %s24, %s40
    %p42 = scmp.eq.s32.totalorder %s16, 0
    %p43 = por %p41, %p42
    %s45 = sadd.s32 %s44, 1
    %p48 = scmp.eq.s32.totalorder %s10, 1
    %p49 = scmp.ne.s32.totalorder %s44, %s46
    %p50 = scmp.eq.s32.totalorder %s10, 0
    %p51 = por %p49, %p50
    %p52 = scmp.ne.s32.totalorder %s44, %s46
    %p53 = scmp.eq.s32.totalorder %s15, 1
    %p54 = por %p52, %p53
    %p55 = scmp.ne.s32.totalorder %s46, %s47
    %p56 = scmp.eq.s32.totalorder %s15, 0
    %p57 = por %p55, %p56
    %p58 = scmp.ne.s32.totalorder %s46, %s47
    %p59 = scmp.eq.s32.totalorder %s16, 1
    %p60 = por %p58, %p59
    %p62 = scmp.ne.s32.totalorder %s47, %s61
    %p63 = scmp.eq.s32.totalorder %s16, 0
    %p64 = por %p62, %p63
    %s66 = sadd.s32 %s65, 1
    %p69 = scmp.eq.s32.totalorder %s10, 1
    %p70 = scmp.ne.s32.totalorder %s65, %s67
    %p71 = scmp.eq.s32.totalorder %s10, 0
    %p72 = por %p70, %p71
    %p73 = scmp.ne.s32.totalorder %s65, %s67
    %p74 = scmp.eq.s32.totalorder %s15, 1
    %p75 = por %p73, %p74
    %p76 = scmp.ne.s32.totalorder %s67, %s68
    %p77 = scmp.eq.s32.totalorder %s15, 0
    %p78 = por %p76, %p77
    %p79 = scmp.ne.s32.totalorder %s67, %s68
    %p80 = scmp.eq.s32.totalorder %s16, 1
    %p81 = por %p79, %p80
    %p83 = scmp.ne.s32.totalorder %s68, %s82
    %p84 = scmp.eq.s32.totalorder %s16, 0
    %p85 = por %p83, %p84
    %s87 = sadd.s32 %s86, 1
    %p90 = scmp.eq.s32.totalorder %s10, 1
    %p91 = scmp.ne.s32.totalorder %s86, %s88
    %p92 = scmp.eq.s32.totalorder %s10, 0
    %p93 = por %p91, %p92
    %p94 = scmp.ne.s32.totalorder %s86, %s88
    %p95 = scmp.eq.s32.totalorder %s15, 1
    %p96 = por %p94, %p95
    %p97 = scmp.ne.s32.totalorder %s88, %s89
    %p98 = scmp.eq.s32.totalorder %s15, 0
    %p99 = por %p97, %p98
    %p100 = scmp.ne.s32.totalorder %s88, %s89
    %p101 = scmp.eq.s32.totalorder %s16, 1
    %p102 = por %p100, %p101
    %p104 = scmp.ne.s32.totalorder %s89, %s103
    %p105 = scmp.eq.s32.totalorder %s16, 0
    %p106 = por %p104, %p105
    %s107 = ssub.s32 %s10, %s17
    %p108 = scmp.eq.s32.totalorder %s107, 0
    %s110 = sadd.s32 %s109, 1
    %s111 = scalar_select %p108, %s109, %s110
    %p114 = pneg %p108
    %p115 = scmp.eq.s32.totalorder %s10, 1
    %p116 = por %p114, %p115
    %p117 = scmp.ne.s32.totalorder %s109, %s112
    %p118 = scmp.eq.s32.totalorder %s10, 0
    %p119 = por %p117, %p118
    %p120 = scmp.ne.s32.totalorder %s109, %s112
    %p121 = scmp.eq.s32.totalorder %s15, 1
    %p122 = por %p120, %p121
    %p123 = scmp.ne.s32.totalorder %s112, %s113
    %p124 = scmp.eq.s32.totalorder %s15, 0
    %p125 = por %p123, %p124
    %p126 = scmp.ne.s32.totalorder %s112, %s113
    %p127 = scmp.eq.s32.totalorder %s16, 1
    %p128 = por %p126, %p127
    %p130 = scmp.ne.s32.totalorder %s113, %s129
    %p131 = scmp.eq.s32.totalorder %s16, 0
    %p132 = por %p130, %p131
    %p133 = scmp.le.s32.totalorder 1, %s10
    %p134 = scmp.lt.s32.totalorder %s10, 3
    %p135 = pnand %p133, %p134
    %p136 = pneg %p135
    // Predicated region
    $region9: #{transformer_encoder_forward.3} parent=5 // pred_check
      _
    $region10: #{transformer_encoder_forward.3} parent=5 // pred_check_branch
      %138 = sbr.rel (%p135) target = $region12
    $region11: #{transformer_encoder_forward.3} parent=5 // pred_region
      %s139 = ssub.s32 %s10, 1
      // Predicated region
      $region13: #{transformer_encoder_forward.3} parent=11 // pred_check
        %p140 = pneg %p57
      $region14: #{transformer_encoder_forward.3} parent=11 // pred_check_branch
        %142 = sbr.rel (%p140) target = $region16
      $region15: #{transformer_encoder_forward.3} parent=11 // pred_region
        _
      $region16: #{transformer_encoder_forward.3} parent=11 // pred_fallthru
        _
      // Predicated region
      $region17: #{transformer_encoder_forward.3} parent=11 // pred_check
        %p143 = pneg %p78
      $region18: #{transformer_encoder_forward.3} parent=11 // pred_check_branch
        %145 = sbr.rel (%p143) target = $region20
      $region19: #{transformer_encoder_forward.3} parent=11 // pred_region
        _
      $region20: #{transformer_encoder_forward.3} parent=11 // pred_fallthru
        _
      // Predicated region
      $region21: #{transformer_encoder_forward.3} parent=11 // pred_check
        %p146 = pneg %p99
      $region22: #{transformer_encoder_forward.3} parent=11 // pred_check_branch
        %148 = sbr.rel (%p146) target = $region24
      $region23: #{transformer_encoder_forward.3} parent=11 // pred_region
        _
      $region24: #{transformer_encoder_forward.3} parent=11 // pred_fallthru
        _
    $region12: #{transformer_encoder_forward.3} parent=5 // pred_fallthru
      _
    %p149 = scmp.lt.s32.totalorder %s10, 2
    // Predicated region
    $region25: #{transformer_encoder_forward.3} parent=5 // pred_check
      %p150 = pneg %p149
    $region26: #{transformer_encoder_forward.3} parent=5 // pred_check_branch
      %152 = sbr.rel (%p150) target = $region28
    $region27: #{transformer_encoder_forward.3} parent=5 // pred_region
      // Predicated region
      $region29: #{transformer_encoder_forward.3} parent=27 // pred_check
        %p153 = pneg %p30
      $region30: #{transformer_encoder_forward.3} parent=27 // pred_check_branch
        %155 = sbr.rel (%p153) target = $region32
      $region31: #{transformer_encoder_forward.3} parent=27 // pred_region
        %s156 = smul.u32 2, %s10
        %p157 = scmp.lt.s32.totalorder %s156, 3
        %s158 = scalar_select %p157, %s156, 3
        %s159 = smul.addr %s158, 8
        %s160 = scalar_lea.vmem %s0, %s159
        %s161 = smul.u32 2, %s10
      $region32: #{transformer_encoder_forward.3} parent=27 // pred_fallthru
        _
    $region28: #{transformer_encoder_forward.3} parent=5 // pred_fallthru
      _
    %p162 = scmp.le.s32.totalorder 1, %s10
    %p163 = scmp.lt.s32.totalorder %s10, 3
    %p164 = pnand %p162, %p163
    %p165 = pneg %p164
    // Predicated region
    $region33: #{transformer_encoder_forward.3} parent=5 // pred_check
      _
    $region34: #{transformer_encoder_forward.3} parent=5 // pred_check_branch
      %167 = sbr.rel (%p164) target = $region36
    $region35: #{transformer_encoder_forward.3} parent=5 // pred_region
      %s168 = ssub.s32 %s10, 1
      %s169 = smul.u32 2, %s15
      %p170 = scmp.lt.s32.totalorder %s169, 3
      %s171 = scalar_select %p170, %s169, 3
      %s172 = smul.addr %s171, 8
      %s173 = scalar_lea.vmem %s0, %s172
      %p174 = pneg %p36
      %p175 = pneg %p33
      %p176 = pneg %p57
      %p177 = pneg %p54
      %p178 = pneg %p78
      %p179 = pneg %p75
      %p180 = pneg %p99
      %p181 = pneg %p96
      %p182 = pneg %p125
      %p183 = pneg %p122
      %s184 = smul.u32 2, %s15
      %p185 = scmp.lt.s32.totalorder %s184, 3
      %s186 = scalar_select %p185, %s184, 3
      %s187 = smul.addr %s186, 4
      %s188 = scalar_lea.vmem %s4, %s187
      %s189 = smul.u32 2, %s15
      %p190 = scmp.lt.s32.totalorder %s189, 3
      %s191 = scalar_select %p190, %s189, 3
      %s192 = smul.addr %s191, 8
      %s193 = scalar_lea.vmem %s0, %s192
      %s194 = smul.u32 2, %s15
      %s195 = smul.u32 2, %s15
      %p196 = scmp.lt.s32.totalorder %s195, 3
      %s197 = scalar_select %p196, %s195, 3
      %s198 = smul.addr %s197, 4
      %s199 = scalar_lea.vmem %s4, %s198
      %s200 = smul.u32 2, %s15
      %v202 = vld [vmem:[%s193] sm:$0xff]
      %v203 = vld [vmem:[%s193 + $0x8] sm:$0xff]
      %v204 = vpack.c.bf16 %v203, %v202
      %v205 = vld [vmem:[%s2] sm:$0xf]
      %v206 = vld [vmem:[%s2 + $0x4] sm:$0xf]
      %v207 = vld [vmem:[%s3] sm:$0x1]
      %v209 = vperm.slane %v207, 0
      %v213 = vunpack.c.l.b16 %v205
      %v214 = vunpack.c.l.b16 %v206
      %v215 = vpack.c.b16 %v214, %v213
      %vm217 = vcmask 130048
      %v219 = vsel %vm217, %v204, 0
      %221 = vmatpush.bf16.msra.mxu0 0
      %222 = vmatpush.bf16.msra.mxu0 0
      %223 = vmatpush.bf16.msra.mxu0 0
      %224 = vmatpush.bf16.msra.mxu0 0
      %225 = vmatpush.bf16.msra.mxu0 0
      %226 = vmatpush.bf16.msra.mxu0 0
      %227 = vmatpush.bf16.msra.mxu0 0
      %228 = vmatpush.bf16.msra.mxu0 %v215
      %229 = vmatmul.bf16.gmra.mxu0 %v219
      %v230 = vpop.f32.mrf.mxu0
      %v231 = vadd.f32 %v209, %v230
      %v232 = vpop.f32.mrf.mxu0
      %v233 = vadd.f32 %v209, %v232
      %234 = vdwg.mxu0
      %v235 = vld [vmem:[%s1] sm:$0xff]
      %v236 = vadd.f32 %v231, %v235
      %v237 = vadd.f32 %v233, %v235
      %v238 = vpack.c.bf16 %v236, %v236
      %v239 = vpack.c.bf16 %v237, %v237
      %240 = vst [vmem:[%s199] sm:$0xf] %v238
      %241 = vst [vmem:[%s199 + $0x4] sm:$0xf] %v239
      %s242 = smul.u32 2, %s15
      %p243 = scmp.lt.s32.totalorder %s242, 3
      %s244 = scalar_select %p243, %s242, 3
      %s245 = smul.addr %s244, 4
      %s246 = scalar_lea.vmem %s4, %s245
      // Predicated region
      $region37: #{transformer_encoder_forward.3} parent=35 // pred_check
        %p247 = pneg %p122
      $region38: #{transformer_encoder_forward.3} parent=35 // pred_check_branch
        %249 = sbr.rel (%p247) target = $region40
      $region39: #{transformer_encoder_forward.3} parent=35 // pred_region
        %s250 = smul.u32 2, %s15
      $region40: #{transformer_encoder_forward.3} parent=35 // pred_fallthru
        _
    $region36: #{transformer_encoder_forward.3} parent=5 // pred_fallthru
      _
    %p251 = scmp.le.s32.totalorder 2, %s10
    // Predicated region
    $region41: #{transformer_encoder_forward.3} parent=5 // pred_check
      %p252 = pneg %p251
    $region42: #{transformer_encoder_forward.3} parent=5 // pred_check_branch
      %254 = sbr.rel (%p252) target = $region44
    $region43: #{transformer_encoder_forward.3} parent=5 // pred_region
      %s255 = ssub.s32 %s10, 2
      // Predicated region
      $region45: #{transformer_encoder_forward.3} parent=43 // pred_check
        %p256 = pneg %p128
      $region46: #{transformer_encoder_forward.3} parent=43 // pred_check_branch
        %258 = sbr.rel (%p256) target = $region48
      $region47: #{transformer_encoder_forward.3} parent=43 // pred_region
        %s259 = smul.u32 2, %s16
        %p260 = scmp.lt.s32.totalorder %s259, 3
        %s261 = scalar_select %p260, %s259, 3
        %s262 = smul.addr %s261, 4
        %s263 = scalar_lea.vmem %s4, %s262
      $region48: #{transformer_encoder_forward.3} parent=43 // pred_fallthru
        _
    $region44: #{transformer_encoder_forward.3} parent=5 // pred_fallthru
      _
  $region6: #{transformer_encoder_forward.3} parent=0 // loop_footer
    %s14 = sadd.s32 1, %s10
  $region7: #{transformer_encoder_forward.3} parent=0 // loop_footer_branch
    %9 = sbr.rel target = $region3
  $region8: #{transformer_encoder_forward.3} parent=0 // loop_exit
    _

// kernel: transformer_encoder_forward.4
$region0: #{transformer_encoder_forward.4}
  #allocation0 [shape = 'u32[]', space=smem, size = 0x4, offset = 0x4, fixed_abs, tag = 'smem constant byte address 0x4 - core index']
  #allocation1 [shape = 'u32[72,128]{1,0:T(1,128)}', space=vmem, size = 0x9000, scoped, tag = 'internal scratch']
  %s0 = inlined_call_operand.vmem [shape: bf16[32,128], index: 0, kind: input, shape index: {}]
  %s1 = inlined_call_operand.vmem [shape: f32[4,1,8], index: 1, kind: input, shape index: {}]
  %s2 = inlined_call_operand.vmem [shape: f32[1,128], index: 2, kind: input, shape index: {}]
  %s3 = inlined_call_operand.vmem [shape: f32[1,128], index: 3, kind: input, shape index: {}]
  %s4 = inlined_call_operand.hbm [shape: bf16[128,384], index: 4, kind: input, shape index: {}]
  %s5 = inlined_call_operand.vmem [shape: f32[1,384], index: 5, kind: input, shape index: {}]
  %s6 = inlined_call_operand.vmem [shape: bf16[128,128], index: 6, kind: input, shape index: {}]
  %s7 = inlined_call_operand.vmem [shape: f32[1,128], index: 7, kind: input, shape index: {}]
  %s8 = inlined_call_operand.vmem [shape: f32[1,128], index: 8, kind: input, shape index: {}]
  %s9 = inlined_call_operand.vmem [shape: f32[1,128], index: 9, kind: input, shape index: {}]
  %s10 = inlined_call_operand.hbm [shape: bf16[128,256], index: 10, kind: input, shape index: {}]
  %s11 = inlined_call_operand.vmem [shape: f32[1,256], index: 11, kind: input, shape index: {}]
  %s12 = inlined_call_operand.hbm [shape: bf16[256,128], index: 12, kind: input, shape index: {}]
  %s13 = inlined_call_operand.vmem [shape: f32[1,128], index: 13, kind: input, shape index: {}]
  %s14 = inlined_call_operand.vmem [shape: f32[1,128], index: 14, kind: input, shape index: {}]
  %s15 = inlined_call_operand.vmem [shape: f32[1,128], index: 15, kind: input, shape index: {}]
  %s16 = inlined_call_operand.vmem [shape: bf16[32,128], index: 16, kind: output, shape index: {}]
  %s17 = sld [smem:[#allocation0]]
  $region109: #{transformer_encoder_forward.4} parent=0
    _
  %s19 = ssub.s32 1, %s17
  %s20 = scalar_select 0, %s19, %s17
  $region1: #{transformer_encoder_forward.4} parent=0
    #allocation2 [shape = 'u8[98304]{0}', space=vmem, size = 0x18000, scoped, tag = 'input window, operand 4, single buffered']
    #allocation3 [shape = 's32[2]{0}', space=sflag, size = 0x8, scoped, tag = 'scoped memory for transformer_encoder_forward.4']
    #allocation4 [shape = 'u8[65536]{0}', space=vmem, size = 0x10000, scoped, tag = 'input window, operand 10, single buffered']
    #allocation5 [shape = 's32[1]{0}', space=sflag, size = 0x4, scoped, tag = 'scoped memory for transformer_encoder_forward.4']
    #allocation6 [shape = 'u8[65536]{0}', space=vmem, size = 0x10000, scoped, tag = 'input window, operand 12, single buffered']
    %21 = vsyncpa [#allocation3], 0
    %22 = vsyncpa [#allocation5], 0
    loop: start=0, step=1, limit=4
    $region2: #{transformer_encoder_forward.4} parent=1 // loop_pre_header
      _
    $region3: #{transformer_encoder_forward.4} parent=1 // loop_header
      %s24 = sphi 0, %s28
      %p25 = scmp.ge.s32.totalorder %s24, 4
      %s34 = sphi 0, %s36
      %s37 = sphi 0, %s34
      %s38 = sphi 0, %s37
      %s54 = sphi 0, %s38
      %s60 = sphi 0, %s62
      %s63 = sphi 0, %s60
      %s64 = sphi 0, %s63
      %s80 = sphi 0, %s64
      %s84 = sphi 0, %s84
      %s86 = sphi 0, %s84
      %s87 = sphi 0, %s86
      %s101 = sphi 0, %s87
      %s105 = sphi 0, %s105
      %s107 = sphi 0, %s105
      %s108 = sphi 0, %s107
      %s122 = sphi 0, %s108
      %s126 = sphi 0, %s126
      %s128 = sphi 0, %s126
      %s129 = sphi 0, %s128
      %s143 = sphi 0, %s129
      %s147 = sphi 0, %s147
      %s149 = sphi 0, %s147
      %s150 = sphi 0, %s149
      %s164 = sphi 0, %s150
      %s168 = sphi 0, %s168
      %s170 = sphi 0, %s168
      %s171 = sphi 0, %s170
      %s185 = sphi 0, %s171
      %s189 = sphi 0, %s189
      %s191 = sphi 0, %s189
      %s192 = sphi 0, %s191
      %s206 = sphi 0, %s192
      %s210 = sphi 0, %s210
      %s212 = sphi 0, %s210
      %s213 = sphi 0, %s212
      %s227 = sphi 0, %s213
      %s231 = sphi 0, %s231
      %s233 = sphi 0, %s231
      %s234 = sphi 0, %s233
      %s248 = sphi 0, %s234
      %s252 = sphi 0, %s252
      %s254 = sphi 0, %s252
      %s255 = sphi 0, %s254
      %s269 = sphi 0, %s255
      %s273 = sphi 0, %s273
      %s275 = sphi 0, %s273
      %s276 = sphi 0, %s275
      %s290 = sphi 0, %s276
      %s294 = sphi 0, %s294
      %s296 = sphi 0, %s294
      %s297 = sphi 0, %s296
      %s311 = sphi 0, %s297
      %s315 = sphi 0, %s315
      %s317 = sphi 0, %s315
      %s318 = sphi 0, %s317
      %s332 = sphi 0, %s318
      %s336 = sphi 0, %s336
      %s338 = sphi 0, %s336
      %s339 = sphi 0, %s338
      %s353 = sphi 0, %s339
      %s357 = sphi 0, %s357
      %s359 = sphi 0, %s357
      %s360 = sphi 0, %s359
      %s374 = sphi 0, %s360
      %s380 = sphi 0, %s382
      %s383 = sphi 0, %s380
      %s384 = sphi 0, %s383
      %s400 = sphi 0, %s384
    $region4: #{transformer_encoder_forward.4} parent=1 // loop_header_branch
      %27 = sbr.rel (%p25) target = $region8
    $region5: #{transformer_encoder_forward.4} parent=1 // loop_body
      %s29 = ssub.s32 %s24, 1
      %s30 = ssub.s32 %s24, 2
      %s31 = sadd.s32 %s24, 1
      %s32 = ssub.s32 %s24, %s31
      %p33 = scmp.eq.s32.totalorder %s32, 0
      %s35 = sadd.s32 %s34, 1
      %s36 = scalar_select %p33, %s34, %s35
      %p39 = pneg %p33
      %p40 = scmp.eq.s32.totalorder %s24, 1
      %p41 = por %p39, %p40
      %p42 = scmp.ne.s32.totalorder %s34, %s37
      %p43 = scmp.eq.s32.totalorder %s24, 0
      %p44 = por %p42, %p43
      %p45 = scmp.ne.s32.totalorder %s34, %s37
      %p46 = scmp.eq.s32.totalorder %s29, 1
      %p47 = por %p45, %p46
      %p48 = scmp.ne.s32.totalorder %s37, %s38
      %p49 = scmp.eq.s32.totalorder %s29, 0
      %p50 = por %p48, %p49
      %p51 = scmp.ne.s32.totalorder %s37, %s38
      %p52 = scmp.eq.s32.totalorder %s30, 1
      %p53 = por %p51, %p52
      %p55 = scmp.ne.s32.totalorder %s38, %s54
      %p56 = scmp.eq.s32.totalorder %s30, 0
      %p57 = por %p55, %p56
      %s58 = ssub.s32 %s24, %s31
      %p59 = scmp.eq.s32.totalorder %s58, 0
      %s61 = sadd.s32 %s60, 1
      %s62 = scalar_select %p59, %s60, %s61
      %p65 = pneg %p59
      %p66 = scmp.eq.s32.totalorder %s24, 1
      %p67 = por %p65, %p66
      %p68 = scmp.ne.s32.totalorder %s60, %s63
      %p69 = scmp.eq.s32.totalorder %s24, 0
      %p70 = por %p68, %p69
      %p71 = scmp.ne.s32.totalorder %s60, %s63
      %p72 = scmp.eq.s32.totalorder %s29, 1
      %p73 = por %p71, %p72
      %p74 = scmp.ne.s32.totalorder %s63, %s64
      %p75 = scmp.eq.s32.totalorder %s29, 0
      %p76 = por %p74, %p75
      %p77 = scmp.ne.s32.totalorder %s63, %s64
      %p78 = scmp.eq.s32.totalorder %s30, 1
      %p79 = por %p77, %p78
      %p81 = scmp.ne.s32.totalorder %s64, %s80
      %p82 = scmp.eq.s32.totalorder %s30, 0
      %p83 = por %p81, %p82
      %s85 = sadd.s32 %s84, 1
      %p88 = scmp.eq.s32.totalorder %s24, 1
      %p89 = scmp.ne.s32.totalorder %s84, %s86
      %p90 = scmp.eq.s32.totalorder %s24, 0
      %p91 = por %p89, %p90
      %p92 = scmp.ne.s32.totalorder %s84, %s86
      %p93 = scmp.eq.s32.totalorder %s29, 1
      %p94 = por %p92, %p93
      %p95 = scmp.ne.s32.totalorder %s86, %s87
      %p96 = scmp.eq.s32.totalorder %s29, 0
      %p97 = por %p95, %p96
      %p98 = scmp.ne.s32.totalorder %s86, %s87
      %p99 = scmp.eq.s32.totalorder %s30, 1
      %p100 = por %p98, %p99
      %p102 = scmp.ne.s32.totalorder %s87, %s101
      %p103 = scmp.eq.s32.totalorder %s30, 0
      %p104 = por %p102, %p103
      %s106 = sadd.s32 %s105, 1
      %p109 = scmp.eq.s32.totalorder %s24, 1
      %p110 = scmp.ne.s32.totalorder %s105, %s107
      %p111 = scmp.eq.s32.totalorder %s24, 0
      %p112 = por %p110, %p111
      %p113 = scmp.ne.s32.totalorder %s105, %s107
      %p114 = scmp.eq.s32.totalorder %s29, 1
      %p115 = por %p113, %p114
      %p116 = scmp.ne.s32.totalorder %s107, %s108
      %p117 = scmp.eq.s32.totalorder %s29, 0
      %p118 = por %p116, %p117
      %p119 = scmp.ne.s32.totalorder %s107, %s108
      %p120 = scmp.eq.s32.totalorder %s30, 1
      %p121 = por %p119, %p120
      %p123 = scmp.ne.s32.totalorder %s108, %s122
      %p124 = scmp.eq.s32.totalorder %s30, 0
      %p125 = por %p123, %p124
      %s127 = sadd.s32 %s126, 1
      %p130 = scmp.eq.s32.totalorder %s24, 1
      %p131 = scmp.ne.s32.totalorder %s126, %s128
      %p132 = scmp.eq.s32.totalorder %s24, 0
      %p133 = por %p131, %p132
      %p134 = scmp.ne.s32.totalorder %s126, %s128
      %p135 = scmp.eq.s32.totalorder %s29, 1
      %p136 = por %p134, %p135
      %p137 = scmp.ne.s32.totalorder %s128, %s129
      %p138 = scmp.eq.s32.totalorder %s29, 0
      %p139 = por %p137, %p138
      %p140 = scmp.ne.s32.totalorder %s128, %s129
      %p141 = scmp.eq.s32.totalorder %s30, 1
      %p142 = por %p140, %p141
      %p144 = scmp.ne.s32.totalorder %s129, %s143
      %p145 = scmp.eq.s32.totalorder %s30, 0
      %p146 = por %p144, %p145
      %s148 = sadd.s32 %s147, 1
      %p151 = scmp.eq.s32.totalorder %s24, 1
      %p152 = scmp.ne.s32.totalorder %s147, %s149
      %p153 = scmp.eq.s32.totalorder %s24, 0
      %p154 = por %p152, %p153
      %p155 = scmp.ne.s32.totalorder %s147, %s149
      %p156 = scmp.eq.s32.totalorder %s29, 1
      %p157 = por %p155, %p156
      %p158 = scmp.ne.s32.totalorder %s149, %s150
      %p159 = scmp.eq.s32.totalorder %s29, 0
      %p160 = por %p158, %p159
      %p161 = scmp.ne.s32.totalorder %s149, %s150
      %p162 = scmp.eq.s32.totalorder %s30, 1
      %p163 = por %p161, %p162
      %p165 = scmp.ne.s32.totalorder %s150, %s164
      %p166 = scmp.eq.s32.totalorder %s30, 0
      %p167 = por %p165, %p166
      %s169 = sadd.s32 %s168, 1
      %p172 = scmp.eq.s32.totalorder %s24, 1
      %p173 = scmp.ne.s32.totalorder %s168, %s170
      %p174 = scmp.eq.s32.totalorder %s24, 0
      %p175 = por %p173, %p174
      %p176 = scmp.ne.s32.totalorder %s168, %s170
      %p177 = scmp.eq.s32.totalorder %s29, 1
      %p178 = por %p176, %p177
      %p179 = scmp.ne.s32.totalorder %s170, %s171
      %p180 = scmp.eq.s32.totalorder %s29, 0
      %p181 = por %p179, %p180
      %p182 = scmp.ne.s32.totalorder %s170, %s171
      %p183 = scmp.eq.s32.totalorder %s30, 1
      %p184 = por %p182, %p183
      %p186 = scmp.ne.s32.totalorder %s171, %s185
      %p187 = scmp.eq.s32.totalorder %s30, 0
      %p188 = por %p186, %p187
      %s190 = sadd.s32 %s189, 1
      %p193 = scmp.eq.s32.totalorder %s24, 1
      %p194 = scmp.ne.s32.totalorder %s189, %s191
      %p195 = scmp.eq.s32.totalorder %s24, 0
      %p196 = por %p194, %p195
      %p197 = scmp.ne.s32.totalorder %s189, %s191
      %p198 = scmp.eq.s32.totalorder %s29, 1
      %p199 = por %p197, %p198
      %p200 = scmp.ne.s32.totalorder %s191, %s192
      %p201 = scmp.eq.s32.totalorder %s29, 0
      %p202 = por %p200, %p201
      %p203 = scmp.ne.s32.totalorder %s191, %s192
      %p204 = scmp.eq.s32.totalorder %s30, 1
      %p205 = por %p203, %p204
      %p207 = scmp.ne.s32.totalorder %s192, %s206
      %p208 = scmp.eq.s32.totalorder %s30, 0
      %p209 = por %p207, %p208
      %s211 = sadd.s32 %s210, 1
      %p214 = scmp.eq.s32.totalorder %s24, 1
      %p215 = scmp.ne.s32.totalorder %s210, %s212
      %p216 = scmp.eq.s32.totalorder %s24, 0
      %p217 = por %p215, %p216
      %p218 = scmp.ne.s32.totalorder %s210, %s212
      %p219 = scmp.eq.s32.totalorder %s29, 1
      %p220 = por %p218, %p219
      %p221 = scmp.ne.s32.totalorder %s212, %s213
      %p222 = scmp.eq.s32.totalorder %s29, 0
      %p223 = por %p221, %p222
      %p224 = scmp.ne.s32.totalorder %s212, %s213
      %p225 = scmp.eq.s32.totalorder %s30, 1
      %p226 = por %p224, %p225
      %p228 = scmp.ne.s32.totalorder %s213, %s227
      %p229 = scmp.eq.s32.totalorder %s30, 0
      %p230 = por %p228, %p229
      %s232 = sadd.s32 %s231, 1
      %p235 = scmp.eq.s32.totalorder %s24, 1
      %p236 = scmp.ne.s32.totalorder %s231, %s233
      %p237 = scmp.eq.s32.totalorder %s24, 0
      %p238 = por %p236, %p237
      %p239 = scmp.ne.s32.totalorder %s231, %s233
      %p240 = scmp.eq.s32.totalorder %s29, 1
      %p241 = por %p239, %p240
      %p242 = scmp.ne.s32.totalorder %s233, %s234
      %p243 = scmp.eq.s32.totalorder %s29, 0
      %p244 = por %p242, %p243
      %p245 = scmp.ne.s32.totalorder %s233, %s234
      %p246 = scmp.eq.s32.totalorder %s30, 1
      %p247 = por %p245, %p246
      %p249 = scmp.ne.s32.totalorder %s234, %s248
      %p250 = scmp.eq.s32.totalorder %s30, 0
      %p251 = por %p249, %p250
      %s253 = sadd.s32 %s252, 1
      %p256 = scmp.eq.s32.totalorder %s24, 1
      %p257 = scmp.ne.s32.totalorder %s252, %s254
      %p258 = scmp.eq.s32.totalorder %s24, 0
      %p259 = por %p257, %p258
      %p260 = scmp.ne.s32.totalorder %s252, %s254
      %p261 = scmp.eq.s32.totalorder %s29, 1
      %p262 = por %p260, %p261
      %p263 = scmp.ne.s32.totalorder %s254, %s255
      %p264 = scmp.eq.s32.totalorder %s29, 0
      %p265 = por %p263, %p264
      %p266 = scmp.ne.s32.totalorder %s254, %s255
      %p267 = scmp.eq.s32.totalorder %s30, 1
      %p268 = por %p266, %p267
      %p270 = scmp.ne.s32.totalorder %s255, %s269
      %p271 = scmp.eq.s32.totalorder %s30, 0
      %p272 = por %p270, %p271
      %s274 = sadd.s32 %s273, 1
      %p277 = scmp.eq.s32.totalorder %s24, 1
      %p278 = scmp.ne.s32.totalorder %s273, %s275
      %p279 = scmp.eq.s32.totalorder %s24, 0
      %p280 = por %p278, %p279
      %p281 = scmp.ne.s32.totalorder %s273, %s275
      %p282 = scmp.eq.s32.totalorder %s29, 1
      %p283 = por %p281, %p282
      %p284 = scmp.ne.s32.totalorder %s275, %s276
      %p285 = scmp.eq.s32.totalorder %s29, 0
      %p286 = por %p284, %p285
      %p287 = scmp.ne.s32.totalorder %s275, %s276
      %p288 = scmp.eq.s32.totalorder %s30, 1
      %p289 = por %p287, %p288
      %p291 = scmp.ne.s32.totalorder %s276, %s290
      %p292 = scmp.eq.s32.totalorder %s30, 0
      %p293 = por %p291, %p292
      %s295 = sadd.s32 %s294, 1
      %p298 = scmp.eq.s32.totalorder %s24, 1
      %p299 = scmp.ne.s32.totalorder %s294, %s296
      %p300 = scmp.eq.s32.totalorder %s24, 0
      %p301 = por %p299, %p300
      %p302 = scmp.ne.s32.totalorder %s294, %s296
      %p303 = scmp.eq.s32.totalorder %s29, 1
      %p304 = por %p302, %p303
      %p305 = scmp.ne.s32.totalorder %s296, %s297
      %p306 = scmp.eq.s32.totalorder %s29, 0
      %p307 = por %p305, %p306
      %p308 = scmp.ne.s32.totalorder %s296, %s297
      %p309 = scmp.eq.s32.totalorder %s30, 1
      %p310 = por %p308, %p309
      %p312 = scmp.ne.s32.totalorder %s297, %s311
      %p313 = scmp.eq.s32.totalorder %s30, 0
      %p314 = por %p312, %p313
      %s316 = sadd.s32 %s315, 1
      %p319 = scmp.eq.s32.totalorder %s24, 1
      %p320 = scmp.ne.s32.totalorder %s315, %s317
      %p321 = scmp.eq.s32.totalorder %s24, 0
      %p322 = por %p320, %p321
      %p323 = scmp.ne.s32.totalorder %s315, %s317
      %p324 = scmp.eq.s32.totalorder %s29, 1
      %p325 = por %p323, %p324
      %p326 = scmp.ne.s32.totalorder %s317, %s318
      %p327 = scmp.eq.s32.totalorder %s29, 0
      %p328 = por %p326, %p327
      %p329 = scmp.ne.s32.totalorder %s317, %s318
      %p330 = scmp.eq.s32.totalorder %s30, 1
      %p331 = por %p329, %p330
      %p333 = scmp.ne.s32.totalorder %s318, %s332
      %p334 = scmp.eq.s32.totalorder %s30, 0
      %p335 = por %p333, %p334
      %s337 = sadd.s32 %s336, 1
      %p340 = scmp.eq.s32.totalorder %s24, 1
      %p341 = scmp.ne.s32.totalorder %s336, %s338
      %p342 = scmp.eq.s32.totalorder %s24, 0
      %p343 = por %p341, %p342
      %p344 = scmp.ne.s32.totalorder %s336, %s338
      %p345 = scmp.eq.s32.totalorder %s29, 1
      %p346 = por %p344, %p345
      %p347 = scmp.ne.s32.totalorder %s338, %s339
      %p348 = scmp.eq.s32.totalorder %s29, 0
      %p349 = por %p347, %p348
      %p350 = scmp.ne.s32.totalorder %s338, %s339
      %p351 = scmp.eq.s32.totalorder %s30, 1
      %p352 = por %p350, %p351
      %p354 = scmp.ne.s32.totalorder %s339, %s353
      %p355 = scmp.eq.s32.totalorder %s30, 0
      %p356 = por %p354, %p355
      %s358 = sadd.s32 %s357, 1
      %p361 = scmp.eq.s32.totalorder %s24, 1
      %p362 = scmp.ne.s32.totalorder %s357, %s359
      %p363 = scmp.eq.s32.totalorder %s24, 0
      %p364 = por %p362, %p363
      %p365 = scmp.ne.s32.totalorder %s357, %s359
      %p366 = scmp.eq.s32.totalorder %s29, 1
      %p367 = por %p365, %p366
      %p368 = scmp.ne.s32.totalorder %s359, %s360
      %p369 = scmp.eq.s32.totalorder %s29, 0
      %p370 = por %p368, %p369
      %p371 = scmp.ne.s32.totalorder %s359, %s360
      %p372 = scmp.eq.s32.totalorder %s30, 1
      %p373 = por %p371, %p372
      %p375 = scmp.ne.s32.totalorder %s360, %s374
      %p376 = scmp.eq.s32.totalorder %s30, 0
      %p377 = por %p375, %p376
      %s378 = ssub.s32 %s24, %s31
      %p379 = scmp.eq.s32.totalorder %s378, 0
      %s381 = sadd.s32 %s380, 1
      %s382 = scalar_select %p379, %s380, %s381
      %p385 = pneg %p379
      %p386 = scmp.eq.s32.totalorder %s24, 1
      %p387 = por %p385, %p386
      %p388 = scmp.ne.s32.totalorder %s380, %s383
      %p389 = scmp.eq.s32.totalorder %s24, 0
      %p390 = por %p388, %p389
      %p391 = scmp.ne.s32.totalorder %s380, %s383
      %p392 = scmp.eq.s32.totalorder %s29, 1
      %p393 = por %p391, %p392
      %p394 = scmp.ne.s32.totalorder %s383, %s384
      %p395 = scmp.eq.s32.totalorder %s29, 0
      %p396 = por %p394, %p395
      %p397 = scmp.ne.s32.totalorder %s383, %s384
      %p398 = scmp.eq.s32.totalorder %s30, 1
      %p399 = por %p397, %p398
      %p401 = scmp.ne.s32.totalorder %s384, %s400
      %p402 = scmp.eq.s32.totalorder %s30, 0
      %p403 = por %p401, %p402
      %p404 = scmp.le.s32.totalorder 1, %s24
      %p405 = scmp.lt.s32.totalorder %s24, 3
      %p406 = pnand %p404, %p405
      %p407 = pneg %p406
      // Predicated region
      $region9: #{transformer_encoder_forward.4} parent=5 // pred_check
        _
      $region10: #{transformer_encoder_forward.4} parent=5 // pred_check_branch
        %409 = sbr.rel (%p406) target = $region12
      $region11: #{transformer_encoder_forward.4} parent=5 // pred_region
        %s410 = ssub.s32 %s24, 1
        // Predicated region
        $region13: #{transformer_encoder_forward.4} parent=11 // pred_check
          %p411 = pneg %p97
        $region14: #{transformer_encoder_forward.4} parent=11 // pred_check_branch
          %413 = sbr.rel (%p411) target = $region16
        $region15: #{transformer_encoder_forward.4} parent=11 // pred_region
          _
        $region16: #{transformer_encoder_forward.4} parent=11 // pred_fallthru
          _
        // Predicated region
        $region17: #{transformer_encoder_forward.4} parent=11 // pred_check
          %p414 = pneg %p118
        $region18: #{transformer_encoder_forward.4} parent=11 // pred_check_branch
          %416 = sbr.rel (%p414) target = $region20
        $region19: #{transformer_encoder_forward.4} parent=11 // pred_region
          _
        $region20: #{transformer_encoder_forward.4} parent=11 // pred_fallthru
          _
        // Predicated region
        $region21: #{transformer_encoder_forward.4} parent=11 // pred_check
          %p417 = pneg %p139
        $region22: #{transformer_encoder_forward.4} parent=11 // pred_check_branch
          %419 = sbr.rel (%p417) target = $region24
        $region23: #{transformer_encoder_forward.4} parent=11 // pred_region
          %421 = vsyncadd [#allocation3], 0
          %s422 = sshll.u32 %s4, 4
          %s423 = int_to_ptr.hbm [resolvable:$true] %s422
          %s424 = sshll.u32 [#allocation2], 4
          %s425 = int_to_ptr.vmem [resolvable:$true] %s424
          %430 = dma.hbm_to_vmem [thread:$0]  %s423, 3072, %s425, [#allocation3], 192, 192, 12
        $region24: #{transformer_encoder_forward.4} parent=11 // pred_fallthru
          _
        // Predicated region
        $region25: #{transformer_encoder_forward.4} parent=11 // pred_check
          %p431 = pneg %p160
        $region26: #{transformer_encoder_forward.4} parent=11 // pred_check_branch
          %433 = sbr.rel (%p431) target = $region28
        $region27: #{transformer_encoder_forward.4} parent=11 // pred_region
          _
        $region28: #{transformer_encoder_forward.4} parent=11 // pred_fallthru
          _
        // Predicated region
        $region29: #{transformer_encoder_forward.4} parent=11 // pred_check
          %p434 = pneg %p181
        $region30: #{transformer_encoder_forward.4} parent=11 // pred_check_branch
          %436 = sbr.rel (%p434) target = $region32
        $region31: #{transformer_encoder_forward.4} parent=11 // pred_region
          _
        $region32: #{transformer_encoder_forward.4} parent=11 // pred_fallthru
          _
        // Predicated region
        $region33: #{transformer_encoder_forward.4} parent=11 // pred_check
          %p437 = pneg %p202
        $region34: #{transformer_encoder_forward.4} parent=11 // pred_check_branch
          %439 = sbr.rel (%p437) target = $region36
        $region35: #{transformer_encoder_forward.4} parent=11 // pred_region
          _
        $region36: #{transformer_encoder_forward.4} parent=11 // pred_fallthru
          _
        // Predicated region
        $region37: #{transformer_encoder_forward.4} parent=11 // pred_check
          %p440 = pneg %p223
        $region38: #{transformer_encoder_forward.4} parent=11 // pred_check_branch
          %442 = sbr.rel (%p440) target = $region40
        $region39: #{transformer_encoder_forward.4} parent=11 // pred_region
          _
        $region40: #{transformer_encoder_forward.4} parent=11 // pred_fallthru
          _
        // Predicated region
        $region41: #{transformer_encoder_forward.4} parent=11 // pred_check
          %p443 = pneg %p244
        $region42: #{transformer_encoder_forward.4} parent=11 // pred_check_branch
          %445 = sbr.rel (%p443) target = $region44
        $region43: #{transformer_encoder_forward.4} parent=11 // pred_region
          _
        $region44: #{transformer_encoder_forward.4} parent=11 // pred_fallthru
          _
        // Predicated region
        $region45: #{transformer_encoder_forward.4} parent=11 // pred_check
          %p446 = pneg %p265
        $region46: #{transformer_encoder_forward.4} parent=11 // pred_check_branch
          %448 = sbr.rel (%p446) target = $region48
        $region47: #{transformer_encoder_forward.4} parent=11 // pred_region
          %450 = vsyncadd [#allocation5], 0
          %s451 = sshll.u32 %s10, 4
          %s452 = int_to_ptr.hbm [resolvable:$true] %s451
          %s453 = sshll.u32 [#allocation4], 4
          %s454 = int_to_ptr.vmem [resolvable:$true] %s453
          %459 = dma.hbm_to_vmem [thread:$0]  %s452, 2048, %s454, [#allocation5], 128, 128, 8
        $region48: #{transformer_encoder_forward.4} parent=11 // pred_fallthru
          _
        // Predicated region
        $region49: #{transformer_encoder_forward.4} parent=11 // pred_check
          %p460 = pneg %p286
        $region50: #{transformer_encoder_forward.4} parent=11 // pred_check_branch
          %462 = sbr.rel (%p460) target = $region52
        $region51: #{transformer_encoder_forward.4} parent=11 // pred_region
          _
        $region52: #{transformer_encoder_forward.4} parent=11 // pred_fallthru
          _
        // Predicated region
        $region53: #{transformer_encoder_forward.4} parent=11 // pred_check
          %p463 = pneg %p307
        $region54: #{transformer_encoder_forward.4} parent=11 // pred_check_branch
          %465 = sbr.rel (%p463) target = $region56
        $region55: #{transformer_encoder_forward.4} parent=11 // pred_region
          %467 = vsyncadd [#allocation5], 0
          %s468 = sshll.u32 %s12, 4
          %s469 = int_to_ptr.hbm [resolvable:$true] %s468
          %s470 = sshll.u32 [#allocation6], 4
          %s471 = int_to_ptr.vmem [resolvable:$true] %s470
          %476 = dma.hbm_to_vmem [thread:$0]  %s469, 2048, %s471, [#allocation5], 64, 64, 4
        $region56: #{transformer_encoder_forward.4} parent=11 // pred_fallthru
          _
        // Predicated region
        $region57: #{transformer_encoder_forward.4} parent=11 // pred_check
          %p477 = pneg %p328
        $region58: #{transformer_encoder_forward.4} parent=11 // pred_check_branch
          %479 = sbr.rel (%p477) target = $region60
        $region59: #{transformer_encoder_forward.4} parent=11 // pred_region
          _
        $region60: #{transformer_encoder_forward.4} parent=11 // pred_fallthru
          _
        // Predicated region
        $region61: #{transformer_encoder_forward.4} parent=11 // pred_check
          %p480 = pneg %p349
        $region62: #{transformer_encoder_forward.4} parent=11 // pred_check_branch
          %482 = sbr.rel (%p480) target = $region64
        $region63: #{transformer_encoder_forward.4} parent=11 // pred_region
          _
        $region64: #{transformer_encoder_forward.4} parent=11 // pred_fallthru
          _
        // Predicated region
        $region65: #{transformer_encoder_forward.4} parent=11 // pred_check
          %p483 = pneg %p370
        $region66: #{transformer_encoder_forward.4} parent=11 // pred_check_branch
          %485 = sbr.rel (%p483) target = $region68
        $region67: #{transformer_encoder_forward.4} parent=11 // pred_region
          _
        $region68: #{transformer_encoder_forward.4} parent=11 // pred_fallthru
          _
      $region12: #{transformer_encoder_forward.4} parent=5 // pred_fallthru
        _
      %p486 = scmp.lt.s32.totalorder %s24, 2
      // Predicated region
      $region69: #{transformer_encoder_forward.4} parent=5 // pred_check
        %p487 = pneg %p486
      $region70: #{transformer_encoder_forward.4} parent=5 // pred_check_branch
        %489 = sbr.rel (%p487) target = $region72
      $region71: #{transformer_encoder_forward.4} parent=5 // pred_region
        // Predicated region
        $region73: #{transformer_encoder_forward.4} parent=71 // pred_check
          %p490 = pneg %p44
        $region74: #{transformer_encoder_forward.4} parent=71 // pred_check_branch
          %492 = sbr.rel (%p490) target = $region76
        $region75: #{transformer_encoder_forward.4} parent=71 // pred_region
          %s493 = smul.u32 2, %s24
          %p494 = scmp.lt.s32.totalorder %s493, 3
          %s495 = scalar_select %p494, %s493, 3
          %s496 = smul.addr %s495, 4
          %s497 = scalar_lea.vmem %s0, %s496
          %s498 = smul.u32 2, %s24
        $region76: #{transformer_encoder_forward.4} parent=71 // pred_fallthru
          _
        // Predicated region
        $region77: #{transformer_encoder_forward.4} parent=71 // pred_check
          %p499 = pneg %p70
        $region78: #{transformer_encoder_forward.4} parent=71 // pred_check_branch
          %501 = sbr.rel (%p499) target = $region80
        $region79: #{transformer_encoder_forward.4} parent=71 // pred_region
          %s502 = smul.u32 2, %s24
          %p503 = scmp.lt.s32.totalorder %s502, 3
          %s504 = scalar_select %p503, %s502, 3
          %s505 = scalar_lea.vmem %s1, %s504
          %s506 = smul.u32 2, %s24
        $region80: #{transformer_encoder_forward.4} parent=71 // pred_fallthru
          _
      $region72: #{transformer_encoder_forward.4} parent=5 // pred_fallthru
        _
      %p507 = scmp.le.s32.totalorder 1, %s24
      %p508 = scmp.lt.s32.totalorder %s24, 3
      %p509 = pnand %p507, %p508
      %p510 = pneg %p509
      // Predicated region
      $region81: #{transformer_encoder_forward.4} parent=5 // pred_check
        _
      $region82: #{transformer_encoder_forward.4} parent=5 // pred_check_branch
        %512 = sbr.rel (%p509) target = $region84
      $region83: #{transformer_encoder_forward.4} parent=5 // pred_region
        %s513 = ssub.s32 %s24, 1
        // Predicated region
        $region85: #{transformer_encoder_forward.4} parent=83 // pred_check
          %p514 = pneg %p139
        $region86: #{transformer_encoder_forward.4} parent=83 // pred_check_branch
          %516 = sbr.rel (%p514) target = $region88
        $region87: #{transformer_encoder_forward.4} parent=83 // pred_region
          %518 = dma.done [#allocation3], 3072
        $region88: #{transformer_encoder_forward.4} parent=83 // pred_fallthru
          _
        // Predicated region
        $region89: #{transformer_encoder_forward.4} parent=83 // pred_check
          %p519 = pneg %p265
        $region90: #{transformer_encoder_forward.4} parent=83 // pred_check_branch
          %521 = sbr.rel (%p519) target = $region92
        $region91: #{transformer_encoder_forward.4} parent=83 // pred_region
          %523 = dma.done [#allocation5], 2048
        $region92: #{transformer_encoder_forward.4} parent=83 // pred_fallthru
          _
        // Predicated region
        $region93: #{transformer_encoder_forward.4} parent=83 // pred_check
          %p524 = pneg %p307
        $region94: #{transformer_encoder_forward.4} parent=83 // pred_check_branch
          %526 = sbr.rel (%p524) target = $region96
        $region95: #{transformer_encoder_forward.4} parent=83 // pred_region
          %528 = dma.done [#allocation5], 2048
        $region96: #{transformer_encoder_forward.4} parent=83 // pred_fallthru
          _
        %s529 = smul.u32 2, %s29
        %p530 = scmp.lt.s32.totalorder %s529, 3
        %s531 = scalar_select %p530, %s529, 3
        %s532 = smul.addr %s531, 4
        %s533 = scalar_lea.vmem %s0, %s532
        %p534 = pneg %p50
        %p535 = pneg %p47
        %s536 = smul.u32 2, %s29
        %p537 = scmp.lt.s32.totalorder %s536, 3
        %s538 = scalar_select %p537, %s536, 3
        %s539 = scalar_lea.vmem %s1, %s538
        %p540 = pneg %p76
        %p541 = pneg %p73
        %p542 = pneg %p97
        %p543 = pneg %p94
        %p544 = pneg %p118
        %p545 = pneg %p115
        %p546 = pneg %p139
        %p547 = pneg %p136
        %p548 = pneg %p160
        %p549 = pneg %p157
        %p550 = pneg %p181
        %p551 = pneg %p178
        %p552 = pneg %p202
        %p553 = pneg %p199
        %p554 = pneg %p223
        %p555 = pneg %p220
        %p556 = pneg %p244
        %p557 = pneg %p241
        %p558 = pneg %p265
        %p559 = pneg %p262
        %p560 = pneg %p286
        %p561 = pneg %p283
        %p562 = pneg %p307
        %p563 = pneg %p304
        %p564 = pneg %p328
        %p565 = pneg %p325
        %p566 = pneg %p349
        %p567 = pneg %p346
        %p568 = pneg %p370
        %p569 = pneg %p367
        %p570 = pneg %p396
        %p571 = pneg %p393
        %s572 = smul.u32 2, %s29
        %p573 = scmp.lt.s32.totalorder %s572, 3
        %s574 = scalar_select %p573, %s572, 3
        %s575 = smul.addr %s574, 4
        %s576 = scalar_lea.vmem %s16, %s575
        %s577 = smul.u32 2, %s29
        %p578 = scmp.lt.s32.totalorder %s577, 3
        %s579 = scalar_select %p578, %s577, 3
        %s580 = smul.addr %s579, 4
        %s581 = scalar_lea.vmem %s0, %s580
        %s582 = smul.u32 2, %s29
        %s583 = smul.u32 2, %s29
        %p584 = scmp.lt.s32.totalorder %s583, 3
        %s585 = scalar_select %p584, %s583, 3
        %s586 = scalar_lea.vmem %s1, %s585
        %s587 = smul.u32 2, %s29
        %s588 = smul.u32 2, %s29
        %p589 = scmp.lt.s32.totalorder %s588, 3
        %s590 = scalar_select %p589, %s588, 3
        %s591 = smul.addr %s590, 4
        %s592 = scalar_lea.vmem %s16, %s591
        %s593 = smul.u32 2, %s29
        %v595 = vld [vmem:[%s581] sm:$0xf]
        %v596 = vld [vmem:[%s581 + $0x4] sm:$0xf]
        %v597 = vunpack.c.l.bf16 %v595
        %v598 = vunpack.c.l.bf16 %v596
        %v599 = vld [vmem:[%s2] sm:$0x1]
        %v600 = vld [vmem:[%s3] sm:$0x1]
        %601 = vadd.xlane.f32.xlu0 %v597
        %v602 = vpop.xlane.xlu0 %601
        %603 = vadd.xlane.f32.xlu0 %v598
        %v604 = vpop.xlane.xlu0 %603
        %v605 = vrcp.pop 128.0
        %v606 = vmul.f32 128.0, %v605
        %v607 = vsub.f32 1.0, %v606
        %v608 = vmul.f32 %v605, %v607
        %v609 = vadd.f32 %v605, %v608
        %vm610 = vweird.f32 %v605
        %v611 = vsel %vm610, %v605, %v609
        %v612 = vmul.f32 %v602, %v611
        %v613 = vmul.f32 %v604, %v611
        %v614 = vsub.f32 %v597, %v612
        %v615 = vsub.f32 %v598, %v613
        %v616 = vmul.f32 %v614, %v614
        %v617 = vmul.f32 %v615, %v615
        %618 = vadd.xlane.f32.xlu0 %v616
        %v619 = vpop.xlane.xlu0 %618
        %620 = vadd.xlane.f32.xlu0 %v617
        %v621 = vpop.xlane.xlu0 %620
        %v622 = vmul.f32 %v619, %v611
        %v623 = vmul.f32 %v621, %v611
        %v624 = vadd.f32 %v622, 1e-06
        %v625 = vadd.f32 %v623, 1e-06
        %v626 = vrsqrt.pop %v624
        %v627 = vmul.f32 %v626, %v624
        %v628 = vmul.f32 %v627, %v626
        %v629 = vmul.f32 0.5, %v628
        %v630 = vsub.f32 1.5, %v629
        %v631 = vmul.f32 %v626, %v630
        %vm632 = vweird.f32 %v624
        %vm633 = vweird.f32 %v626
        %vm634 = vmor %vm632, %vm633
        %v635 = vsel %vm634, %v626, %v631
        %v636 = vrsqrt.pop %v625
        %v637 = vmul.f32 %v636, %v625
        %v638 = vmul.f32 %v637, %v636
        %v639 = vmul.f32 0.5, %v638
        %v640 = vsub.f32 1.5, %v639
        %v641 = vmul.f32 %v636, %v640
        %vm642 = vweird.f32 %v625
        %vm643 = vweird.f32 %v636
        %vm644 = vmor %vm642, %vm643
        %v645 = vsel %vm644, %v636, %v641
        %v646 = vmul.f32 %v614, %v635
        %v647 = vmul.f32 %v615, %v645
        %v649 = vperm.slane %v599, 0
        %v651 = vmul.f32 %v646, %v649
        %v652 = vmul.f32 %v647, %v649
        %v654 = vperm.slane %v600, 0
        %v656 = vadd.f32 %v651, %v654
        %v657 = vadd.f32 %v652, %v654
        %v658 = vpack.c.bf16 %v657, %v656
        %v659 = vld [vmem:[#allocation2] sm:$0xff]
        %v660 = vld [vmem:[#allocation2 + $0x8] sm:$0xf]
        %v661 = vld [vmem:[#allocation2 + $0xc] sm:$0xff]
        %v662 = vld [vmem:[#allocation2 + $0x14] sm:$0xf]
        %v663 = vld [vmem:[#allocation2 + $0x18] sm:$0xff]
        %v664 = vld [vmem:[#allocation2 + $0x20] sm:$0xf]
        %v665 = vld [vmem:[#allocation2 + $0x24] sm:$0xff]
        %v666 = vld [vmem:[#allocation2 + $0x2c] sm:$0xf]
        %v667 = vld [vmem:[#allocation2 + $0x30] sm:$0xff]
        %v668 = vld [vmem:[#allocation2 + $0x38] sm:$0xf]
        %v669 = vld [vmem:[#allocation2 + $0x3c] sm:$0xff]
        %v670 = vld [vmem:[#allocation2 + $0x44] sm:$0xf]
        %v671 = vld [vmem:[#allocation2 + $0x48] sm:$0xff]
        %v672 = vld [vmem:[#allocation2 + $0x50] sm:$0xf]
        %v673 = vld [vmem:[#allocation2 + $0x54] sm:$0xff]
        %v674 = vld [vmem:[#allocation2 + $0x5c] sm:$0xf]
        %v675 = vld [vmem:[#allocation2 + $0x60] sm:$0xff]
        %v676 = vld [vmem:[#allocation2 + $0x68] sm:$0xf]
        %v677 = vld [vmem:[#allocation2 + $0x6c] sm:$0xff]
        %v678 = vld [vmem:[#allocation2 + $0x74] sm:$0xf]
        %v679 = vld [vmem:[#allocation2 + $0x78] sm:$0xff]
        %v680 = vld [vmem:[#allocation2 + $0x80] sm:$0xf]
        %v681 = vld [vmem:[#allocation2 + $0x84] sm:$0xff]
        %v682 = vld [vmem:[#allocation2 + $0x8c] sm:$0xf]
        %v683 = vld [vmem:[#allocation2 + $0x90] sm:$0xff]
        %v684 = vld [vmem:[#allocation2 + $0x98] sm:$0xf]
        %v685 = vld [vmem:[#allocation2 + $0x9c] sm:$0xff]
        %v686 = vld [vmem:[#allocation2 + $0xa4] sm:$0xf]
        %v687 = vld [vmem:[#allocation2 + $0xa8] sm:$0xff]
        %v688 = vld [vmem:[#allocation2 + $0xb0] sm:$0xf]
        %v689 = vld [vmem:[#allocation2 + $0xb4] sm:$0xff]
        %v690 = vld [vmem:[#allocation2 + $0xbc] sm:$0xf]
        %v691 = vld [vmem:[%s5] sm:$0x7]
        %v693 = vperm.slane %v691, 0
        %v694 = vperm.slane %v691, 1
        %v695 = vperm.slane %v691, 2
        %v731 = vunpack.c.l.b16 %v659
        %v732 = vunpack.c.h.b16 %v659
        %v733 = vunpack.c.l.b16 %v660
        %v734 = vunpack.c.l.b16 %v661
        %v735 = vunpack.c.h.b16 %v661
        %v736 = vunpack.c.l.b16 %v662
        %v737 = vunpack.c.l.b16 %v663
        %v738 = vunpack.c.h.b16 %v663
        %v739 = vunpack.c.l.b16 %v664
        %v740 = vunpack.c.l.b16 %v665
        %v741 = vunpack.c.h.b16 %v665
        %v742 = vunpack.c.l.b16 %v666
        %v743 = vunpack.c.l.b16 %v667
        %v744 = vunpack.c.h.b16 %v667
        %v745 = vunpack.c.l.b16 %v668
        %v746 = vunpack.c.l.b16 %v669
        %v747 = vunpack.c.h.b16 %v669
        %v748 = vunpack.c.l.b16 %v670
        %v749 = vunpack.c.l.b16 %v671
        %v750 = vunpack.c.h.b16 %v671
        %v751 = vunpack.c.l.b16 %v672
        %v752 = vunpack.c.l.b16 %v673
        %v753 = vunpack.c.h.b16 %v673
        %v754 = vunpack.c.l.b16 %v674
        %v755 = vunpack.c.l.b16 %v675
        %v756 = vunpack.c.h.b16 %v675
        %v757 = vunpack.c.l.b16 %v676
        %v758 = vunpack.c.l.b16 %v677
        %v759 = vunpack.c.h.b16 %v677
        %v760 = vunpack.c.l.b16 %v678
        %v761 = vunpack.c.l.b16 %v679
        %v762 = vunpack.c.h.b16 %v679
        %v763 = vunpack.c.l.b16 %v680
        %v764 = vunpack.c.l.b16 %v681
        %v765 = vunpack.c.h.b16 %v681
        %v766 = vunpack.c.l.b16 %v682
        %v767 = vunpack.c.l.b16 %v683
        %v768 = vunpack.c.h.b16 %v683
        %v769 = vunpack.c.l.b16 %v684
        %v770 = vunpack.c.l.b16 %v685
        %v771 = vunpack.c.h.b16 %v685
        %v772 = vunpack.c.l.b16 %v686
        %v773 = vunpack.c.l.b16 %v687
        %v774 = vunpack.c.h.b16 %v687
        %v775 = vunpack.c.l.b16 %v688
        %v776 = vunpack.c.l.b16 %v689
        %v777 = vunpack.c.h.b16 %v689
        %v778 = vunpack.c.l.b16 %v690
        %v779 = vpack.c.b16 %v734, %v731
        %v780 = vpack.c.b16 %v735, %v732
        %v781 = vpack.c.b16 %v736, %v733
        %v782 = vpack.c.b16 %v740, %v737
        %v783 = vpack.c.b16 %v741, %v738
        %v784 = vpack.c.b16 %v742, %v739
        %v785 = vpack.c.b16 %v746, %v743
        %v786 = vpack.c.b16 %v747, %v744
        %v787 = vpack.c.b16 %v748, %v745
        %v788 = vpack.c.b16 %v752, %v749
        %v789 = vpack.c.b16 %v753, %v750
        %v790 = vpack.c.b16 %v754, %v751
        %v791 = vpack.c.b16 %v758, %v755
        %v792 = vpack.c.b16 %v759, %v756
        %v793 = vpack.c.b16 %v760, %v757
        %v794 = vpack.c.b16 %v764, %v761
        %v795 = vpack.c.b16 %v765, %v762
        %v796 = vpack.c.b16 %v766, %v763
        %v797 = vpack.c.b16 %v770, %v767
        %v798 = vpack.c.b16 %v771, %v768
        %v799 = vpack.c.b16 %v772, %v769
        %v800 = vpack.c.b16 %v776, %v773
        %v801 = vpack.c.b16 %v777, %v774
        %v802 = vpack.c.b16 %v778, %v775
        %827 = vmatpush.bf16.msra.mxu0 %v800
        %828 = vmatpush.bf16.msra.mxu0 %v797
        %829 = vmatpush.bf16.msra.mxu0 %v794
        %830 = vmatpush.bf16.msra.mxu0 %v791
        %831 = vmatpush.bf16.msra.mxu0 %v788
        %832 = vmatpush.bf16.msra.mxu0 %v785
        %833 = vmatpush.bf16.msra.mxu0 %v782
        %834 = vmatpush.bf16.msra.mxu0 %v779
        %835 = vmatmul.bf16.gmra.mxu0 %v658
        %v836 = vpop.f32.mrf.mxu0
        %v837 = vadd.f32 %v693, %v836
        %v838 = vpop.f32.mrf.mxu0
        %v839 = vadd.f32 %v693, %v838
        %840 = vdwg.mxu0
        %841 = vmatpush.bf16.msra.mxu0 %v801
        %842 = vmatpush.bf16.msra.mxu0 %v798
        %843 = vmatpush.bf16.msra.mxu0 %v795
        %844 = vmatpush.bf16.msra.mxu0 %v792
        %845 = vmatpush.bf16.msra.mxu0 %v789
        %846 = vmatpush.bf16.msra.mxu0 %v786
        %847 = vmatpush.bf16.msra.mxu0 %v783
        %848 = vmatpush.bf16.msra.mxu0 %v780
        %849 = vmatmul.bf16.gmra.mxu0 %v658
        %v850 = vpop.f32.mrf.mxu0
        %v851 = vadd.f32 %v694, %v850
        %v852 = vpop.f32.mrf.mxu0
        %v853 = vadd.f32 %v694, %v852
        %854 = vdwg.mxu0
        %855 = vmatpush.bf16.msra.mxu0 %v802
        %856 = vmatpush.bf16.msra.mxu0 %v799
        %857 = vmatpush.bf16.msra.mxu0 %v796
        %858 = vmatpush.bf16.msra.mxu0 %v793
        %859 = vmatpush.bf16.msra.mxu0 %v790
        %860 = vmatpush.bf16.msra.mxu0 %v787
        %861 = vmatpush.bf16.msra.mxu0 %v784
        %862 = vmatpush.bf16.msra.mxu0 %v781
        %863 = vmatmul.bf16.gmra.mxu0 %v658
        %v864 = vpop.f32.mrf.mxu0
        %v865 = vadd.f32 %v695, %v864
        %v866 = vpop.f32.mrf.mxu0
        %v867 = vadd.f32 %v695, %v866
        %868 = vdwg.mxu0
        %871 = vrot.lane.b32.xlu0 %v837, 96
        %v872 = vpop.permute.xlu0 %871
        %873 = vrot.lane.b32.xlu0 %v839, 96
        %v874 = vpop.permute.xlu0 %873
        %877 = vrot.lane.b32.xlu0 %v837, 64
        %v878 = vpop.permute.xlu0 %877
        %879 = vrot.lane.b32.xlu0 %v839, 64
        %v880 = vpop.permute.xlu0 %879
        %883 = vrot.lane.b32.xlu0 %v837, 32
        %v884 = vpop.permute.xlu0 %883
        %885 = vrot.lane.b32.xlu0 %v839, 32
        %v886 = vpop.permute.xlu0 %885
        %v889 = vpack.c.bf16 %v837, %v837
        %v890 = vpack.c.bf16 %v839, %v839
        %v891 = vpack.c.bf16 %v872, %v872
        %v892 = vpack.c.bf16 %v874, %v874
        %v893 = vpack.c.bf16 %v878, %v878
        %v894 = vpack.c.bf16 %v880, %v880
        %v895 = vpack.c.bf16 %v884, %v884
        %v896 = vpack.c.bf16 %v886, %v886
        %899 = vrot.lane.b32.xlu0 %v851, 96
        %v900 = vpop.permute.xlu0 %899
        %901 = vrot.lane.b32.xlu0 %v853, 96
        %v902 = vpop.permute.xlu0 %901
        %905 = vrot.lane.b32.xlu0 %v851, 64
        %v906 = vpop.permute.xlu0 %905
        %907 = vrot.lane.b32.xlu0 %v853, 64
        %v908 = vpop.permute.xlu0 %907
        %911 = vrot.lane.b32.xlu0 %v851, 32
        %v912 = vpop.permute.xlu0 %911
        %913 = vrot.lane.b32.xlu0 %v853, 32
        %v914 = vpop.permute.xlu0 %913
        %v917 = vpack.c.bf16 %v851, %v851
        %v918 = vpack.c.bf16 %v853, %v853
        %v919 = vpack.c.bf16 %v900, %v900
        %v920 = vpack.c.bf16 %v902, %v902
        %v921 = vpack.c.bf16 %v906, %v906
        %v922 = vpack.c.bf16 %v908, %v908
        %v923 = vpack.c.bf16 %v912, %v912
        %v924 = vpack.c.bf16 %v914, %v914
        %927 = vrot.lane.b32.xlu0 %v865, 96
        %v928 = vpop.permute.xlu0 %927
        %929 = vrot.lane.b32.xlu0 %v867, 96
        %v930 = vpop.permute.xlu0 %929
        %933 = vrot.lane.b32.xlu0 %v865, 64
        %v934 = vpop.permute.xlu0 %933
        %935 = vrot.lane.b32.xlu0 %v867, 64
        %v936 = vpop.permute.xlu0 %935
        %939 = vrot.lane.b32.xlu0 %v865, 32
        %v940 = vpop.permute.xlu0 %939
        %941 = vrot.lane.b32.xlu0 %v867, 32
        %v942 = vpop.permute.xlu0 %941
        %v945 = vpack.c.bf16 %v865, %v865
        %v946 = vpack.c.bf16 %v867, %v867
        %v947 = vpack.c.bf16 %v928, %v928
        %v948 = vpack.c.bf16 %v930, %v930
        %v949 = vpack.c.bf16 %v934, %v934
        %v950 = vpack.c.bf16 %v936, %v936
        %v951 = vpack.c.bf16 %v940, %v940
        %v952 = vpack.c.bf16 %v942, %v942
        %v953 = vld [vmem:[%s586] sm:$0x1]
        %v954 = vld [vmem:[%s586 + $0x1] sm:$0x1]
        %v957 = vperm.slane %v953, 0
        %v958 = vperm.slane %v954, 0
        %vm961 = vcmask 261120
        %v963 = vsel %vm961, %v889, 0
        %v966 = vsel %vm961, %v917, 0
        %968 = vmatpush.bf16.xpose.msra.mxu0 0
        %969 = vmatpush.bf16.xpose.msra.mxu0 0
        %970 = vmatpush.bf16.xpose.msra.mxu0 0
        %971 = vmatpush.bf16.xpose.msra.mxu0 0
        %972 = vmatpush.bf16.xpose.msra.mxu0 0
        %973 = vmatpush.bf16.xpose.msra.mxu0 0
        %974 = vmatpush.bf16.xpose.msra.mxu0 0
        %975 = vmatpush.bf16.xpose.msra.mxu0 %v966
        %976 = vmatmul.bf16.gmra.mxu0 %v963
        %v977 = vpop.f32.mrf.mxu0
        %v978 = vadd.f32 %v957, %v977
        %v979 = vpop.f32.mrf.mxu0
        %980 = vdwg.mxu0
        %v982 = vsel %vm961, %v890, 0
        %v985 = vsel %vm961, %v918, 0
        %987 = vmatpush.bf16.xpose.msra.mxu0 0
        %988 = vmatpush.bf16.xpose.msra.mxu0 0
        %989 = vmatpush.bf16.xpose.msra.mxu0 0
        %990 = vmatpush.bf16.xpose.msra.mxu0 0
        %991 = vmatpush.bf16.xpose.msra.mxu0 0
        %992 = vmatpush.bf16.xpose.msra.mxu0 0
        %993 = vmatpush.bf16.xpose.msra.mxu0 0
        %994 = vmatpush.bf16.xpose.msra.mxu0 %v985
        %995 = vmatmul.bf16.gmra.mxu0 %v982
        %v996 = vpop.f32.mrf.mxu0
        %v997 = vadd.f32 %v958, %v996
        %v998 = vpop.f32.mrf.mxu0
        %999 = vdwg.mxu0
        %v1001 = vsel %vm961, %v891, 0
        %v1004 = vsel %vm961, %v919, 0
        %1006 = vmatpush.bf16.xpose.msra.mxu0 0
        %1007 = vmatpush.bf16.xpose.msra.mxu0 0
        %1008 = vmatpush.bf16.xpose.msra.mxu0 0
        %1009 = vmatpush.bf16.xpose.msra.mxu0 0
        %1010 = vmatpush.bf16.xpose.msra.mxu0 0
        %1011 = vmatpush.bf16.xpose.msra.mxu0 0
        %1012 = vmatpush.bf16.xpose.msra.mxu0 0
        %1013 = vmatpush.bf16.xpose.msra.mxu0 %v1004
        %1014 = vmatmul.bf16.gmra.mxu0 %v1001
        %v1015 = vpop.f32.mrf.mxu0
        %v1016 = vadd.f32 %v957, %v1015
        %v1017 = vpop.f32.mrf.mxu0
        %1018 = vdwg.mxu0
        %v1020 = vsel %vm961, %v892, 0
        %v1023 = vsel %vm961, %v920, 0
        %1025 = vmatpush.bf16.xpose.msra.mxu0 0
        %1026 = vmatpush.bf16.xpose.msra.mxu0 0
        %1027 = vmatpush.bf16.xpose.msra.mxu0 0
        %1028 = vmatpush.bf16.xpose.msra.mxu0 0
        %1029 = vmatpush.bf16.xpose.msra.mxu0 0
        %1030 = vmatpush.bf16.xpose.msra.mxu0 0
        %1031 = vmatpush.bf16.xpose.msra.mxu0 0
        %1032 = vmatpush.bf16.xpose.msra.mxu0 %v1023
        %1033 = vmatmul.bf16.gmra.mxu0 %v1020
        %v1034 = vpop.f32.mrf.mxu0
        %v1035 = vadd.f32 %v958, %v1034
        %v1036 = vpop.f32.mrf.mxu0
        %1037 = vdwg.mxu0
        %v1039 = vsel %vm961, %v893, 0
        %v1042 = vsel %vm961, %v921, 0
        %1044 = vmatpush.bf16.xpose.msra.mxu0 0
        %1045 = vmatpush.bf16.xpose.msra.mxu0 0
        %1046 = vmatpush.bf16.xpose.msra.mxu0 0
        %1047 = vmatpush.bf16.xpose.msra.mxu0 0
        %1048 = vmatpush.bf16.xpose.msra.mxu0 0
        %1049 = vmatpush.bf16.xpose.msra.mxu0 0
        %1050 = vmatpush.bf16.xpose.msra.mxu0 0
        %1051 = vmatpush.bf16.xpose.msra.mxu0 %v1042
        %1052 = vmatmul.bf16.gmra.mxu0 %v1039
        %v1053 = vpop.f32.mrf.mxu0
        %v1054 = vadd.f32 %v957, %v1053
        %v1055 = vpop.f32.mrf.mxu0
        %1056 = vdwg.mxu0
        %v1058 = vsel %vm961, %v894, 0
        %v1061 = vsel %vm961, %v922, 0
        %1063 = vmatpush.bf16.xpose.msra.mxu0 0
        %1064 = vmatpush.bf16.xpose.msra.mxu0 0
        %1065 = vmatpush.bf16.xpose.msra.mxu0 0
        %1066 = vmatpush.bf16.xpose.msra.mxu0 0
        %1067 = vmatpush.bf16.xpose.msra.mxu0 0
        %1068 = vmatpush.bf16.xpose.msra.mxu0 0
        %1069 = vmatpush.bf16.xpose.msra.mxu0 0
        %1070 = vmatpush.bf16.xpose.msra.mxu0 %v1061
        %1071 = vmatmul.bf16.gmra.mxu0 %v1058
        %v1072 = vpop.f32.mrf.mxu0
        %v1073 = vadd.f32 %v958, %v1072
        %v1074 = vpop.f32.mrf.mxu0
        %1075 = vdwg.mxu0
        %v1077 = vsel %vm961, %v895, 0
        %v1080 = vsel %vm961, %v923, 0
        %1082 = vmatpush.bf16.xpose.msra.mxu0 0
        %1083 = vmatpush.bf16.xpose.msra.mxu0 0
        %1084 = vmatpush.bf16.xpose.msra.mxu0 0
        %1085 = vmatpush.bf16.xpose.msra.mxu0 0
        %1086 = vmatpush.bf16.xpose.msra.mxu0 0
        %1087 = vmatpush.bf16.xpose.msra.mxu0 0
        %1088 = vmatpush.bf16.xpose.msra.mxu0 0
        %1089 = vmatpush.bf16.xpose.msra.mxu0 %v1080
        %1090 = vmatmul.bf16.gmra.mxu0 %v1077
        %v1091 = vpop.f32.mrf.mxu0
        %v1092 = vadd.f32 %v957, %v1091
        %v1093 = vpop.f32.mrf.mxu0
        %1094 = vdwg.mxu0
        %v1096 = vsel %vm961, %v896, 0
        %v1099 = vsel %vm961, %v924, 0
        %1101 = vmatpush.bf16.xpose.msra.mxu0 0
        %1102 = vmatpush.bf16.xpose.msra.mxu0 0
        %1103 = vmatpush.bf16.xpose.msra.mxu0 0
        %1104 = vmatpush.bf16.xpose.msra.mxu0 0
        %1105 = vmatpush.bf16.xpose.msra.mxu0 0
        %1106 = vmatpush.bf16.xpose.msra.mxu0 0
        %1107 = vmatpush.bf16.xpose.msra.mxu0 0
        %1108 = vmatpush.bf16.xpose.msra.mxu0 %v1099
        %1109 = vmatmul.bf16.gmra.mxu0 %v1096
        %v1110 = vpop.f32.mrf.mxu0
        %v1111 = vadd.f32 %v958, %v1110
        %v1112 = vpop.f32.mrf.mxu0
        %1113 = vdwg.mxu0
        %vm1114 = vcmask 64512
        %v1115 = vsel %vm1114, %v978, -inf
        %1116 = vmax.xlane.f32.xlu0 %v1115
        %v1117 = vpop.xlane.xlu0 %1116
        %v1118 = vsel %vm1114, %v997, -inf
        %1119 = vmax.xlane.f32.xlu0 %v1118
        %v1120 = vpop.xlane.xlu0 %1119
        %v1121 = vsel %vm1114, %v1016, -inf
        %1122 = vmax.xlane.f32.xlu0 %v1121
        %v1123 = vpop.xlane.xlu0 %1122
        %v1124 = vsel %vm1114, %v1035, -inf
        %1125 = vmax.xlane.f32.xlu0 %v1124
        %v1126 = vpop.xlane.xlu0 %1125
        %v1127 = vsel %vm1114, %v1054, -inf
        %1128 = vmax.xlane.f32.xlu0 %v1127
        %v1129 = vpop.xlane.xlu0 %1128
        %v1130 = vsel %vm1114, %v1073, -inf
        %1131 = vmax.xlane.f32.xlu0 %v1130
        %v1132 = vpop.xlane.xlu0 %1131
        %v1133 = vsel %vm1114, %v1092, -inf
        %1134 = vmax.xlane.f32.xlu0 %v1133
        %v1135 = vpop.xlane.xlu0 %1134
        %v1136 = vsel %vm1114, %v1111, -inf
        %1137 = vmax.xlane.f32.xlu0 %v1136
        %v1138 = vpop.xlane.xlu0 %1137
        %v1139 = vsub.f32 %v978, %v1117
        %v1140 = vsub.f32 %v997, %v1120
        %v1141 = vsub.f32 %v1016, %v1123
        %v1142 = vsub.f32 %v1035, %v1126
        %v1143 = vsub.f32 %v1054, %v1129
        %v1144 = vsub.f32 %v1073, %v1132
        %v1145 = vsub.f32 %v1092, %v1135
        %v1146 = vsub.f32 %v1111, %v1138
        %v1147 = vmul.f32 %v1139, 1.442695
        %v1148 = vpow.pop %v1147
        %v1149 = vmul.f32 %v1140, 1.442695
        %v1150 = vpow.pop %v1149
        %v1151 = vmul.f32 %v1141, 1.442695
        %v1152 = vpow.pop %v1151
        %v1153 = vmul.f32 %v1142, 1.442695
        %v1154 = vpow.pop %v1153
        %v1155 = vmul.f32 %v1143, 1.442695
        %v1156 = vpow.pop %v1155
        %v1157 = vmul.f32 %v1144, 1.442695
        %v1158 = vpow.pop %v1157
        %v1159 = vmul.f32 %v1145, 1.442695
        %v1160 = vpow.pop %v1159
        %v1161 = vmul.f32 %v1146, 1.442695
        %v1162 = vpow.pop %v1161
        %v1163 = vsel %vm1114, %v1148, 0.0
        %1164 = vadd.xlane.f32.xlu0 %v1163
        %v1165 = vpop.xlane.xlu0 %1164
        %v1166 = vsel %vm1114, %v1150, 0.0
        %1167 = vadd.xlane.f32.xlu0 %v1166
        %v1168 = vpop.xlane.xlu0 %1167
        %v1169 = vsel %vm1114, %v1152, 0.0
        %1170 = vadd.xlane.f32.xlu0 %v1169
        %v1171 = vpop.xlane.xlu0 %1170
        %v1172 = vsel %vm1114, %v1154, 0.0
        %1173 = vadd.xlane.f32.xlu0 %v1172
        %v1174 = vpop.xlane.xlu0 %1173
        %v1175 = vsel %vm1114, %v1156, 0.0
        %1176 = vadd.xlane.f32.xlu0 %v1175
        %v1177 = vpop.xlane.xlu0 %1176
        %v1178 = vsel %vm1114, %v1158, 0.0
        %1179 = vadd.xlane.f32.xlu0 %v1178
        %v1180 = vpop.xlane.xlu0 %1179
        %v1181 = vsel %vm1114, %v1160, 0.0
        %1182 = vadd.xlane.f32.xlu0 %v1181
        %v1183 = vpop.xlane.xlu0 %1182
        %v1184 = vsel %vm1114, %v1162, 0.0
        %1185 = vadd.xlane.f32.xlu0 %v1184
        %v1186 = vpop.xlane.xlu0 %1185
        %v1187 = vrcp.pop %v1165
        %v1188 = vrcp.pop %v1168
        %v1189 = vrcp.pop %v1171
        %v1190 = vrcp.pop %v1174
        %v1191 = vrcp.pop %v1177
        %v1192 = vrcp.pop %v1180
        %v1193 = vrcp.pop %v1183
        %v1194 = vrcp.pop %v1186
        %v1195 = vmul.f32 %v1148, %v1187
        %v1196 = vmul.f32 %v1150, %v1188
        %v1197 = vmul.f32 %v1152, %v1189
        %v1198 = vmul.f32 %v1154, %v1190
        %v1199 = vmul.f32 %v1156, %v1191
        %v1200 = vmul.f32 %v1158, %v1192
        %v1201 = vmul.f32 %v1160, %v1193
        %v1202 = vmul.f32 %v1162, %v1194
        %v1203 = vpack.c.bf16 %v1195, %v1195
        %v1204 = vpack.c.bf16 %v1196, %v1196
        %v1205 = vpack.c.bf16 %v1197, %v1197
        %v1206 = vpack.c.bf16 %v1198, %v1198
        %v1207 = vpack.c.bf16 %v1199, %v1199
        %v1208 = vpack.c.bf16 %v1200, %v1200
        %v1209 = vpack.c.bf16 %v1201, %v1201
        %v1210 = vpack.c.bf16 %v1202, %v1202
        %v1212 = vsel %vm1114, %v1203, 0
        %vm1214 = vcmask 1043456
        %v1216 = vsel %vm1214, %v945, 0
        %1218 = vmatpush.bf16.msra.mxu0 0
        %1219 = vmatpush.bf16.msra.mxu0 0
        %1220 = vmatpush.bf16.msra.mxu0 0
        %1221 = vmatpush.bf16.msra.mxu0 0
        %1222 = vmatpush.bf16.msra.mxu0 0
        %1223 = vmatpush.bf16.msra.mxu0 0
        %1224 = vmatpush.bf16.msra.mxu0 0
        %1225 = vmatpush.bf16.msra.mxu0 %v1216
        %1226 = vmatmul.bf16.gmra.mxu0 %v1212
        %v1227 = vpop.f32.mrf.mxu0
        %v1228 = vadd.f32 0.0, %v1227
        %v1229 = vpop.f32.mrf.mxu0
        %1230 = vdwg.mxu0
        %v1232 = vsel %vm1114, %v1204, 0
        %v1235 = vsel %vm1214, %v946, 0
        %1237 = vmatpush.bf16.msra.mxu0 0
        %1238 = vmatpush.bf16.msra.mxu0 0
        %1239 = vmatpush.bf16.msra.mxu0 0
        %1240 = vmatpush.bf16.msra.mxu0 0
        %1241 = vmatpush.bf16.msra.mxu0 0
        %1242 = vmatpush.bf16.msra.mxu0 0
        %1243 = vmatpush.bf16.msra.mxu0 0
        %1244 = vmatpush.bf16.msra.mxu0 %v1235
        %1245 = vmatmul.bf16.gmra.mxu0 %v1232
        %v1246 = vpop.f32.mrf.mxu0
        %v1247 = vadd.f32 0.0, %v1246
        %v1248 = vpop.f32.mrf.mxu0
        %1249 = vdwg.mxu0
        %v1251 = vsel %vm1114, %v1205, 0
        %v1254 = vsel %vm1214, %v947, 0
        %1256 = vmatpush.bf16.msra.mxu0 0
        %1257 = vmatpush.bf16.msra.mxu0 0
        %1258 = vmatpush.bf16.msra.mxu0 0
        %1259 = vmatpush.bf16.msra.mxu0 0
        %1260 = vmatpush.bf16.msra.mxu0 0
        %1261 = vmatpush.bf16.msra.mxu0 0
        %1262 = vmatpush.bf16.msra.mxu0 0
        %1263 = vmatpush.bf16.msra.mxu0 %v1254
        %1264 = vmatmul.bf16.gmra.mxu0 %v1251
        %v1265 = vpop.f32.mrf.mxu0
        %v1266 = vadd.f32 0.0, %v1265
        %v1267 = vpop.f32.mrf.mxu0
        %1268 = vdwg.mxu0
        %v1270 = vsel %vm1114, %v1206, 0
        %v1273 = vsel %vm1214, %v948, 0
        %1275 = vmatpush.bf16.msra.mxu0 0
        %1276 = vmatpush.bf16.msra.mxu0 0
        %1277 = vmatpush.bf16.msra.mxu0 0
        %1278 = vmatpush.bf16.msra.mxu0 0
        %1279 = vmatpush.bf16.msra.mxu0 0
        %1280 = vmatpush.bf16.msra.mxu0 0
        %1281 = vmatpush.bf16.msra.mxu0 0
        %1282 = vmatpush.bf16.msra.mxu0 %v1273
        %1283 = vmatmul.bf16.gmra.mxu0 %v1270
        %v1284 = vpop.f32.mrf.mxu0
        %v1285 = vadd.f32 0.0, %v1284
        %v1286 = vpop.f32.mrf.mxu0
        %1287 = vdwg.mxu0
        %v1289 = vsel %vm1114, %v1207, 0
        %v1292 = vsel %vm1214, %v949, 0
        %1294 = vmatpush.bf16.msra.mxu0 0
        %1295 = vmatpush.bf16.msra.mxu0 0
        %1296 = vmatpush.bf16.msra.mxu0 0
        %1297 = vmatpush.bf16.msra.mxu0 0
        %1298 = vmatpush.bf16.msra.mxu0 0
        %1299 = vmatpush.bf16.msra.mxu0 0
        %1300 = vmatpush.bf16.msra.mxu0 0
        %1301 = vmatpush.bf16.msra.mxu0 %v1292
        %1302 = vmatmul.bf16.gmra.mxu0 %v1289
        %v1303 = vpop.f32.mrf.mxu0
        %v1304 = vadd.f32 0.0, %v1303
        %v1305 = vpop.f32.mrf.mxu0
        %1306 = vdwg.mxu0
        %v1308 = vsel %vm1114, %v1208, 0
        %v1311 = vsel %vm1214, %v950, 0
        %1313 = vmatpush.bf16.msra.mxu0 0
        %1314 = vmatpush.bf16.msra.mxu0 0
        %1315 = vmatpush.bf16.msra.mxu0 0
        %1316 = vmatpush.bf16.msra.mxu0 0
        %1317 = vmatpush.bf16.msra.mxu0 0
        %1318 = vmatpush.bf16.msra.mxu0 0
        %1319 = vmatpush.bf16.msra.mxu0 0
        %1320 = vmatpush.bf16.msra.mxu0 %v1311
        %1321 = vmatmul.bf16.gmra.mxu0 %v1308
        %v1322 = vpop.f32.mrf.mxu0
        %v1323 = vadd.f32 0.0, %v1322
        %v1324 = vpop.f32.mrf.mxu0
        %1325 = vdwg.mxu0
        %v1327 = vsel %vm1114, %v1209, 0
        %v1330 = vsel %vm1214, %v951, 0
        %1332 = vmatpush.bf16.msra.mxu0 0
        %1333 = vmatpush.bf16.msra.mxu0 0
        %1334 = vmatpush.bf16.msra.mxu0 0
        %1335 = vmatpush.bf16.msra.mxu0 0
        %1336 = vmatpush.bf16.msra.mxu0 0
        %1337 = vmatpush.bf16.msra.mxu0 0
        %1338 = vmatpush.bf16.msra.mxu0 0
        %1339 = vmatpush.bf16.msra.mxu0 %v1330
        %1340 = vmatmul.bf16.gmra.mxu0 %v1327
        %v1341 = vpop.f32.mrf.mxu0
        %v1342 = vadd.f32 0.0, %v1341
        %v1343 = vpop.f32.mrf.mxu0
        %1344 = vdwg.mxu0
        %v1346 = vsel %vm1114, %v1210, 0
        %v1349 = vsel %vm1214, %v952, 0
        %1351 = vmatpush.bf16.msra.mxu0 0
        %1352 = vmatpush.bf16.msra.mxu0 0
        %1353 = vmatpush.bf16.msra.mxu0 0
        %1354 = vmatpush.bf16.msra.mxu0 0
        %1355 = vmatpush.bf16.msra.mxu0 0
        %1356 = vmatpush.bf16.msra.mxu0 0
        %1357 = vmatpush.bf16.msra.mxu0 0
        %1358 = vmatpush.bf16.msra.mxu0 %v1349
        %1359 = vmatmul.bf16.gmra.mxu0 %v1346
        %v1360 = vpop.f32.mrf.mxu0
        %v1361 = vadd.f32 0.0, %v1360
        %v1362 = vpop.f32.mrf.mxu0
        %1363 = vdwg.mxu0
        %1366 = vrot.lane.b32.xlu0 %v1266, 32
        %v1367 = vpop.permute.xlu0 %1366
        %1368 = vrot.lane.b32.xlu0 %v1285, 32
        %v1369 = vpop.permute.xlu0 %1368
        %1374 = vrot.lane.b32.xlu0 %v1304, 64
        %v1375 = vpop.permute.xlu0 %1374
        %1376 = vrot.lane.b32.xlu0 %v1323, 64
        %v1377 = vpop.permute.xlu0 %1376
        %1382 = vrot.lane.b32.xlu0 %v1342, 96
        %v1383 = vpop.permute.xlu0 %1382
        %1384 = vrot.lane.b32.xlu0 %v1361, 96
        %v1385 = vpop.permute.xlu0 %1384
        %v1388 = vsel %vm961, %v1228, %v1367
        %v1389 = vsel %vm961, %v1247, %v1369
        %vm1390 = vcmask 523264
        %v1391 = vsel %vm1390, %v1388, %v1375
        %v1392 = vsel %vm1390, %v1389, %v1377
        %vm1393 = vcmask 785408
        %v1394 = vsel %vm1393, %v1391, %v1383
        %v1395 = vsel %vm1393, %v1392, %v1385
        %v1396 = vpack.c.bf16 %v1395, %v1394
        %v1397 = vld [vmem:[%s6] sm:$0xf]
        %v1398 = vld [vmem:[%s6 + $0x4] sm:$0xf]
        %v1399 = vld [vmem:[%s6 + $0x8] sm:$0xf]
        %v1400 = vld [vmem:[%s6 + $0xc] sm:$0xf]
        %v1401 = vld [vmem:[%s6 + $0x10] sm:$0xf]
        %v1402 = vld [vmem:[%s6 + $0x14] sm:$0xf]
        %v1403 = vld [vmem:[%s6 + $0x18] sm:$0xf]
        %v1404 = vld [vmem:[%s6 + $0x1c] sm:$0xf]
        %v1405 = vld [vmem:[%s6 + $0x20] sm:$0xf]
        %v1406 = vld [vmem:[%s6 + $0x24] sm:$0xf]
        %v1407 = vld [vmem:[%s6 + $0x28] sm:$0xf]
        %v1408 = vld [vmem:[%s6 + $0x2c] sm:$0xf]
        %v1409 = vld [vmem:[%s6 + $0x30] sm:$0xf]
        %v1410 = vld [vmem:[%s6 + $0x34] sm:$0xf]
        %v1411 = vld [vmem:[%s6 + $0x38] sm:$0xf]
        %v1412 = vld [vmem:[%s6 + $0x3c] sm:$0xf]
        %v1413 = vld [vmem:[%s7] sm:$0x1]
        %v1415 = vperm.slane %v1413, 0
        %v1433 = vunpack.c.l.b16 %v1397
        %v1434 = vunpack.c.l.b16 %v1398
        %v1435 = vunpack.c.l.b16 %v1399
        %v1436 = vunpack.c.l.b16 %v1400
        %v1437 = vunpack.c.l.b16 %v1401
        %v1438 = vunpack.c.l.b16 %v1402
        %v1439 = vunpack.c.l.b16 %v1403
        %v1440 = vunpack.c.l.b16 %v1404
        %v1441 = vunpack.c.l.b16 %v1405
        %v1442 = vunpack.c.l.b16 %v1406
        %v1443 = vunpack.c.l.b16 %v1407
        %v1444 = vunpack.c.l.b16 %v1408
        %v1445 = vunpack.c.l.b16 %v1409
        %v1446 = vunpack.c.l.b16 %v1410
        %v1447 = vunpack.c.l.b16 %v1411
        %v1448 = vunpack.c.l.b16 %v1412
        %v1449 = vpack.c.b16 %v1434, %v1433
        %v1450 = vpack.c.b16 %v1436, %v1435
        %v1451 = vpack.c.b16 %v1438, %v1437
        %v1452 = vpack.c.b16 %v1440, %v1439
        %v1453 = vpack.c.b16 %v1442, %v1441
        %v1454 = vpack.c.b16 %v1444, %v1443
        %v1455 = vpack.c.b16 %v1446, %v1445
        %v1456 = vpack.c.b16 %v1448, %v1447
        %1465 = vmatpush.bf16.msra.mxu0 %v1456
        %1466 = vmatpush.bf16.msra.mxu0 %v1455
        %1467 = vmatpush.bf16.msra.mxu0 %v1454
        %1468 = vmatpush.bf16.msra.mxu0 %v1453
        %1469 = vmatpush.bf16.msra.mxu0 %v1452
        %1470 = vmatpush.bf16.msra.mxu0 %v1451
        %1471 = vmatpush.bf16.msra.mxu0 %v1450
        %1472 = vmatpush.bf16.msra.mxu0 %v1449
        %1473 = vmatmul.bf16.gmra.mxu0 %v1396
        %v1474 = vpop.f32.mrf.mxu0
        %v1475 = vadd.f32 %v1415, %v1474
        %v1476 = vpop.f32.mrf.mxu0
        %v1477 = vadd.f32 %v1415, %v1476
        %1478 = vdwg.mxu0
        %v1479 = vadd.f32 %v597, %v1475
        %v1480 = vadd.f32 %v598, %v1477
        %v1481 = vld [vmem:[%s8] sm:$0x1]
        %v1482 = vld [vmem:[%s9] sm:$0x1]
        %1483 = vadd.xlane.f32.xlu0 %v1479
        %v1484 = vpop.xlane.xlu0 %1483
        %1485 = vadd.xlane.f32.xlu0 %v1480
        %v1486 = vpop.xlane.xlu0 %1485
        %v1487 = vmul.f32 %v1484, %v611
        %v1488 = vmul.f32 %v1486, %v611
        %v1489 = vsub.f32 %v1479, %v1487
        %v1490 = vsub.f32 %v1480, %v1488
        %v1491 = vmul.f32 %v1489, %v1489
        %v1492 = vmul.f32 %v1490, %v1490
        %1493 = vadd.xlane.f32.xlu0 %v1491
        %v1494 = vpop.xlane.xlu0 %1493
        %1495 = vadd.xlane.f32.xlu0 %v1492
        %v1496 = vpop.xlane.xlu0 %1495
        %v1497 = vmul.f32 %v1494, %v611
        %v1498 = vmul.f32 %v1496, %v611
        %v1499 = vadd.f32 %v1497, 1e-06
        %v1500 = vadd.f32 %v1498, 1e-06
        %v1501 = vrsqrt.pop %v1499
        %v1502 = vmul.f32 %v1501, %v1499
        %v1503 = vmul.f32 %v1502, %v1501
        %v1504 = vmul.f32 0.5, %v1503
        %v1505 = vsub.f32 1.5, %v1504
        %v1506 = vmul.f32 %v1501, %v1505
        %vm1507 = vweird.f32 %v1499
        %vm1508 = vweird.f32 %v1501
        %vm1509 = vmor %vm1507, %vm1508
        %v1510 = vsel %vm1509, %v1501, %v1506
        %v1511 = vrsqrt.pop %v1500
        %v1512 = vmul.f32 %v1511, %v1500
        %v1513 = vmul.f32 %v1512, %v1511
        %v1514 = vmul.f32 0.5, %v1513
        %v1515 = vsub.f32 1.5, %v1514
        %v1516 = vmul.f32 %v1511, %v1515
        %vm1517 = vweird.f32 %v1500
        %vm1518 = vweird.f32 %v1511
        %vm1519 = vmor %vm1517, %vm1518
        %v1520 = vsel %vm1519, %v1511, %v1516
        %v1521 = vmul.f32 %v1489, %v1510
        %v1522 = vmul.f32 %v1490, %v1520
        %v1524 = vperm.slane %v1481, 0
        %v1526 = vmul.f32 %v1521, %v1524
        %v1527 = vmul.f32 %v1522, %v1524
        %v1529 = vperm.slane %v1482, 0
        %v1531 = vadd.f32 %v1526, %v1529
        %v1532 = vadd.f32 %v1527, %v1529
        %v1533 = vpack.c.bf16 %v1532, %v1531
        %v1534 = vld [vmem:[#allocation4] sm:$0xff]
        %v1535 = vld [vmem:[#allocation4 + $0x8] sm:$0xff]
        %v1536 = vld [vmem:[#allocation4 + $0x10] sm:$0xff]
        %v1537 = vld [vmem:[#allocation4 + $0x18] sm:$0xff]
        %v1538 = vld [vmem:[#allocation4 + $0x20] sm:$0xff]
        %v1539 = vld [vmem:[#allocation4 + $0x28] sm:$0xff]
        %v1540 = vld [vmem:[#allocation4 + $0x30] sm:$0xff]
        %v1541 = vld [vmem:[#allocation4 + $0x38] sm:$0xff]
        %v1542 = vld [vmem:[#allocation4 + $0x40] sm:$0xff]
        %v1543 = vld [vmem:[#allocation4 + $0x48] sm:$0xff]
        %v1544 = vld [vmem:[#allocation4 + $0x50] sm:$0xff]
        %v1545 = vld [vmem:[#allocation4 + $0x58] sm:$0xff]
        %v1546 = vld [vmem:[#allocation4 + $0x60] sm:$0xff]
        %v1547 = vld [vmem:[#allocation4 + $0x68] sm:$0xff]
        %v1548 = vld [vmem:[#allocation4 + $0x70] sm:$0xff]
        %v1549 = vld [vmem:[#allocation4 + $0x78] sm:$0xff]
        %v1550 = vld [vmem:[%s11] sm:$0x3]
        %v1552 = vperm.slane %v1550, 0
        %v1553 = vperm.slane %v1550, 1
        %v1572 = vunpack.c.l.b16 %v1534
        %v1573 = vunpack.c.h.b16 %v1534
        %v1574 = vunpack.c.l.b16 %v1535
        %v1575 = vunpack.c.h.b16 %v1535
        %v1576 = vunpack.c.l.b16 %v1536
        %v1577 = vunpack.c.h.b16 %v1536
        %v1578 = vunpack.c.l.b16 %v1537
        %v1579 = vunpack.c.h.b16 %v1537
        %v1580 = vunpack.c.l.b16 %v1538
        %v1581 = vunpack.c.h.b16 %v1538
        %v1582 = vunpack.c.l.b16 %v1539
        %v1583 = vunpack.c.h.b16 %v1539
        %v1584 = vunpack.c.l.b16 %v1540
        %v1585 = vunpack.c.h.b16 %v1540
        %v1586 = vunpack.c.l.b16 %v1541
        %v1587 = vunpack.c.h.b16 %v1541
        %v1588 = vunpack.c.l.b16 %v1542
        %v1589 = vunpack.c.h.b16 %v1542
        %v1590 = vunpack.c.l.b16 %v1543
        %v1591 = vunpack.c.h.b16 %v1543
        %v1592 = vunpack.c.l.b16 %v1544
        %v1593 = vunpack.c.h.b16 %v1544
        %v1594 = vunpack.c.l.b16 %v1545
        %v1595 = vunpack.c.h.b16 %v1545
        %v1596 = vunpack.c.l.b16 %v1546
        %v1597 = vunpack.c.h.b16 %v1546
        %v1598 = vunpack.c.l.b16 %v1547
        %v1599 = vunpack.c.h.b16 %v1547
        %v1600 = vunpack.c.l.b16 %v1548
        %v1601 = vunpack.c.h.b16 %v1548
        %v1602 = vunpack.c.l.b16 %v1549
        %v1603 = vunpack.c.h.b16 %v1549
        %v1604 = vpack.c.b16 %v1574, %v1572
        %v1605 = vpack.c.b16 %v1575, %v1573
        %v1606 = vpack.c.b16 %v1578, %v1576
        %v1607 = vpack.c.b16 %v1579, %v1577
        %v1608 = vpack.c.b16 %v1582, %v1580
        %v1609 = vpack.c.b16 %v1583, %v1581
        %v1610 = vpack.c.b16 %v1586, %v1584
        %v1611 = vpack.c.b16 %v1587, %v1585
        %v1612 = vpack.c.b16 %v1590, %v1588
        %v1613 = vpack.c.b16 %v1591, %v1589
        %v1614 = vpack.c.b16 %v1594, %v1592
        %v1615 = vpack.c.b16 %v1595, %v1593
        %v1616 = vpack.c.b16 %v1598, %v1596
        %v1617 = vpack.c.b16 %v1599, %v1597
        %v1618 = vpack.c.b16 %v1602, %v1600
        %v1619 = vpack.c.b16 %v1603, %v1601
        %1636 = vmatpush.bf16.msra.mxu0 %v1618
        %1637 = vmatpush.bf16.msra.mxu0 %v1616
        %1638 = vmatpush.bf16.msra.mxu0 %v1614
        %1639 = vmatpush.bf16.msra.mxu0 %v1612
        %1640 = vmatpush.bf16.msra.mxu0 %v1610
        %1641 = vmatpush.bf16.msra.mxu0 %v1608
        %1642 = vmatpush.bf16.msra.mxu0 %v1606
        %1643 = vmatpush.bf16.msra.mxu0 %v1604
        %1644 = vmatmul.bf16.gmra.mxu0 %v1533
        %v1645 = vpop.f32.mrf.mxu0
        %v1646 = vadd.f32 %v1552, %v1645
        %v1647 = vpop.f32.mrf.mxu0
        %v1648 = vadd.f32 %v1552, %v1647
        %1649 = vdwg.mxu0
        %1650 = vmatpush.bf16.msra.mxu0 %v1619
        %1651 = vmatpush.bf16.msra.mxu0 %v1617
        %1652 = vmatpush.bf16.msra.mxu0 %v1615
        %1653 = vmatpush.bf16.msra.mxu0 %v1613
        %1654 = vmatpush.bf16.msra.mxu0 %v1611
        %1655 = vmatpush.bf16.msra.mxu0 %v1609
        %1656 = vmatpush.bf16.msra.mxu0 %v1607
        %1657 = vmatpush.bf16.msra.mxu0 %v1605
        %1658 = vmatmul.bf16.gmra.mxu0 %v1533
        %v1659 = vpop.f32.mrf.mxu0
        %v1660 = vadd.f32 %v1553, %v1659
        %v1661 = vpop.f32.mrf.mxu0
        %v1662 = vadd.f32 %v1553, %v1661
        %1663 = vdwg.mxu0
        %v1664 = vmax.f32 %v1646, 0.0
        %v1665 = vmax.f32 %v1660, 0.0
        %v1666 = vmax.f32 %v1648, 0.0
        %v1667 = vmax.f32 %v1662, 0.0
        %v1668 = vpack.c.bf16 %v1666, %v1664
        %v1669 = vpack.c.bf16 %v1667, %v1665
        %v1670 = vld [vmem:[#allocation6] sm:$0xf]
        %v1671 = vld [vmem:[#allocation6 + $0x4] sm:$0xf]
        %v1672 = vld [vmem:[#allocation6 + $0x8] sm:$0xf]
        %v1673 = vld [vmem:[#allocation6 + $0xc] sm:$0xf]
        %v1674 = vld [vmem:[#allocation6 + $0x10] sm:$0xf]
        %v1675 = vld [vmem:[#allocation6 + $0x14] sm:$0xf]
        %v1676 = vld [vmem:[#allocation6 + $0x18] sm:$0xf]
        %v1677 = vld [vmem:[#allocation6 + $0x1c] sm:$0xf]
        %v1678 = vld [vmem:[#allocation6 + $0x20] sm:$0xf]
        %v1679 = vld [vmem:[#allocation6 + $0x24] sm:$0xf]
        %v1680 = vld [vmem:[#allocation6 + $0x28] sm:$0xf]
        %v1681 = vld [vmem:[#allocation6 + $0x2c] sm:$0xf]
        %v1682 = vld [vmem:[#allocation6 + $0x30] sm:$0xf]
        %v1683 = vld [vmem:[#allocation6 + $0x34] sm:$0xf]
        %v1684 = vld [vmem:[#allocation6 + $0x38] sm:$0xf]
        %v1685 = vld [vmem:[#allocation6 + $0x3c] sm:$0xf]
        %v1686 = vld [vmem:[#allocation6 + $0x40] sm:$0xf]
        %v1687 = vld [vmem:[#allocation6 + $0x44] sm:$0xf]
        %v1688 = vld [vmem:[#allocation6 + $0x48] sm:$0xf]
        %v1689 = vld [vmem:[#allocation6 + $0x4c] sm:$0xf]
        %v1690 = vld [vmem:[#allocation6 + $0x50] sm:$0xf]
        %v1691 = vld [vmem:[#allocation6 + $0x54] sm:$0xf]
        %v1692 = vld [vmem:[#allocation6 + $0x58] sm:$0xf]
        %v1693 = vld [vmem:[#allocation6 + $0x5c] sm:$0xf]
        %v1694 = vld [vmem:[#allocation6 + $0x60] sm:$0xf]
        %v1695 = vld [vmem:[#allocation6 + $0x64] sm:$0xf]
        %v1696 = vld [vmem:[#allocation6 + $0x68] sm:$0xf]
        %v1697 = vld [vmem:[#allocation6 + $0x6c] sm:$0xf]
        %v1698 = vld [vmem:[#allocation6 + $0x70] sm:$0xf]
        %v1699 = vld [vmem:[#allocation6 + $0x74] sm:$0xf]
        %v1700 = vld [vmem:[#allocation6 + $0x78] sm:$0xf]
        %v1701 = vld [vmem:[#allocation6 + $0x7c] sm:$0xf]
        %v1702 = vld [vmem:[%s13] sm:$0x1]
        %v1704 = vperm.slane %v1702, 0
        %v1738 = vunpack.c.l.b16 %v1670
        %v1739 = vunpack.c.l.b16 %v1671
        %v1740 = vunpack.c.l.b16 %v1672
        %v1741 = vunpack.c.l.b16 %v1673
        %v1742 = vunpack.c.l.b16 %v1674
        %v1743 = vunpack.c.l.b16 %v1675
        %v1744 = vunpack.c.l.b16 %v1676
        %v1745 = vunpack.c.l.b16 %v1677
        %v1746 = vunpack.c.l.b16 %v1678
        %v1747 = vunpack.c.l.b16 %v1679
        %v1748 = vunpack.c.l.b16 %v1680
        %v1749 = vunpack.c.l.b16 %v1681
        %v1750 = vunpack.c.l.b16 %v1682
        %v1751 = vunpack.c.l.b16 %v1683
        %v1752 = vunpack.c.l.b16 %v1684
        %v1753 = vunpack.c.l.b16 %v1685
        %v1754 = vunpack.c.l.b16 %v1686
        %v1755 = vunpack.c.l.b16 %v1687
        %v1756 = vunpack.c.l.b16 %v1688
        %v1757 = vunpack.c.l.b16 %v1689
        %v1758 = vunpack.c.l.b16 %v1690
        %v1759 = vunpack.c.l.b16 %v1691
        %v1760 = vunpack.c.l.b16 %v1692
        %v1761 = vunpack.c.l.b16 %v1693
        %v1762 = vunpack.c.l.b16 %v1694
        %v1763 = vunpack.c.l.b16 %v1695
        %v1764 = vunpack.c.l.b16 %v1696
        %v1765 = vunpack.c.l.b16 %v1697
        %v1766 = vunpack.c.l.b16 %v1698
        %v1767 = vunpack.c.l.b16 %v1699
        %v1768 = vunpack.c.l.b16 %v1700
        %v1769 = vunpack.c.l.b16 %v1701
        %v1770 = vpack.c.b16 %v1739, %v1738
        %v1771 = vpack.c.b16 %v1741, %v1740
        %v1772 = vpack.c.b16 %v1743, %v1742
        %v1773 = vpack.c.b16 %v1745, %v1744
        %v1774 = vpack.c.b16 %v1747, %v1746
        %v1775 = vpack.c.b16 %v1749, %v1748
        %v1776 = vpack.c.b16 %v1751, %v1750
        %v1777 = vpack.c.b16 %v1753, %v1752
        %v1778 = vpack.c.b16 %v1755, %v1754
        %v1779 = vpack.c.b16 %v1757, %v1756
        %v1780 = vpack.c.b16 %v1759, %v1758
        %v1781 = vpack.c.b16 %v1761, %v1760
        %v1782 = vpack.c.b16 %v1763, %v1762
        %v1783 = vpack.c.b16 %v1765, %v1764
        %v1784 = vpack.c.b16 %v1767, %v1766
        %v1785 = vpack.c.b16 %v1769, %v1768
        %1802 = vmatpush.bf16.msra.mxu0 %v1777
        %1803 = vmatpush.bf16.msra.mxu0 %v1776
        %1804 = vmatpush.bf16.msra.mxu0 %v1775
        %1805 = vmatpush.bf16.msra.mxu0 %v1774
        %1806 = vmatpush.bf16.msra.mxu0 %v1773
        %1807 = vmatpush.bf16.msra.mxu0 %v1772
        %1808 = vmatpush.bf16.msra.mxu0 %v1771
        %1809 = vmatpush.bf16.msra.mxu0 %v1770
        %1810 = vmatmul.bf16.gmra.mxu0 %v1668
        %v1811 = vpop.f32.mrf.mxu0
        %v1812 = vadd.f32 %v1704, %v1811
        %v1813 = vpop.f32.mrf.mxu0
        %v1814 = vadd.f32 %v1704, %v1813
        %1815 = vdwg.mxu0
        %1816 = vmatpush.bf16.msra.mxu0 %v1785
        %1817 = vmatpush.bf16.msra.mxu0 %v1784
        %1818 = vmatpush.bf16.msra.mxu0 %v1783
        %1819 = vmatpush.bf16.msra.mxu0 %v1782
        %1820 = vmatpush.bf16.msra.mxu0 %v1781
        %1821 = vmatpush.bf16.msra.mxu0 %v1780
        %1822 = vmatpush.bf16.msra.mxu0 %v1779
        %1823 = vmatpush.bf16.msra.mxu0 %v1778
        %1824 = vmatmul.bf16.gmra.mxu0 %v1669
        %v1825 = vpop.f32.mrf.mxu0
        %v1826 = vadd.f32 %v1812, %v1825
        %v1827 = vpop.f32.mrf.mxu0
        %v1828 = vadd.f32 %v1814, %v1827
        %1829 = vdwg.mxu0
        %v1830 = vadd.f32 %v1479, %v1826
        %v1831 = vadd.f32 %v1480, %v1828
        %v1832 = vpack.c.bf16 %v1830, %v1830
        %v1833 = vpack.c.bf16 %v1831, %v1831
        %1834 = vst [vmem:[%s592] sm:$0xf] %v1832
        %1835 = vst [vmem:[%s592 + $0x4] sm:$0xf] %v1833
        %s1836 = smul.u32 2, %s29
        %p1837 = scmp.lt.s32.totalorder %s1836, 3
        %s1838 = scalar_select %p1837, %s1836, 3
        %s1839 = smul.addr %s1838, 4
        %s1840 = scalar_lea.vmem %s16, %s1839
        // Predicated region
        $region97: #{transformer_encoder_forward.4} parent=83 // pred_check
          %p1841 = pneg %p393
        $region98: #{transformer_encoder_forward.4} parent=83 // pred_check_branch
          %1843 = sbr.rel (%p1841) target = $region100
        $region99: #{transformer_encoder_forward.4} parent=83 // pred_region
          %s1844 = smul.u32 2, %s29
        $region100: #{transformer_encoder_forward.4} parent=83 // pred_fallthru
          _
      $region84: #{transformer_encoder_forward.4} parent=5 // pred_fallthru
        _
      %p1845 = scmp.le.s32.totalorder 2, %s24
      // Predicated region
      $region101: #{transformer_encoder_forward.4} parent=5 // pred_check
        %p1846 = pneg %p1845
      $region102: #{transformer_encoder_forward.4} parent=5 // pred_check_branch
        %1848 = sbr.rel (%p1846) target = $region104
      $region103: #{transformer_encoder_forward.4} parent=5 // pred_region
        %s1849 = ssub.s32 %s24, 2
        // Predicated region
        $region105: #{transformer_encoder_forward.4} parent=103 // pred_check
          %p1850 = pneg %p399
        $region106: #{transformer_encoder_forward.4} parent=103 // pred_check_branch
          %1852 = sbr.rel (%p1850) target = $region108
        $region107: #{transformer_encoder_forward.4} parent=103 // pred_region
          %s1853 = smul.u32 2, %s30
          %p1854 = scmp.lt.s32.totalorder %s1853, 3
          %s1855 = scalar_select %p1854, %s1853, 3
          %s1856 = smul.addr %s1855, 4
          %s1857 = scalar_lea.vmem %s16, %s1856
        $region108: #{transformer_encoder_forward.4} parent=103 // pred_fallthru
          _
      $region104: #{transformer_encoder_forward.4} parent=5 // pred_fallthru
        _
    $region6: #{transformer_encoder_forward.4} parent=1 // loop_footer
      %s28 = sadd.s32 1, %s24
    $region7: #{transformer_encoder_forward.4} parent=1 // loop_footer_branch
      %23 = sbr.rel target = $region3
    $region8: #{transformer_encoder_forward.4} parent=1 // loop_exit
      _
    %1858 = vsyncpa [#allocation3], 1
    %s1859 = scalar_lea.sflag [#allocation3], 1
    %1860 = vsyncpa %s1859, 1
    %1861 = vsyncpa [#allocation5], 1

// kernel: transformer_encoder_forward.5
$region0: #{transformer_encoder_forward.5}
  #allocation0 [shape = 'u32[]', space=smem, size = 0x4, offset = 0x4, fixed_abs, tag = 'smem constant byte address 0x4 - core index']
  #allocation1 [shape = 'u32[72,128]{1,0:T(1,128)}', space=vmem, size = 0x9000, scoped, tag = 'internal scratch']
  %s0 = inlined_call_operand.vmem [shape: bf16[32,128], index: 0, kind: input, shape index: {}]
  %s1 = inlined_call_operand.vmem [shape: f32[4,1,8], index: 1, kind: input, shape index: {}]
  %s2 = inlined_call_operand.vmem [shape: f32[1,128], index: 2, kind: input, shape index: {}]
  %s3 = inlined_call_operand.vmem [shape: f32[1,128], index: 3, kind: input, shape index: {}]
  %s4 = inlined_call_operand.hbm [shape: bf16[128,384], index: 4, kind: input, shape index: {}]
  %s5 = inlined_call_operand.vmem [shape: f32[1,384], index: 5, kind: input, shape index: {}]
  %s6 = inlined_call_operand.hbm [shape: bf16[128,128], index: 6, kind: input, shape index: {}]
  %s7 = inlined_call_operand.vmem [shape: f32[1,128], index: 7, kind: input, shape index: {}]
  %s8 = inlined_call_operand.vmem [shape: f32[1,128], index: 8, kind: input, shape index: {}]
  %s9 = inlined_call_operand.vmem [shape: f32[1,128], index: 9, kind: input, shape index: {}]
  %s10 = inlined_call_operand.hbm [shape: bf16[128,256], index: 10, kind: input, shape index: {}]
  %s11 = inlined_call_operand.vmem [shape: f32[1,256], index: 11, kind: input, shape index: {}]
  %s12 = inlined_call_operand.hbm [shape: bf16[256,128], index: 12, kind: input, shape index: {}]
  %s13 = inlined_call_operand.vmem [shape: f32[1,128], index: 13, kind: input, shape index: {}]
  %s14 = inlined_call_operand.vmem [shape: f32[1,128], index: 14, kind: input, shape index: {}]
  %s15 = inlined_call_operand.vmem [shape: f32[1,128], index: 15, kind: input, shape index: {}]
  %s16 = inlined_call_operand.hbm [shape: f32[32,128], index: 16, kind: output, shape index: {}]
  %s17 = sld [smem:[#allocation0]]
  $region113: #{transformer_encoder_forward.5} parent=0
    _
  %s19 = ssub.s32 1, %s17
  %s20 = scalar_select 0, %s19, %s17
  $region1: #{transformer_encoder_forward.5} parent=0
    #allocation2 [shape = 'u8[98304]{0}', space=vmem, size = 0x18000, scoped, tag = 'input window, operand 4, single buffered']
    #allocation3 [shape = 's32[2]{0}', space=sflag, size = 0x8, scoped, tag = 'scoped memory for transformer_encoder_forward.5']
    #allocation4 [shape = 's32[2]{0}', space=sflag, size = 0x8, scoped, tag = 'scoped memory for transformer_encoder_forward.5']
    #allocation5 [shape = 'u8[32768]{0}', space=vmem, size = 0x8000, scoped, tag = 'input window, operand 6, single buffered']
    #allocation6 [shape = 's32[1]{0}', space=sflag, size = 0x4, scoped, tag = 'scoped memory for transformer_encoder_forward.5']
    #allocation7 [shape = 'u8[65536]{0}', space=vmem, size = 0x10000, scoped, tag = 'input window, operand 10, single buffered']
    #allocation8 [shape = 'u8[65536]{0}', space=vmem, size = 0x10000, scoped, tag = 'input window, operand 12, single buffered']
    #allocation9 [shape = 's32[1]{0}', space=sflag, size = 0x4, scoped, tag = 'scoped memory for transformer_encoder_forward.5']
    #allocation10 [shape = 'u8[16384]{0}', space=vmem, size = 0x4000, scoped, tag = 'output window, operand 0']
    %21 = vsyncpa [#allocation3], 0
    %22 = vsyncpa [#allocation6], 0
    %23 = vsyncpa [#allocation9], 0
    %24 = vsyncpa [#allocation4], 0
    %s25 = scalar_lea.sflag [#allocation4], 1
    %26 = vsyncpa %s25, 0
    loop: start=0, step=1, limit=4
    $region2: #{transformer_encoder_forward.5} parent=1 // loop_pre_header
      _
    $region3: #{transformer_encoder_forward.5} parent=1 // loop_header
      %s28 = sphi 0, %s32
      %p29 = scmp.ge.s32.totalorder %s28, 4
      %s38 = sphi 0, %s40
      %s41 = sphi 0, %s38
      %s42 = sphi 0, %s41
      %s58 = sphi 0, %s42
      %s64 = sphi 0, %s66
      %s67 = sphi 0, %s64
      %s68 = sphi 0, %s67
      %s84 = sphi 0, %s68
      %s88 = sphi 0, %s88
      %s90 = sphi 0, %s88
      %s91 = sphi 0, %s90
      %s105 = sphi 0, %s91
      %s109 = sphi 0, %s109
      %s111 = sphi 0, %s109
      %s112 = sphi 0, %s111
      %s126 = sphi 0, %s112
      %s130 = sphi 0, %s130
      %s132 = sphi 0, %s130
      %s133 = sphi 0, %s132
      %s147 = sphi 0, %s133
      %s151 = sphi 0, %s151
      %s153 = sphi 0, %s151
      %s154 = sphi 0, %s153
      %s168 = sphi 0, %s154
      %s172 = sphi 0, %s172
      %s174 = sphi 0, %s172
      %s175 = sphi 0, %s174
      %s189 = sphi 0, %s175
      %s193 = sphi 0, %s193
      %s195 = sphi 0, %s193
      %s196 = sphi 0, %s195
      %s210 = sphi 0, %s196
      %s214 = sphi 0, %s214
      %s216 = sphi 0, %s214
      %s217 = sphi 0, %s216
      %s231 = sphi 0, %s217
      %s235 = sphi 0, %s235
      %s237 = sphi 0, %s235
      %s238 = sphi 0, %s237
      %s252 = sphi 0, %s238
      %s256 = sphi 0, %s256
      %s258 = sphi 0, %s256
      %s259 = sphi 0, %s258
      %s273 = sphi 0, %s259
      %s277 = sphi 0, %s277
      %s279 = sphi 0, %s277
      %s280 = sphi 0, %s279
      %s294 = sphi 0, %s280
      %s298 = sphi 0, %s298
      %s300 = sphi 0, %s298
      %s301 = sphi 0, %s300
      %s315 = sphi 0, %s301
      %s319 = sphi 0, %s319
      %s321 = sphi 0, %s319
      %s322 = sphi 0, %s321
      %s336 = sphi 0, %s322
      %s340 = sphi 0, %s340
      %s342 = sphi 0, %s340
      %s343 = sphi 0, %s342
      %s357 = sphi 0, %s343
      %s361 = sphi 0, %s361
      %s363 = sphi 0, %s361
      %s364 = sphi 0, %s363
      %s378 = sphi 0, %s364
      %s384 = sphi 0, %s386
      %s387 = sphi 0, %s384
      %s388 = sphi 0, %s387
      %s404 = sphi 0, %s388
    $region4: #{transformer_encoder_forward.5} parent=1 // loop_header_branch
      %31 = sbr.rel (%p29) target = $region8
    $region5: #{transformer_encoder_forward.5} parent=1 // loop_body
      %s33 = ssub.s32 %s28, 1
      %s34 = ssub.s32 %s28, 2
      %s35 = sadd.s32 %s28, 1
      %s36 = ssub.s32 %s28, %s35
      %p37 = scmp.eq.s32.totalorder %s36, 0
      %s39 = sadd.s32 %s38, 1
      %s40 = scalar_select %p37, %s38, %s39
      %p43 = pneg %p37
      %p44 = scmp.eq.s32.totalorder %s28, 1
      %p45 = por %p43, %p44
      %p46 = scmp.ne.s32.totalorder %s38, %s41
      %p47 = scmp.eq.s32.totalorder %s28, 0
      %p48 = por %p46, %p47
      %p49 = scmp.ne.s32.totalorder %s38, %s41
      %p50 = scmp.eq.s32.totalorder %s33, 1
      %p51 = por %p49, %p50
      %p52 = scmp.ne.s32.totalorder %s41, %s42
      %p53 = scmp.eq.s32.totalorder %s33, 0
      %p54 = por %p52, %p53
      %p55 = scmp.ne.s32.totalorder %s41, %s42
      %p56 = scmp.eq.s32.totalorder %s34, 1
      %p57 = por %p55, %p56
      %p59 = scmp.ne.s32.totalorder %s42, %s58
      %p60 = scmp.eq.s32.totalorder %s34, 0
      %p61 = por %p59, %p60
      %s62 = ssub.s32 %s28, %s35
      %p63 = scmp.eq.s32.totalorder %s62, 0
      %s65 = sadd.s32 %s64, 1
      %s66 = scalar_select %p63, %s64, %s65
      %p69 = pneg %p63
      %p70 = scmp.eq.s32.totalorder %s28, 1
      %p71 = por %p69, %p70
      %p72 = scmp.ne.s32.totalorder %s64, %s67
      %p73 = scmp.eq.s32.totalorder %s28, 0
      %p74 = por %p72, %p73
      %p75 = scmp.ne.s32.totalorder %s64, %s67
      %p76 = scmp.eq.s32.totalorder %s33, 1
      %p77 = por %p75, %p76
      %p78 = scmp.ne.s32.totalorder %s67, %s68
      %p79 = scmp.eq.s32.totalorder %s33, 0
      %p80 = por %p78, %p79
      %p81 = scmp.ne.s32.totalorder %s67, %s68
      %p82 = scmp.eq.s32.totalorder %s34, 1
      %p83 = por %p81, %p82
      %p85 = scmp.ne.s32.totalorder %s68, %s84
      %p86 = scmp.eq.s32.totalorder %s34, 0
      %p87 = por %p85, %p86
      %s89 = sadd.s32 %s88, 1
      %p92 = scmp.eq.s32.totalorder %s28, 1
      %p93 = scmp.ne.s32.totalorder %s88, %s90
      %p94 = scmp.eq.s32.totalorder %s28, 0
      %p95 = por %p93, %p94
      %p96 = scmp.ne.s32.totalorder %s88, %s90
      %p97 = scmp.eq.s32.totalorder %s33, 1
      %p98 = por %p96, %p97
      %p99 = scmp.ne.s32.totalorder %s90, %s91
      %p100 = scmp.eq.s32.totalorder %s33, 0
      %p101 = por %p99, %p100
      %p102 = scmp.ne.s32.totalorder %s90, %s91
      %p103 = scmp.eq.s32.totalorder %s34, 1
      %p104 = por %p102, %p103
      %p106 = scmp.ne.s32.totalorder %s91, %s105
      %p107 = scmp.eq.s32.totalorder %s34, 0
      %p108 = por %p106, %p107
      %s110 = sadd.s32 %s109, 1
      %p113 = scmp.eq.s32.totalorder %s28, 1
      %p114 = scmp.ne.s32.totalorder %s109, %s111
      %p115 = scmp.eq.s32.totalorder %s28, 0
      %p116 = por %p114, %p115
      %p117 = scmp.ne.s32.totalorder %s109, %s111
      %p118 = scmp.eq.s32.totalorder %s33, 1
      %p119 = por %p117, %p118
      %p120 = scmp.ne.s32.totalorder %s111, %s112
      %p121 = scmp.eq.s32.totalorder %s33, 0
      %p122 = por %p120, %p121
      %p123 = scmp.ne.s32.totalorder %s111, %s112
      %p124 = scmp.eq.s32.totalorder %s34, 1
      %p125 = por %p123, %p124
      %p127 = scmp.ne.s32.totalorder %s112, %s126
      %p128 = scmp.eq.s32.totalorder %s34, 0
      %p129 = por %p127, %p128
      %s131 = sadd.s32 %s130, 1
      %p134 = scmp.eq.s32.totalorder %s28, 1
      %p135 = scmp.ne.s32.totalorder %s130, %s132
      %p136 = scmp.eq.s32.totalorder %s28, 0
      %p137 = por %p135, %p136
      %p138 = scmp.ne.s32.totalorder %s130, %s132
      %p139 = scmp.eq.s32.totalorder %s33, 1
      %p140 = por %p138, %p139
      %p141 = scmp.ne.s32.totalorder %s132, %s133
      %p142 = scmp.eq.s32.totalorder %s33, 0
      %p143 = por %p141, %p142
      %p144 = scmp.ne.s32.totalorder %s132, %s133
      %p145 = scmp.eq.s32.totalorder %s34, 1
      %p146 = por %p144, %p145
      %p148 = scmp.ne.s32.totalorder %s133, %s147
      %p149 = scmp.eq.s32.totalorder %s34, 0
      %p150 = por %p148, %p149
      %s152 = sadd.s32 %s151, 1
      %p155 = scmp.eq.s32.totalorder %s28, 1
      %p156 = scmp.ne.s32.totalorder %s151, %s153
      %p157 = scmp.eq.s32.totalorder %s28, 0
      %p158 = por %p156, %p157
      %p159 = scmp.ne.s32.totalorder %s151, %s153
      %p160 = scmp.eq.s32.totalorder %s33, 1
      %p161 = por %p159, %p160
      %p162 = scmp.ne.s32.totalorder %s153, %s154
      %p163 = scmp.eq.s32.totalorder %s33, 0
      %p164 = por %p162, %p163
      %p165 = scmp.ne.s32.totalorder %s153, %s154
      %p166 = scmp.eq.s32.totalorder %s34, 1
      %p167 = por %p165, %p166
      %p169 = scmp.ne.s32.totalorder %s154, %s168
      %p170 = scmp.eq.s32.totalorder %s34, 0
      %p171 = por %p169, %p170
      %s173 = sadd.s32 %s172, 1
      %p176 = scmp.eq.s32.totalorder %s28, 1
      %p177 = scmp.ne.s32.totalorder %s172, %s174
      %p178 = scmp.eq.s32.totalorder %s28, 0
      %p179 = por %p177, %p178
      %p180 = scmp.ne.s32.totalorder %s172, %s174
      %p181 = scmp.eq.s32.totalorder %s33, 1
      %p182 = por %p180, %p181
      %p183 = scmp.ne.s32.totalorder %s174, %s175
      %p184 = scmp.eq.s32.totalorder %s33, 0
      %p185 = por %p183, %p184
      %p186 = scmp.ne.s32.totalorder %s174, %s175
      %p187 = scmp.eq.s32.totalorder %s34, 1
      %p188 = por %p186, %p187
      %p190 = scmp.ne.s32.totalorder %s175, %s189
      %p191 = scmp.eq.s32.totalorder %s34, 0
      %p192 = por %p190, %p191
      %s194 = sadd.s32 %s193, 1
      %p197 = scmp.eq.s32.totalorder %s28, 1
      %p198 = scmp.ne.s32.totalorder %s193, %s195
      %p199 = scmp.eq.s32.totalorder %s28, 0
      %p200 = por %p198, %p199
      %p201 = scmp.ne.s32.totalorder %s193, %s195
      %p202 = scmp.eq.s32.totalorder %s33, 1
      %p203 = por %p201, %p202
      %p204 = scmp.ne.s32.totalorder %s195, %s196
      %p205 = scmp.eq.s32.totalorder %s33, 0
      %p206 = por %p204, %p205
      %p207 = scmp.ne.s32.totalorder %s195, %s196
      %p208 = scmp.eq.s32.totalorder %s34, 1
      %p209 = por %p207, %p208
      %p211 = scmp.ne.s32.totalorder %s196, %s210
      %p212 = scmp.eq.s32.totalorder %s34, 0
      %p213 = por %p211, %p212
      %s215 = sadd.s32 %s214, 1
      %p218 = scmp.eq.s32.totalorder %s28, 1
      %p219 = scmp.ne.s32.totalorder %s214, %s216
      %p220 = scmp.eq.s32.totalorder %s28, 0
      %p221 = por %p219, %p220
      %p222 = scmp.ne.s32.totalorder %s214, %s216
      %p223 = scmp.eq.s32.totalorder %s33, 1
      %p224 = por %p222, %p223
      %p225 = scmp.ne.s32.totalorder %s216, %s217
      %p226 = scmp.eq.s32.totalorder %s33, 0
      %p227 = por %p225, %p226
      %p228 = scmp.ne.s32.totalorder %s216, %s217
      %p229 = scmp.eq.s32.totalorder %s34, 1
      %p230 = por %p228, %p229
      %p232 = scmp.ne.s32.totalorder %s217, %s231
      %p233 = scmp.eq.s32.totalorder %s34, 0
      %p234 = por %p232, %p233
      %s236 = sadd.s32 %s235, 1
      %p239 = scmp.eq.s32.totalorder %s28, 1
      %p240 = scmp.ne.s32.totalorder %s235, %s237
      %p241 = scmp.eq.s32.totalorder %s28, 0
      %p242 = por %p240, %p241
      %p243 = scmp.ne.s32.totalorder %s235, %s237
      %p244 = scmp.eq.s32.totalorder %s33, 1
      %p245 = por %p243, %p244
      %p246 = scmp.ne.s32.totalorder %s237, %s238
      %p247 = scmp.eq.s32.totalorder %s33, 0
      %p248 = por %p246, %p247
      %p249 = scmp.ne.s32.totalorder %s237, %s238
      %p250 = scmp.eq.s32.totalorder %s34, 1
      %p251 = por %p249, %p250
      %p253 = scmp.ne.s32.totalorder %s238, %s252
      %p254 = scmp.eq.s32.totalorder %s34, 0
      %p255 = por %p253, %p254
      %s257 = sadd.s32 %s256, 1
      %p260 = scmp.eq.s32.totalorder %s28, 1
      %p261 = scmp.ne.s32.totalorder %s256, %s258
      %p262 = scmp.eq.s32.totalorder %s28, 0
      %p263 = por %p261, %p262
      %p264 = scmp.ne.s32.totalorder %s256, %s258
      %p265 = scmp.eq.s32.totalorder %s33, 1
      %p266 = por %p264, %p265
      %p267 = scmp.ne.s32.totalorder %s258, %s259
      %p268 = scmp.eq.s32.totalorder %s33, 0
      %p269 = por %p267, %p268
      %p270 = scmp.ne.s32.totalorder %s258, %s259
      %p271 = scmp.eq.s32.totalorder %s34, 1
      %p272 = por %p270, %p271
      %p274 = scmp.ne.s32.totalorder %s259, %s273
      %p275 = scmp.eq.s32.totalorder %s34, 0
      %p276 = por %p274, %p275
      %s278 = sadd.s32 %s277, 1
      %p281 = scmp.eq.s32.totalorder %s28, 1
      %p282 = scmp.ne.s32.totalorder %s277, %s279
      %p283 = scmp.eq.s32.totalorder %s28, 0
      %p284 = por %p282, %p283
      %p285 = scmp.ne.s32.totalorder %s277, %s279
      %p286 = scmp.eq.s32.totalorder %s33, 1
      %p287 = por %p285, %p286
      %p288 = scmp.ne.s32.totalorder %s279, %s280
      %p289 = scmp.eq.s32.totalorder %s33, 0
      %p290 = por %p288, %p289
      %p291 = scmp.ne.s32.totalorder %s279, %s280
      %p292 = scmp.eq.s32.totalorder %s34, 1
      %p293 = por %p291, %p292
      %p295 = scmp.ne.s32.totalorder %s280, %s294
      %p296 = scmp.eq.s32.totalorder %s34, 0
      %p297 = por %p295, %p296
      %s299 = sadd.s32 %s298, 1
      %p302 = scmp.eq.s32.totalorder %s28, 1
      %p303 = scmp.ne.s32.totalorder %s298, %s300
      %p304 = scmp.eq.s32.totalorder %s28, 0
      %p305 = por %p303, %p304
      %p306 = scmp.ne.s32.totalorder %s298, %s300
      %p307 = scmp.eq.s32.totalorder %s33, 1
      %p308 = por %p306, %p307
      %p309 = scmp.ne.s32.totalorder %s300, %s301
      %p310 = scmp.eq.s32.totalorder %s33, 0
      %p311 = por %p309, %p310
      %p312 = scmp.ne.s32.totalorder %s300, %s301
      %p313 = scmp.eq.s32.totalorder %s34, 1
      %p314 = por %p312, %p313
      %p316 = scmp.ne.s32.totalorder %s301, %s315
      %p317 = scmp.eq.s32.totalorder %s34, 0
      %p318 = por %p316, %p317
      %s320 = sadd.s32 %s319, 1
      %p323 = scmp.eq.s32.totalorder %s28, 1
      %p324 = scmp.ne.s32.totalorder %s319, %s321
      %p325 = scmp.eq.s32.totalorder %s28, 0
      %p326 = por %p324, %p325
      %p327 = scmp.ne.s32.totalorder %s319, %s321
      %p328 = scmp.eq.s32.totalorder %s33, 1
      %p329 = por %p327, %p328
      %p330 = scmp.ne.s32.totalorder %s321, %s322
      %p331 = scmp.eq.s32.totalorder %s33, 0
      %p332 = por %p330, %p331
      %p333 = scmp.ne.s32.totalorder %s321, %s322
      %p334 = scmp.eq.s32.totalorder %s34, 1
      %p335 = por %p333, %p334
      %p337 = scmp.ne.s32.totalorder %s322, %s336
      %p338 = scmp.eq.s32.totalorder %s34, 0
      %p339 = por %p337, %p338
      %s341 = sadd.s32 %s340, 1
      %p344 = scmp.eq.s32.totalorder %s28, 1
      %p345 = scmp.ne.s32.totalorder %s340, %s342
      %p346 = scmp.eq.s32.totalorder %s28, 0
      %p347 = por %p345, %p346
      %p348 = scmp.ne.s32.totalorder %s340, %s342
      %p349 = scmp.eq.s32.totalorder %s33, 1
      %p350 = por %p348, %p349
      %p351 = scmp.ne.s32.totalorder %s342, %s343
      %p352 = scmp.eq.s32.totalorder %s33, 0
      %p353 = por %p351, %p352
      %p354 = scmp.ne.s32.totalorder %s342, %s343
      %p355 = scmp.eq.s32.totalorder %s34, 1
      %p356 = por %p354, %p355
      %p358 = scmp.ne.s32.totalorder %s343, %s357
      %p359 = scmp.eq.s32.totalorder %s34, 0
      %p360 = por %p358, %p359
      %s362 = sadd.s32 %s361, 1
      %p365 = scmp.eq.s32.totalorder %s28, 1
      %p366 = scmp.ne.s32.totalorder %s361, %s363
      %p367 = scmp.eq.s32.totalorder %s28, 0
      %p368 = por %p366, %p367
      %p369 = scmp.ne.s32.totalorder %s361, %s363
      %p370 = scmp.eq.s32.totalorder %s33, 1
      %p371 = por %p369, %p370
      %p372 = scmp.ne.s32.totalorder %s363, %s364
      %p373 = scmp.eq.s32.totalorder %s33, 0
      %p374 = por %p372, %p373
      %p375 = scmp.ne.s32.totalorder %s363, %s364
      %p376 = scmp.eq.s32.totalorder %s34, 1
      %p377 = por %p375, %p376
      %p379 = scmp.ne.s32.totalorder %s364, %s378
      %p380 = scmp.eq.s32.totalorder %s34, 0
      %p381 = por %p379, %p380
      %s382 = ssub.s32 %s28, %s35
      %p383 = scmp.eq.s32.totalorder %s382, 0
      %s385 = sadd.s32 %s384, 1
      %s386 = scalar_select %p383, %s384, %s385
      %p389 = pneg %p383
      %p390 = scmp.eq.s32.totalorder %s28, 1
      %p391 = por %p389, %p390
      %p392 = scmp.ne.s32.totalorder %s384, %s387
      %p393 = scmp.eq.s32.totalorder %s28, 0
      %p394 = por %p392, %p393
      %p395 = scmp.ne.s32.totalorder %s384, %s387
      %p396 = scmp.eq.s32.totalorder %s33, 1
      %p397 = por %p395, %p396
      %p398 = scmp.ne.s32.totalorder %s387, %s388
      %p399 = scmp.eq.s32.totalorder %s33, 0
      %p400 = por %p398, %p399
      %p401 = scmp.ne.s32.totalorder %s387, %s388
      %p402 = scmp.eq.s32.totalorder %s34, 1
      %p403 = por %p401, %p402
      %p405 = scmp.ne.s32.totalorder %s388, %s404
      %p406 = scmp.eq.s32.totalorder %s34, 0
      %p407 = por %p405, %p406
      %p408 = scmp.le.s32.totalorder 1, %s28
      %p409 = scmp.lt.s32.totalorder %s28, 3
      %p410 = pnand %p408, %p409
      %p411 = pneg %p410
      // Predicated region
      $region9: #{transformer_encoder_forward.5} parent=5 // pred_check
        _
      $region10: #{transformer_encoder_forward.5} parent=5 // pred_check_branch
        %413 = sbr.rel (%p410) target = $region12
      $region11: #{transformer_encoder_forward.5} parent=5 // pred_region
        %s414 = ssub.s32 %s28, 1
        // Predicated region
        $region13: #{transformer_encoder_forward.5} parent=11 // pred_check
          %p415 = pneg %p101
        $region14: #{transformer_encoder_forward.5} parent=11 // pred_check_branch
          %417 = sbr.rel (%p415) target = $region16
        $region15: #{transformer_encoder_forward.5} parent=11 // pred_region
          _
        $region16: #{transformer_encoder_forward.5} parent=11 // pred_fallthru
          _
        // Predicated region
        $region17: #{transformer_encoder_forward.5} parent=11 // pred_check
          %p418 = pneg %p122
        $region18: #{transformer_encoder_forward.5} parent=11 // pred_check_branch
          %420 = sbr.rel (%p418) target = $region20
        $region19: #{transformer_encoder_forward.5} parent=11 // pred_region
          _
        $region20: #{transformer_encoder_forward.5} parent=11 // pred_fallthru
          _
        // Predicated region
        $region21: #{transformer_encoder_forward.5} parent=11 // pred_check
          %p421 = pneg %p143
        $region22: #{transformer_encoder_forward.5} parent=11 // pred_check_branch
          %423 = sbr.rel (%p421) target = $region24
        $region23: #{transformer_encoder_forward.5} parent=11 // pred_region
          %425 = vsyncadd [#allocation3], 0
          %s426 = sshll.u32 %s4, 4
          %s427 = int_to_ptr.hbm [resolvable:$true] %s426
          %s428 = sshll.u32 [#allocation2], 4
          %s429 = int_to_ptr.vmem [resolvable:$true] %s428
          %434 = dma.hbm_to_vmem [thread:$0]  %s427, 3072, %s429, [#allocation3], 192, 192, 12
        $region24: #{transformer_encoder_forward.5} parent=11 // pred_fallthru
          _
        // Predicated region
        $region25: #{transformer_encoder_forward.5} parent=11 // pred_check
          %p435 = pneg %p164
        $region26: #{transformer_encoder_forward.5} parent=11 // pred_check_branch
          %437 = sbr.rel (%p435) target = $region28
        $region27: #{transformer_encoder_forward.5} parent=11 // pred_region
          _
        $region28: #{transformer_encoder_forward.5} parent=11 // pred_fallthru
          _
        // Predicated region
        $region29: #{transformer_encoder_forward.5} parent=11 // pred_check
          %p438 = pneg %p185
        $region30: #{transformer_encoder_forward.5} parent=11 // pred_check_branch
          %440 = sbr.rel (%p438) target = $region32
        $region31: #{transformer_encoder_forward.5} parent=11 // pred_region
          %442 = vsyncadd [#allocation6], 0
          %s443 = sshll.u32 %s6, 4
          %s444 = int_to_ptr.hbm [resolvable:$true] %s443
          %s445 = sshll.u32 [#allocation5], 4
          %s446 = int_to_ptr.vmem [resolvable:$true] %s445
          %451 = dma.hbm_to_vmem [thread:$0]  %s444, 1024, %s446, [#allocation6], 64, 64, 4
        $region32: #{transformer_encoder_forward.5} parent=11 // pred_fallthru
          _
        // Predicated region
        $region33: #{transformer_encoder_forward.5} parent=11 // pred_check
          %p452 = pneg %p206
        $region34: #{transformer_encoder_forward.5} parent=11 // pred_check_branch
          %454 = sbr.rel (%p452) target = $region36
        $region35: #{transformer_encoder_forward.5} parent=11 // pred_region
          _
        $region36: #{transformer_encoder_forward.5} parent=11 // pred_fallthru
          _
        // Predicated region
        $region37: #{transformer_encoder_forward.5} parent=11 // pred_check
          %p455 = pneg %p227
        $region38: #{transformer_encoder_forward.5} parent=11 // pred_check_branch
          %457 = sbr.rel (%p455) target = $region40
        $region39: #{transformer_encoder_forward.5} parent=11 // pred_region
          _
        $region40: #{transformer_encoder_forward.5} parent=11 // pred_fallthru
          _
        // Predicated region
        $region41: #{transformer_encoder_forward.5} parent=11 // pred_check
          %p458 = pneg %p248
        $region42: #{transformer_encoder_forward.5} parent=11 // pred_check_branch
          %460 = sbr.rel (%p458) target = $region44
        $region43: #{transformer_encoder_forward.5} parent=11 // pred_region
          _
        $region44: #{transformer_encoder_forward.5} parent=11 // pred_fallthru
          _
        // Predicated region
        $region45: #{transformer_encoder_forward.5} parent=11 // pred_check
          %p461 = pneg %p269
        $region46: #{transformer_encoder_forward.5} parent=11 // pred_check_branch
          %463 = sbr.rel (%p461) target = $region48
        $region47: #{transformer_encoder_forward.5} parent=11 // pred_region
          %465 = vsyncadd [#allocation6], 0
          %s466 = sshll.u32 %s10, 4
          %s467 = int_to_ptr.hbm [resolvable:$true] %s466
          %s468 = sshll.u32 [#allocation7], 4
          %s469 = int_to_ptr.vmem [resolvable:$true] %s468
          %474 = dma.hbm_to_vmem [thread:$0]  %s467, 2048, %s469, [#allocation6], 128, 128, 8
        $region48: #{transformer_encoder_forward.5} parent=11 // pred_fallthru
          _
        // Predicated region
        $region49: #{transformer_encoder_forward.5} parent=11 // pred_check
          %p475 = pneg %p290
        $region50: #{transformer_encoder_forward.5} parent=11 // pred_check_branch
          %477 = sbr.rel (%p475) target = $region52
        $region51: #{transformer_encoder_forward.5} parent=11 // pred_region
          _
        $region52: #{transformer_encoder_forward.5} parent=11 // pred_fallthru
          _
        // Predicated region
        $region53: #{transformer_encoder_forward.5} parent=11 // pred_check
          %p478 = pneg %p311
        $region54: #{transformer_encoder_forward.5} parent=11 // pred_check_branch
          %480 = sbr.rel (%p478) target = $region56
        $region55: #{transformer_encoder_forward.5} parent=11 // pred_region
          %482 = vsyncadd [#allocation9], 0
          %s483 = sshll.u32 %s12, 4
          %s484 = int_to_ptr.hbm [resolvable:$true] %s483
          %s485 = sshll.u32 [#allocation8], 4
          %s486 = int_to_ptr.vmem [resolvable:$true] %s485
          %491 = dma.hbm_to_vmem [thread:$0]  %s484, 2048, %s486, [#allocation9], 64, 64, 4
        $region56: #{transformer_encoder_forward.5} parent=11 // pred_fallthru
          _
        // Predicated region
        $region57: #{transformer_encoder_forward.5} parent=11 // pred_check
          %p492 = pneg %p332
        $region58: #{transformer_encoder_forward.5} parent=11 // pred_check_branch
          %494 = sbr.rel (%p492) target = $region60
        $region59: #{transformer_encoder_forward.5} parent=11 // pred_region
          _
        $region60: #{transformer_encoder_forward.5} parent=11 // pred_fallthru
          _
        // Predicated region
        $region61: #{transformer_encoder_forward.5} parent=11 // pred_check
          %p495 = pneg %p353
        $region62: #{transformer_encoder_forward.5} parent=11 // pred_check_branch
          %497 = sbr.rel (%p495) target = $region64
        $region63: #{transformer_encoder_forward.5} parent=11 // pred_region
          _
        $region64: #{transformer_encoder_forward.5} parent=11 // pred_fallthru
          _
        // Predicated region
        $region65: #{transformer_encoder_forward.5} parent=11 // pred_check
          %p498 = pneg %p374
        $region66: #{transformer_encoder_forward.5} parent=11 // pred_check_branch
          %500 = sbr.rel (%p498) target = $region68
        $region67: #{transformer_encoder_forward.5} parent=11 // pred_region
          _
        $region68: #{transformer_encoder_forward.5} parent=11 // pred_fallthru
          _
      $region12: #{transformer_encoder_forward.5} parent=5 // pred_fallthru
        _
      %p501 = scmp.lt.s32.totalorder %s28, 2
      // Predicated region
      $region69: #{transformer_encoder_forward.5} parent=5 // pred_check
        %p502 = pneg %p501
      $region70: #{transformer_encoder_forward.5} parent=5 // pred_check_branch
        %504 = sbr.rel (%p502) target = $region72
      $region71: #{transformer_encoder_forward.5} parent=5 // pred_region
        // Predicated region
        $region73: #{transformer_encoder_forward.5} parent=71 // pred_check
          %p505 = pneg %p48
        $region74: #{transformer_encoder_forward.5} parent=71 // pred_check_branch
          %507 = sbr.rel (%p505) target = $region76
        $region75: #{transformer_encoder_forward.5} parent=71 // pred_region
          %s508 = smul.u32 2, %s28
          %p509 = scmp.lt.s32.totalorder %s508, 3
          %s510 = scalar_select %p509, %s508, 3
          %s511 = smul.addr %s510, 4
          %s512 = scalar_lea.vmem %s0, %s511
          %s513 = smul.u32 2, %s28
        $region76: #{transformer_encoder_forward.5} parent=71 // pred_fallthru
          _
        // Predicated region
        $region77: #{transformer_encoder_forward.5} parent=71 // pred_check
          %p514 = pneg %p74
        $region78: #{transformer_encoder_forward.5} parent=71 // pred_check_branch
          %516 = sbr.rel (%p514) target = $region80
        $region79: #{transformer_encoder_forward.5} parent=71 // pred_region
          %s517 = smul.u32 2, %s28
          %p518 = scmp.lt.s32.totalorder %s517, 3
          %s519 = scalar_select %p518, %s517, 3
          %s520 = scalar_lea.vmem %s1, %s519
          %s521 = smul.u32 2, %s28
        $region80: #{transformer_encoder_forward.5} parent=71 // pred_fallthru
          _
      $region72: #{transformer_encoder_forward.5} parent=5 // pred_fallthru
        _
      %p522 = scmp.le.s32.totalorder 1, %s28
      %p523 = scmp.lt.s32.totalorder %s28, 3
      %p524 = pnand %p522, %p523
      %p525 = pneg %p524
      // Predicated region
      $region81: #{transformer_encoder_forward.5} parent=5 // pred_check
        _
      $region82: #{transformer_encoder_forward.5} parent=5 // pred_check_branch
        %527 = sbr.rel (%p524) target = $region84
      $region83: #{transformer_encoder_forward.5} parent=5 // pred_region
        %s528 = ssub.s32 %s28, 1
        // Predicated region
        $region85: #{transformer_encoder_forward.5} parent=83 // pred_check
          %p529 = pneg %p143
        $region86: #{transformer_encoder_forward.5} parent=83 // pred_check_branch
          %531 = sbr.rel (%p529) target = $region88
        $region87: #{transformer_encoder_forward.5} parent=83 // pred_region
          %533 = dma.done [#allocation3], 3072
        $region88: #{transformer_encoder_forward.5} parent=83 // pred_fallthru
          _
        // Predicated region
        $region89: #{transformer_encoder_forward.5} parent=83 // pred_check
          %p534 = pneg %p185
        $region90: #{transformer_encoder_forward.5} parent=83 // pred_check_branch
          %536 = sbr.rel (%p534) target = $region92
        $region91: #{transformer_encoder_forward.5} parent=83 // pred_region
          %538 = dma.done [#allocation6], 1024
        $region92: #{transformer_encoder_forward.5} parent=83 // pred_fallthru
          _
        // Predicated region
        $region93: #{transformer_encoder_forward.5} parent=83 // pred_check
          %p539 = pneg %p269
        $region94: #{transformer_encoder_forward.5} parent=83 // pred_check_branch
          %541 = sbr.rel (%p539) target = $region96
        $region95: #{transformer_encoder_forward.5} parent=83 // pred_region
          %543 = dma.done [#allocation6], 2048
        $region96: #{transformer_encoder_forward.5} parent=83 // pred_fallthru
          _
        // Predicated region
        $region97: #{transformer_encoder_forward.5} parent=83 // pred_check
          %p544 = pneg %p311
        $region98: #{transformer_encoder_forward.5} parent=83 // pred_check_branch
          %546 = sbr.rel (%p544) target = $region100
        $region99: #{transformer_encoder_forward.5} parent=83 // pred_region
          %548 = dma.done [#allocation9], 2048
        $region100: #{transformer_encoder_forward.5} parent=83 // pred_fallthru
          _
        %s549 = smul.u32 2, %s33
        %p550 = scmp.lt.s32.totalorder %s549, 3
        %s551 = scalar_select %p550, %s549, 3
        %s552 = smul.addr %s551, 4
        %s553 = scalar_lea.vmem %s0, %s552
        %p554 = pneg %p54
        %p555 = pneg %p51
        %s556 = smul.u32 2, %s33
        %p557 = scmp.lt.s32.totalorder %s556, 3
        %s558 = scalar_select %p557, %s556, 3
        %s559 = scalar_lea.vmem %s1, %s558
        %p560 = pneg %p80
        %p561 = pneg %p77
        %p562 = pneg %p101
        %p563 = pneg %p98
        %p564 = pneg %p122
        %p565 = pneg %p119
        %p566 = pneg %p143
        %p567 = pneg %p140
        %p568 = pneg %p164
        %p569 = pneg %p161
        %p570 = pneg %p185
        %p571 = pneg %p182
        %p572 = pneg %p206
        %p573 = pneg %p203
        %p574 = pneg %p227
        %p575 = pneg %p224
        %p576 = pneg %p248
        %p577 = pneg %p245
        %p578 = pneg %p269
        %p579 = pneg %p266
        %p580 = pneg %p290
        %p581 = pneg %p287
        %p582 = pneg %p311
        %p583 = pneg %p308
        %p584 = pneg %p332
        %p585 = pneg %p329
        %p586 = pneg %p353
        %p587 = pneg %p350
        %p588 = pneg %p374
        %p589 = pneg %p371
        %p590 = pneg %p400
        %p591 = pneg %p397
        %s592 = sand.u32 %s387, 1
        %s593 = scalar_lea.sflag [#allocation4], %s592
        %s594 = sand.u32 %s387, 1
        %s595 = smul.addr %s594, 16
        %s596 = scalar_lea.vmem [#allocation10], %s595
        %s597 = smul.u32 2, %s33
        %p598 = scmp.lt.s32.totalorder %s597, 3
        %s599 = scalar_select %p598, %s597, 3
        %s600 = smul.addr %s599, 4
        %s601 = scalar_lea.vmem %s0, %s600
        %s602 = smul.u32 2, %s33
        %s603 = smul.u32 2, %s33
        %p604 = scmp.lt.s32.totalorder %s603, 3
        %s605 = scalar_select %p604, %s603, 3
        %s606 = scalar_lea.vmem %s1, %s605
        %s607 = smul.u32 2, %s33
        %s608 = smul.u32 2, %s33
        %v610 = vld [vmem:[%s601] sm:$0xf]
        %v611 = vld [vmem:[%s601 + $0x4] sm:$0xf]
        %v612 = vunpack.c.l.bf16 %v610
        %v613 = vunpack.c.l.bf16 %v611
        %v614 = vld [vmem:[%s2] sm:$0x1]
        %v615 = vld [vmem:[%s3] sm:$0x1]
        %616 = vadd.xlane.f32.xlu0 %v612
        %v617 = vpop.xlane.xlu0 %616
        %618 = vadd.xlane.f32.xlu0 %v613
        %v619 = vpop.xlane.xlu0 %618
        %v620 = vrcp.pop 128.0
        %v621 = vmul.f32 128.0, %v620
        %v622 = vsub.f32 1.0, %v621
        %v623 = vmul.f32 %v620, %v622
        %v624 = vadd.f32 %v620, %v623
        %vm625 = vweird.f32 %v620
        %v626 = vsel %vm625, %v620, %v624
        %v627 = vmul.f32 %v617, %v626
        %v628 = vmul.f32 %v619, %v626
        %v629 = vsub.f32 %v612, %v627
        %v630 = vsub.f32 %v613, %v628
        %v631 = vmul.f32 %v629, %v629
        %v632 = vmul.f32 %v630, %v630
        %633 = vadd.xlane.f32.xlu0 %v631
        %v634 = vpop.xlane.xlu0 %633
        %635 = vadd.xlane.f32.xlu0 %v632
        %v636 = vpop.xlane.xlu0 %635
        %v637 = vmul.f32 %v634, %v626
        %v638 = vmul.f32 %v636, %v626
        %v639 = vadd.f32 %v637, 1e-06
        %v640 = vadd.f32 %v638, 1e-06
        %v641 = vrsqrt.pop %v639
        %v642 = vmul.f32 %v641, %v639
        %v643 = vmul.f32 %v642, %v641
        %v644 = vmul.f32 0.5, %v643
        %v645 = vsub.f32 1.5, %v644
        %v646 = vmul.f32 %v641, %v645
        %vm647 = vweird.f32 %v639
        %vm648 = vweird.f32 %v641
        %vm649 = vmor %vm647, %vm648
        %v650 = vsel %vm649, %v641, %v646
        %v651 = vrsqrt.pop %v640
        %v652 = vmul.f32 %v651, %v640
        %v653 = vmul.f32 %v652, %v651
        %v654 = vmul.f32 0.5, %v653
        %v655 = vsub.f32 1.5, %v654
        %v656 = vmul.f32 %v651, %v655
        %vm657 = vweird.f32 %v640
        %vm658 = vweird.f32 %v651
        %vm659 = vmor %vm657, %vm658
        %v660 = vsel %vm659, %v651, %v656
        %v661 = vmul.f32 %v629, %v650
        %v662 = vmul.f32 %v630, %v660
        %v664 = vperm.slane %v614, 0
        %v666 = vmul.f32 %v661, %v664
        %v667 = vmul.f32 %v662, %v664
        %v669 = vperm.slane %v615, 0
        %v671 = vadd.f32 %v666, %v669
        %v672 = vadd.f32 %v667, %v669
        %v673 = vpack.c.bf16 %v672, %v671
        %v674 = vld [vmem:[#allocation2] sm:$0xff]
        %v675 = vld [vmem:[#allocation2 + $0x8] sm:$0xf]
        %v676 = vld [vmem:[#allocation2 + $0xc] sm:$0xff]
        %v677 = vld [vmem:[#allocation2 + $0x14] sm:$0xf]
        %v678 = vld [vmem:[#allocation2 + $0x18] sm:$0xff]
        %v679 = vld [vmem:[#allocation2 + $0x20] sm:$0xf]
        %v680 = vld [vmem:[#allocation2 + $0x24] sm:$0xff]
        %v681 = vld [vmem:[#allocation2 + $0x2c] sm:$0xf]
        %v682 = vld [vmem:[#allocation2 + $0x30] sm:$0xff]
        %v683 = vld [vmem:[#allocation2 + $0x38] sm:$0xf]
        %v684 = vld [vmem:[#allocation2 + $0x3c] sm:$0xff]
        %v685 = vld [vmem:[#allocation2 + $0x44] sm:$0xf]
        %v686 = vld [vmem:[#allocation2 + $0x48] sm:$0xff]
        %v687 = vld [vmem:[#allocation2 + $0x50] sm:$0xf]
        %v688 = vld [vmem:[#allocation2 + $0x54] sm:$0xff]
        %v689 = vld [vmem:[#allocation2 + $0x5c] sm:$0xf]
        %v690 = vld [vmem:[#allocation2 + $0x60] sm:$0xff]
        %v691 = vld [vmem:[#allocation2 + $0x68] sm:$0xf]
        %v692 = vld [vmem:[#allocation2 + $0x6c] sm:$0xff]
        %v693 = vld [vmem:[#allocation2 + $0x74] sm:$0xf]
        %v694 = vld [vmem:[#allocation2 + $0x78] sm:$0xff]
        %v695 = vld [vmem:[#allocation2 + $0x80] sm:$0xf]
        %v696 = vld [vmem:[#allocation2 + $0x84] sm:$0xff]
        %v697 = vld [vmem:[#allocation2 + $0x8c] sm:$0xf]
        %v698 = vld [vmem:[#allocation2 + $0x90] sm:$0xff]
        %v699 = vld [vmem:[#allocation2 + $0x98] sm:$0xf]
        %v700 = vld [vmem:[#allocation2 + $0x9c] sm:$0xff]
        %v701 = vld [vmem:[#allocation2 + $0xa4] sm:$0xf]
        %v702 = vld [vmem:[#allocation2 + $0xa8] sm:$0xff]
        %v703 = vld [vmem:[#allocation2 + $0xb0] sm:$0xf]
        %v704 = vld [vmem:[#allocation2 + $0xb4] sm:$0xff]
        %v705 = vld [vmem:[#allocation2 + $0xbc] sm:$0xf]
        %v706 = vld [vmem:[%s5] sm:$0x7]
        %v708 = vperm.slane %v706, 0
        %v709 = vperm.slane %v706, 1
        %v710 = vperm.slane %v706, 2
        %v746 = vunpack.c.l.b16 %v674
        %v747 = vunpack.c.h.b16 %v674
        %v748 = vunpack.c.l.b16 %v675
        %v749 = vunpack.c.l.b16 %v676
        %v750 = vunpack.c.h.b16 %v676
        %v751 = vunpack.c.l.b16 %v677
        %v752 = vunpack.c.l.b16 %v678
        %v753 = vunpack.c.h.b16 %v678
        %v754 = vunpack.c.l.b16 %v679
        %v755 = vunpack.c.l.b16 %v680
        %v756 = vunpack.c.h.b16 %v680
        %v757 = vunpack.c.l.b16 %v681
        %v758 = vunpack.c.l.b16 %v682
        %v759 = vunpack.c.h.b16 %v682
        %v760 = vunpack.c.l.b16 %v683
        %v761 = vunpack.c.l.b16 %v684
        %v762 = vunpack.c.h.b16 %v684
        %v763 = vunpack.c.l.b16 %v685
        %v764 = vunpack.c.l.b16 %v686
        %v765 = vunpack.c.h.b16 %v686
        %v766 = vunpack.c.l.b16 %v687
        %v767 = vunpack.c.l.b16 %v688
        %v768 = vunpack.c.h.b16 %v688
        %v769 = vunpack.c.l.b16 %v689
        %v770 = vunpack.c.l.b16 %v690
        %v771 = vunpack.c.h.b16 %v690
        %v772 = vunpack.c.l.b16 %v691
        %v773 = vunpack.c.l.b16 %v692
        %v774 = vunpack.c.h.b16 %v692
        %v775 = vunpack.c.l.b16 %v693
        %v776 = vunpack.c.l.b16 %v694
        %v777 = vunpack.c.h.b16 %v694
        %v778 = vunpack.c.l.b16 %v695
        %v779 = vunpack.c.l.b16 %v696
        %v780 = vunpack.c.h.b16 %v696
        %v781 = vunpack.c.l.b16 %v697
        %v782 = vunpack.c.l.b16 %v698
        %v783 = vunpack.c.h.b16 %v698
        %v784 = vunpack.c.l.b16 %v699
        %v785 = vunpack.c.l.b16 %v700
        %v786 = vunpack.c.h.b16 %v700
        %v787 = vunpack.c.l.b16 %v701
        %v788 = vunpack.c.l.b16 %v702
        %v789 = vunpack.c.h.b16 %v702
        %v790 = vunpack.c.l.b16 %v703
        %v791 = vunpack.c.l.b16 %v704
        %v792 = vunpack.c.h.b16 %v704
        %v793 = vunpack.c.l.b16 %v705
        %v794 = vpack.c.b16 %v749, %v746
        %v795 = vpack.c.b16 %v750, %v747
        %v796 = vpack.c.b16 %v751, %v748
        %v797 = vpack.c.b16 %v755, %v752
        %v798 = vpack.c.b16 %v756, %v753
        %v799 = vpack.c.b16 %v757, %v754
        %v800 = vpack.c.b16 %v761, %v758
        %v801 = vpack.c.b16 %v762, %v759
        %v802 = vpack.c.b16 %v763, %v760
        %v803 = vpack.c.b16 %v767, %v764
        %v804 = vpack.c.b16 %v768, %v765
        %v805 = vpack.c.b16 %v769, %v766
        %v806 = vpack.c.b16 %v773, %v770
        %v807 = vpack.c.b16 %v774, %v771
        %v808 = vpack.c.b16 %v775, %v772
        %v809 = vpack.c.b16 %v779, %v776
        %v810 = vpack.c.b16 %v780, %v777
        %v811 = vpack.c.b16 %v781, %v778
        %v812 = vpack.c.b16 %v785, %v782
        %v813 = vpack.c.b16 %v786, %v783
        %v814 = vpack.c.b16 %v787, %v784
        %v815 = vpack.c.b16 %v791, %v788
        %v816 = vpack.c.b16 %v792, %v789
        %v817 = vpack.c.b16 %v793, %v790
        %842 = vmatpush.bf16.msra.mxu0 %v815
        %843 = vmatpush.bf16.msra.mxu0 %v812
        %844 = vmatpush.bf16.msra.mxu0 %v809
        %845 = vmatpush.bf16.msra.mxu0 %v806
        %846 = vmatpush.bf16.msra.mxu0 %v803
        %847 = vmatpush.bf16.msra.mxu0 %v800
        %848 = vmatpush.bf16.msra.mxu0 %v797
        %849 = vmatpush.bf16.msra.mxu0 %v794
        %850 = vmatmul.bf16.gmra.mxu0 %v673
        %v851 = vpop.f32.mrf.mxu0
        %v852 = vadd.f32 %v708, %v851
        %v853 = vpop.f32.mrf.mxu0
        %v854 = vadd.f32 %v708, %v853
        %855 = vdwg.mxu0
        %856 = vmatpush.bf16.msra.mxu0 %v816
        %857 = vmatpush.bf16.msra.mxu0 %v813
        %858 = vmatpush.bf16.msra.mxu0 %v810
        %859 = vmatpush.bf16.msra.mxu0 %v807
        %860 = vmatpush.bf16.msra.mxu0 %v804
        %861 = vmatpush.bf16.msra.mxu0 %v801
        %862 = vmatpush.bf16.msra.mxu0 %v798
        %863 = vmatpush.bf16.msra.mxu0 %v795
        %864 = vmatmul.bf16.gmra.mxu0 %v673
        %v865 = vpop.f32.mrf.mxu0
        %v866 = vadd.f32 %v709, %v865
        %v867 = vpop.f32.mrf.mxu0
        %v868 = vadd.f32 %v709, %v867
        %869 = vdwg.mxu0
        %870 = vmatpush.bf16.msra.mxu0 %v817
        %871 = vmatpush.bf16.msra.mxu0 %v814
        %872 = vmatpush.bf16.msra.mxu0 %v811
        %873 = vmatpush.bf16.msra.mxu0 %v808
        %874 = vmatpush.bf16.msra.mxu0 %v805
        %875 = vmatpush.bf16.msra.mxu0 %v802
        %876 = vmatpush.bf16.msra.mxu0 %v799
        %877 = vmatpush.bf16.msra.mxu0 %v796
        %878 = vmatmul.bf16.gmra.mxu0 %v673
        %v879 = vpop.f32.mrf.mxu0
        %v880 = vadd.f32 %v710, %v879
        %v881 = vpop.f32.mrf.mxu0
        %v882 = vadd.f32 %v710, %v881
        %883 = vdwg.mxu0
        %886 = vrot.lane.b32.xlu0 %v852, 96
        %v887 = vpop.permute.xlu0 %886
        %888 = vrot.lane.b32.xlu0 %v854, 96
        %v889 = vpop.permute.xlu0 %888
        %892 = vrot.lane.b32.xlu0 %v852, 64
        %v893 = vpop.permute.xlu0 %892
        %894 = vrot.lane.b32.xlu0 %v854, 64
        %v895 = vpop.permute.xlu0 %894
        %898 = vrot.lane.b32.xlu0 %v852, 32
        %v899 = vpop.permute.xlu0 %898
        %900 = vrot.lane.b32.xlu0 %v854, 32
        %v901 = vpop.permute.xlu0 %900
        %v904 = vpack.c.bf16 %v852, %v852
        %v905 = vpack.c.bf16 %v854, %v854
        %v906 = vpack.c.bf16 %v887, %v887
        %v907 = vpack.c.bf16 %v889, %v889
        %v908 = vpack.c.bf16 %v893, %v893
        %v909 = vpack.c.bf16 %v895, %v895
        %v910 = vpack.c.bf16 %v899, %v899
        %v911 = vpack.c.bf16 %v901, %v901
        %914 = vrot.lane.b32.xlu0 %v866, 96
        %v915 = vpop.permute.xlu0 %914
        %916 = vrot.lane.b32.xlu0 %v868, 96
        %v917 = vpop.permute.xlu0 %916
        %920 = vrot.lane.b32.xlu0 %v866, 64
        %v921 = vpop.permute.xlu0 %920
        %922 = vrot.lane.b32.xlu0 %v868, 64
        %v923 = vpop.permute.xlu0 %922
        %926 = vrot.lane.b32.xlu0 %v866, 32
        %v927 = vpop.permute.xlu0 %926
        %928 = vrot.lane.b32.xlu0 %v868, 32
        %v929 = vpop.permute.xlu0 %928
        %v932 = vpack.c.bf16 %v866, %v866
        %v933 = vpack.c.bf16 %v868, %v868
        %v934 = vpack.c.bf16 %v915, %v915
        %v935 = vpack.c.bf16 %v917, %v917
        %v936 = vpack.c.bf16 %v921, %v921
        %v937 = vpack.c.bf16 %v923, %v923
        %v938 = vpack.c.bf16 %v927, %v927
        %v939 = vpack.c.bf16 %v929, %v929
        %942 = vrot.lane.b32.xlu0 %v880, 96
        %v943 = vpop.permute.xlu0 %942
        %944 = vrot.lane.b32.xlu0 %v882, 96
        %v945 = vpop.permute.xlu0 %944
        %948 = vrot.lane.b32.xlu0 %v880, 64
        %v949 = vpop.permute.xlu0 %948
        %950 = vrot.lane.b32.xlu0 %v882, 64
        %v951 = vpop.permute.xlu0 %950
        %954 = vrot.lane.b32.xlu0 %v880, 32
        %v955 = vpop.permute.xlu0 %954
        %956 = vrot.lane.b32.xlu0 %v882, 32
        %v957 = vpop.permute.xlu0 %956
        %v960 = vpack.c.bf16 %v880, %v880
        %v961 = vpack.c.bf16 %v882, %v882
        %v962 = vpack.c.bf16 %v943, %v943
        %v963 = vpack.c.bf16 %v945, %v945
        %v964 = vpack.c.bf16 %v949, %v949
        %v965 = vpack.c.bf16 %v951, %v951
        %v966 = vpack.c.bf16 %v955, %v955
        %v967 = vpack.c.bf16 %v957, %v957
        %v968 = vld [vmem:[%s606] sm:$0x1]
        %v969 = vld [vmem:[%s606 + $0x1] sm:$0x1]
        %v972 = vperm.slane %v968, 0
        %v973 = vperm.slane %v969, 0
        %vm976 = vcmask 261120
        %v978 = vsel %vm976, %v904, 0
        %v981 = vsel %vm976, %v932, 0
        %983 = vmatpush.bf16.xpose.msra.mxu0 0
        %984 = vmatpush.bf16.xpose.msra.mxu0 0
        %985 = vmatpush.bf16.xpose.msra.mxu0 0
        %986 = vmatpush.bf16.xpose.msra.mxu0 0
        %987 = vmatpush.bf16.xpose.msra.mxu0 0
        %988 = vmatpush.bf16.xpose.msra.mxu0 0
        %989 = vmatpush.bf16.xpose.msra.mxu0 0
        %990 = vmatpush.bf16.xpose.msra.mxu0 %v981
        %991 = vmatmul.bf16.gmra.mxu0 %v978
        %v992 = vpop.f32.mrf.mxu0
        %v993 = vadd.f32 %v972, %v992
        %v994 = vpop.f32.mrf.mxu0
        %995 = vdwg.mxu0
        %v997 = vsel %vm976, %v905, 0
        %v1000 = vsel %vm976, %v933, 0
        %1002 = vmatpush.bf16.xpose.msra.mxu0 0
        %1003 = vmatpush.bf16.xpose.msra.mxu0 0
        %1004 = vmatpush.bf16.xpose.msra.mxu0 0
        %1005 = vmatpush.bf16.xpose.msra.mxu0 0
        %1006 = vmatpush.bf16.xpose.msra.mxu0 0
        %1007 = vmatpush.bf16.xpose.msra.mxu0 0
        %1008 = vmatpush.bf16.xpose.msra.mxu0 0
        %1009 = vmatpush.bf16.xpose.msra.mxu0 %v1000
        %1010 = vmatmul.bf16.gmra.mxu0 %v997
        %v1011 = vpop.f32.mrf.mxu0
        %v1012 = vadd.f32 %v973, %v1011
        %v1013 = vpop.f32.mrf.mxu0
        %1014 = vdwg.mxu0
        %v1016 = vsel %vm976, %v906, 0
        %v1019 = vsel %vm976, %v934, 0
        %1021 = vmatpush.bf16.xpose.msra.mxu0 0
        %1022 = vmatpush.bf16.xpose.msra.mxu0 0
        %1023 = vmatpush.bf16.xpose.msra.mxu0 0
        %1024 = vmatpush.bf16.xpose.msra.mxu0 0
        %1025 = vmatpush.bf16.xpose.msra.mxu0 0
        %1026 = vmatpush.bf16.xpose.msra.mxu0 0
        %1027 = vmatpush.bf16.xpose.msra.mxu0 0
        %1028 = vmatpush.bf16.xpose.msra.mxu0 %v1019
        %1029 = vmatmul.bf16.gmra.mxu0 %v1016
        %v1030 = vpop.f32.mrf.mxu0
        %v1031 = vadd.f32 %v972, %v1030
        %v1032 = vpop.f32.mrf.mxu0
        %1033 = vdwg.mxu0
        %v1035 = vsel %vm976, %v907, 0
        %v1038 = vsel %vm976, %v935, 0
        %1040 = vmatpush.bf16.xpose.msra.mxu0 0
        %1041 = vmatpush.bf16.xpose.msra.mxu0 0
        %1042 = vmatpush.bf16.xpose.msra.mxu0 0
        %1043 = vmatpush.bf16.xpose.msra.mxu0 0
        %1044 = vmatpush.bf16.xpose.msra.mxu0 0
        %1045 = vmatpush.bf16.xpose.msra.mxu0 0
        %1046 = vmatpush.bf16.xpose.msra.mxu0 0
        %1047 = vmatpush.bf16.xpose.msra.mxu0 %v1038
        %1048 = vmatmul.bf16.gmra.mxu0 %v1035
        %v1049 = vpop.f32.mrf.mxu0
        %v1050 = vadd.f32 %v973, %v1049
        %v1051 = vpop.f32.mrf.mxu0
        %1052 = vdwg.mxu0
        %v1054 = vsel %vm976, %v908, 0
        %v1057 = vsel %vm976, %v936, 0
        %1059 = vmatpush.bf16.xpose.msra.mxu0 0
        %1060 = vmatpush.bf16.xpose.msra.mxu0 0
        %1061 = vmatpush.bf16.xpose.msra.mxu0 0
        %1062 = vmatpush.bf16.xpose.msra.mxu0 0
        %1063 = vmatpush.bf16.xpose.msra.mxu0 0
        %1064 = vmatpush.bf16.xpose.msra.mxu0 0
        %1065 = vmatpush.bf16.xpose.msra.mxu0 0
        %1066 = vmatpush.bf16.xpose.msra.mxu0 %v1057
        %1067 = vmatmul.bf16.gmra.mxu0 %v1054
        %v1068 = vpop.f32.mrf.mxu0
        %v1069 = vadd.f32 %v972, %v1068
        %v1070 = vpop.f32.mrf.mxu0
        %1071 = vdwg.mxu0
        %v1073 = vsel %vm976, %v909, 0
        %v1076 = vsel %vm976, %v937, 0
        %1078 = vmatpush.bf16.xpose.msra.mxu0 0
        %1079 = vmatpush.bf16.xpose.msra.mxu0 0
        %1080 = vmatpush.bf16.xpose.msra.mxu0 0
        %1081 = vmatpush.bf16.xpose.msra.mxu0 0
        %1082 = vmatpush.bf16.xpose.msra.mxu0 0
        %1083 = vmatpush.bf16.xpose.msra.mxu0 0
        %1084 = vmatpush.bf16.xpose.msra.mxu0 0
        %1085 = vmatpush.bf16.xpose.msra.mxu0 %v1076
        %1086 = vmatmul.bf16.gmra.mxu0 %v1073
        %v1087 = vpop.f32.mrf.mxu0
        %v1088 = vadd.f32 %v973, %v1087
        %v1089 = vpop.f32.mrf.mxu0
        %1090 = vdwg.mxu0
        %v1092 = vsel %vm976, %v910, 0
        %v1095 = vsel %vm976, %v938, 0
        %1097 = vmatpush.bf16.xpose.msra.mxu0 0
        %1098 = vmatpush.bf16.xpose.msra.mxu0 0
        %1099 = vmatpush.bf16.xpose.msra.mxu0 0
        %1100 = vmatpush.bf16.xpose.msra.mxu0 0
        %1101 = vmatpush.bf16.xpose.msra.mxu0 0
        %1102 = vmatpush.bf16.xpose.msra.mxu0 0
        %1103 = vmatpush.bf16.xpose.msra.mxu0 0
        %1104 = vmatpush.bf16.xpose.msra.mxu0 %v1095
        %1105 = vmatmul.bf16.gmra.mxu0 %v1092
        %v1106 = vpop.f32.mrf.mxu0
        %v1107 = vadd.f32 %v972, %v1106
        %v1108 = vpop.f32.mrf.mxu0
        %1109 = vdwg.mxu0
        %v1111 = vsel %vm976, %v911, 0
        %v1114 = vsel %vm976, %v939, 0
        %1116 = vmatpush.bf16.xpose.msra.mxu0 0
        %1117 = vmatpush.bf16.xpose.msra.mxu0 0
        %1118 = vmatpush.bf16.xpose.msra.mxu0 0
        %1119 = vmatpush.bf16.xpose.msra.mxu0 0
        %1120 = vmatpush.bf16.xpose.msra.mxu0 0
        %1121 = vmatpush.bf16.xpose.msra.mxu0 0
        %1122 = vmatpush.bf16.xpose.msra.mxu0 0
        %1123 = vmatpush.bf16.xpose.msra.mxu0 %v1114
        %1124 = vmatmul.bf16.gmra.mxu0 %v1111
        %v1125 = vpop.f32.mrf.mxu0
        %v1126 = vadd.f32 %v973, %v1125
        %v1127 = vpop.f32.mrf.mxu0
        %1128 = vdwg.mxu0
        %vm1129 = vcmask 64512
        %v1130 = vsel %vm1129, %v993, -inf
        %1131 = vmax.xlane.f32.xlu0 %v1130
        %v1132 = vpop.xlane.xlu0 %1131
        %v1133 = vsel %vm1129, %v1012, -inf
        %1134 = vmax.xlane.f32.xlu0 %v1133
        %v1135 = vpop.xlane.xlu0 %1134
        %v1136 = vsel %vm1129, %v1031, -inf
        %1137 = vmax.xlane.f32.xlu0 %v1136
        %v1138 = vpop.xlane.xlu0 %1137
        %v1139 = vsel %vm1129, %v1050, -inf
        %1140 = vmax.xlane.f32.xlu0 %v1139
        %v1141 = vpop.xlane.xlu0 %1140
        %v1142 = vsel %vm1129, %v1069, -inf
        %1143 = vmax.xlane.f32.xlu0 %v1142
        %v1144 = vpop.xlane.xlu0 %1143
        %v1145 = vsel %vm1129, %v1088, -inf
        %1146 = vmax.xlane.f32.xlu0 %v1145
        %v1147 = vpop.xlane.xlu0 %1146
        %v1148 = vsel %vm1129, %v1107, -inf
        %1149 = vmax.xlane.f32.xlu0 %v1148
        %v1150 = vpop.xlane.xlu0 %1149
        %v1151 = vsel %vm1129, %v1126, -inf
        %1152 = vmax.xlane.f32.xlu0 %v1151
        %v1153 = vpop.xlane.xlu0 %1152
        %v1154 = vsub.f32 %v993, %v1132
        %v1155 = vsub.f32 %v1012, %v1135
        %v1156 = vsub.f32 %v1031, %v1138
        %v1157 = vsub.f32 %v1050, %v1141
        %v1158 = vsub.f32 %v1069, %v1144
        %v1159 = vsub.f32 %v1088, %v1147
        %v1160 = vsub.f32 %v1107, %v1150
        %v1161 = vsub.f32 %v1126, %v1153
        %v1162 = vmul.f32 %v1154, 1.442695
        %v1163 = vpow.pop %v1162
        %v1164 = vmul.f32 %v1155, 1.442695
        %v1165 = vpow.pop %v1164
        %v1166 = vmul.f32 %v1156, 1.442695
        %v1167 = vpow.pop %v1166
        %v1168 = vmul.f32 %v1157, 1.442695
        %v1169 = vpow.pop %v1168
        %v1170 = vmul.f32 %v1158, 1.442695
        %v1171 = vpow.pop %v1170
        %v1172 = vmul.f32 %v1159, 1.442695
        %v1173 = vpow.pop %v1172
        %v1174 = vmul.f32 %v1160, 1.442695
        %v1175 = vpow.pop %v1174
        %v1176 = vmul.f32 %v1161, 1.442695
        %v1177 = vpow.pop %v1176
        %v1178 = vsel %vm1129, %v1163, 0.0
        %1179 = vadd.xlane.f32.xlu0 %v1178
        %v1180 = vpop.xlane.xlu0 %1179
        %v1181 = vsel %vm1129, %v1165, 0.0
        %1182 = vadd.xlane.f32.xlu0 %v1181
        %v1183 = vpop.xlane.xlu0 %1182
        %v1184 = vsel %vm1129, %v1167, 0.0
        %1185 = vadd.xlane.f32.xlu0 %v1184
        %v1186 = vpop.xlane.xlu0 %1185
        %v1187 = vsel %vm1129, %v1169, 0.0
        %1188 = vadd.xlane.f32.xlu0 %v1187
        %v1189 = vpop.xlane.xlu0 %1188
        %v1190 = vsel %vm1129, %v1171, 0.0
        %1191 = vadd.xlane.f32.xlu0 %v1190
        %v1192 = vpop.xlane.xlu0 %1191
        %v1193 = vsel %vm1129, %v1173, 0.0
        %1194 = vadd.xlane.f32.xlu0 %v1193
        %v1195 = vpop.xlane.xlu0 %1194
        %v1196 = vsel %vm1129, %v1175, 0.0
        %1197 = vadd.xlane.f32.xlu0 %v1196
        %v1198 = vpop.xlane.xlu0 %1197
        %v1199 = vsel %vm1129, %v1177, 0.0
        %1200 = vadd.xlane.f32.xlu0 %v1199
        %v1201 = vpop.xlane.xlu0 %1200
        %v1202 = vrcp.pop %v1180
        %v1203 = vrcp.pop %v1183
        %v1204 = vrcp.pop %v1186
        %v1205 = vrcp.pop %v1189
        %v1206 = vrcp.pop %v1192
        %v1207 = vrcp.pop %v1195
        %v1208 = vrcp.pop %v1198
        %v1209 = vrcp.pop %v1201
        %v1210 = vmul.f32 %v1163, %v1202
        %v1211 = vmul.f32 %v1165, %v1203
        %v1212 = vmul.f32 %v1167, %v1204
        %v1213 = vmul.f32 %v1169, %v1205
        %v1214 = vmul.f32 %v1171, %v1206
        %v1215 = vmul.f32 %v1173, %v1207
        %v1216 = vmul.f32 %v1175, %v1208
        %v1217 = vmul.f32 %v1177, %v1209
        %v1218 = vpack.c.bf16 %v1210, %v1210
        %v1219 = vpack.c.bf16 %v1211, %v1211
        %v1220 = vpack.c.bf16 %v1212, %v1212
        %v1221 = vpack.c.bf16 %v1213, %v1213
        %v1222 = vpack.c.bf16 %v1214, %v1214
        %v1223 = vpack.c.bf16 %v1215, %v1215
        %v1224 = vpack.c.bf16 %v1216, %v1216
        %v1225 = vpack.c.bf16 %v1217, %v1217
        %v1227 = vsel %vm1129, %v1218, 0
        %vm1229 = vcmask 1043456
        %v1231 = vsel %vm1229, %v960, 0
        %1233 = vmatpush.bf16.msra.mxu0 0
        %1234 = vmatpush.bf16.msra.mxu0 0
        %1235 = vmatpush.bf16.msra.mxu0 0
        %1236 = vmatpush.bf16.msra.mxu0 0
        %1237 = vmatpush.bf16.msra.mxu0 0
        %1238 = vmatpush.bf16.msra.mxu0 0
        %1239 = vmatpush.bf16.msra.mxu0 0
        %1240 = vmatpush.bf16.msra.mxu0 %v1231
        %1241 = vmatmul.bf16.gmra.mxu0 %v1227
        %v1242 = vpop.f32.mrf.mxu0
        %v1243 = vadd.f32 0.0, %v1242
        %v1244 = vpop.f32.mrf.mxu0
        %1245 = vdwg.mxu0
        %v1247 = vsel %vm1129, %v1219, 0
        %v1250 = vsel %vm1229, %v961, 0
        %1252 = vmatpush.bf16.msra.mxu0 0
        %1253 = vmatpush.bf16.msra.mxu0 0
        %1254 = vmatpush.bf16.msra.mxu0 0
        %1255 = vmatpush.bf16.msra.mxu0 0
        %1256 = vmatpush.bf16.msra.mxu0 0
        %1257 = vmatpush.bf16.msra.mxu0 0
        %1258 = vmatpush.bf16.msra.mxu0 0
        %1259 = vmatpush.bf16.msra.mxu0 %v1250
        %1260 = vmatmul.bf16.gmra.mxu0 %v1247
        %v1261 = vpop.f32.mrf.mxu0
        %v1262 = vadd.f32 0.0, %v1261
        %v1263 = vpop.f32.mrf.mxu0
        %1264 = vdwg.mxu0
        %v1266 = vsel %vm1129, %v1220, 0
        %v1269 = vsel %vm1229, %v962, 0
        %1271 = vmatpush.bf16.msra.mxu0 0
        %1272 = vmatpush.bf16.msra.mxu0 0
        %1273 = vmatpush.bf16.msra.mxu0 0
        %1274 = vmatpush.bf16.msra.mxu0 0
        %1275 = vmatpush.bf16.msra.mxu0 0
        %1276 = vmatpush.bf16.msra.mxu0 0
        %1277 = vmatpush.bf16.msra.mxu0 0
        %1278 = vmatpush.bf16.msra.mxu0 %v1269
        %1279 = vmatmul.bf16.gmra.mxu0 %v1266
        %v1280 = vpop.f32.mrf.mxu0
        %v1281 = vadd.f32 0.0, %v1280
        %v1282 = vpop.f32.mrf.mxu0
        %1283 = vdwg.mxu0
        %v1285 = vsel %vm1129, %v1221, 0
        %v1288 = vsel %vm1229, %v963, 0
        %1290 = vmatpush.bf16.msra.mxu0 0
        %1291 = vmatpush.bf16.msra.mxu0 0
        %1292 = vmatpush.bf16.msra.mxu0 0
        %1293 = vmatpush.bf16.msra.mxu0 0
        %1294 = vmatpush.bf16.msra.mxu0 0
        %1295 = vmatpush.bf16.msra.mxu0 0
        %1296 = vmatpush.bf16.msra.mxu0 0
        %1297 = vmatpush.bf16.msra.mxu0 %v1288
        %1298 = vmatmul.bf16.gmra.mxu0 %v1285
        %v1299 = vpop.f32.mrf.mxu0
        %v1300 = vadd.f32 0.0, %v1299
        %v1301 = vpop.f32.mrf.mxu0
        %1302 = vdwg.mxu0
        %v1304 = vsel %vm1129, %v1222, 0
        %v1307 = vsel %vm1229, %v964, 0
        %1309 = vmatpush.bf16.msra.mxu0 0
        %1310 = vmatpush.bf16.msra.mxu0 0
        %1311 = vmatpush.bf16.msra.mxu0 0
        %1312 = vmatpush.bf16.msra.mxu0 0
        %1313 = vmatpush.bf16.msra.mxu0 0
        %1314 = vmatpush.bf16.msra.mxu0 0
        %1315 = vmatpush.bf16.msra.mxu0 0
        %1316 = vmatpush.bf16.msra.mxu0 %v1307
        %1317 = vmatmul.bf16.gmra.mxu0 %v1304
        %v1318 = vpop.f32.mrf.mxu0
        %v1319 = vadd.f32 0.0, %v1318
        %v1320 = vpop.f32.mrf.mxu0
        %1321 = vdwg.mxu0
        %v1323 = vsel %vm1129, %v1223, 0
        %v1326 = vsel %vm1229, %v965, 0
        %1328 = vmatpush.bf16.msra.mxu0 0
        %1329 = vmatpush.bf16.msra.mxu0 0
        %1330 = vmatpush.bf16.msra.mxu0 0
        %1331 = vmatpush.bf16.msra.mxu0 0
        %1332 = vmatpush.bf16.msra.mxu0 0
        %1333 = vmatpush.bf16.msra.mxu0 0
        %1334 = vmatpush.bf16.msra.mxu0 0
        %1335 = vmatpush.bf16.msra.mxu0 %v1326
        %1336 = vmatmul.bf16.gmra.mxu0 %v1323
        %v1337 = vpop.f32.mrf.mxu0
        %v1338 = vadd.f32 0.0, %v1337
        %v1339 = vpop.f32.mrf.mxu0
        %1340 = vdwg.mxu0
        %v1342 = vsel %vm1129, %v1224, 0
        %v1345 = vsel %vm1229, %v966, 0
        %1347 = vmatpush.bf16.msra.mxu0 0
        %1348 = vmatpush.bf16.msra.mxu0 0
        %1349 = vmatpush.bf16.msra.mxu0 0
        %1350 = vmatpush.bf16.msra.mxu0 0
        %1351 = vmatpush.bf16.msra.mxu0 0
        %1352 = vmatpush.bf16.msra.mxu0 0
        %1353 = vmatpush.bf16.msra.mxu0 0
        %1354 = vmatpush.bf16.msra.mxu0 %v1345
        %1355 = vmatmul.bf16.gmra.mxu0 %v1342
        %v1356 = vpop.f32.mrf.mxu0
        %v1357 = vadd.f32 0.0, %v1356
        %v1358 = vpop.f32.mrf.mxu0
        %1359 = vdwg.mxu0
        %v1361 = vsel %vm1129, %v1225, 0
        %v1364 = vsel %vm1229, %v967, 0
        %1366 = vmatpush.bf16.msra.mxu0 0
        %1367 = vmatpush.bf16.msra.mxu0 0
        %1368 = vmatpush.bf16.msra.mxu0 0
        %1369 = vmatpush.bf16.msra.mxu0 0
        %1370 = vmatpush.bf16.msra.mxu0 0
        %1371 = vmatpush.bf16.msra.mxu0 0
        %1372 = vmatpush.bf16.msra.mxu0 0
        %1373 = vmatpush.bf16.msra.mxu0 %v1364
        %1374 = vmatmul.bf16.gmra.mxu0 %v1361
        %v1375 = vpop.f32.mrf.mxu0
        %v1376 = vadd.f32 0.0, %v1375
        %v1377 = vpop.f32.mrf.mxu0
        %1378 = vdwg.mxu0
        %1381 = vrot.lane.b32.xlu0 %v1281, 32
        %v1382 = vpop.permute.xlu0 %1381
        %1383 = vrot.lane.b32.xlu0 %v1300, 32
        %v1384 = vpop.permute.xlu0 %1383
        %1389 = vrot.lane.b32.xlu0 %v1319, 64
        %v1390 = vpop.permute.xlu0 %1389
        %1391 = vrot.lane.b32.xlu0 %v1338, 64
        %v1392 = vpop.permute.xlu0 %1391
        %1397 = vrot.lane.b32.xlu0 %v1357, 96
        %v1398 = vpop.permute.xlu0 %1397
        %1399 = vrot.lane.b32.xlu0 %v1376, 96
        %v1400 = vpop.permute.xlu0 %1399
        %v1403 = vsel %vm976, %v1243, %v1382
        %v1404 = vsel %vm976, %v1262, %v1384
        %vm1405 = vcmask 523264
        %v1406 = vsel %vm1405, %v1403, %v1390
        %v1407 = vsel %vm1405, %v1404, %v1392
        %vm1408 = vcmask 785408
        %v1409 = vsel %vm1408, %v1406, %v1398
        %v1410 = vsel %vm1408, %v1407, %v1400
        %v1411 = vpack.c.bf16 %v1410, %v1409
        %v1412 = vld [vmem:[#allocation5] sm:$0xf]
        %v1413 = vld [vmem:[#allocation5 + $0x4] sm:$0xf]
        %v1414 = vld [vmem:[#allocation5 + $0x8] sm:$0xf]
        %v1415 = vld [vmem:[#allocation5 + $0xc] sm:$0xf]
        %v1416 = vld [vmem:[#allocation5 + $0x10] sm:$0xf]
        %v1417 = vld [vmem:[#allocation5 + $0x14] sm:$0xf]
        %v1418 = vld [vmem:[#allocation5 + $0x18] sm:$0xf]
        %v1419 = vld [vmem:[#allocation5 + $0x1c] sm:$0xf]
        %v1420 = vld [vmem:[#allocation5 + $0x20] sm:$0xf]
        %v1421 = vld [vmem:[#allocation5 + $0x24] sm:$0xf]
        %v1422 = vld [vmem:[#allocation5 + $0x28] sm:$0xf]
        %v1423 = vld [vmem:[#allocation5 + $0x2c] sm:$0xf]
        %v1424 = vld [vmem:[#allocation5 + $0x30] sm:$0xf]
        %v1425 = vld [vmem:[#allocation5 + $0x34] sm:$0xf]
        %v1426 = vld [vmem:[#allocation5 + $0x38] sm:$0xf]
        %v1427 = vld [vmem:[#allocation5 + $0x3c] sm:$0xf]
        %v1428 = vld [vmem:[%s7] sm:$0x1]
        %v1430 = vperm.slane %v1428, 0
        %v1448 = vunpack.c.l.b16 %v1412
        %v1449 = vunpack.c.l.b16 %v1413
        %v1450 = vunpack.c.l.b16 %v1414
        %v1451 = vunpack.c.l.b16 %v1415
        %v1452 = vunpack.c.l.b16 %v1416
        %v1453 = vunpack.c.l.b16 %v1417
        %v1454 = vunpack.c.l.b16 %v1418
        %v1455 = vunpack.c.l.b16 %v1419
        %v1456 = vunpack.c.l.b16 %v1420
        %v1457 = vunpack.c.l.b16 %v1421
        %v1458 = vunpack.c.l.b16 %v1422
        %v1459 = vunpack.c.l.b16 %v1423
        %v1460 = vunpack.c.l.b16 %v1424
        %v1461 = vunpack.c.l.b16 %v1425
        %v1462 = vunpack.c.l.b16 %v1426
        %v1463 = vunpack.c.l.b16 %v1427
        %v1464 = vpack.c.b16 %v1449, %v1448
        %v1465 = vpack.c.b16 %v1451, %v1450
        %v1466 = vpack.c.b16 %v1453, %v1452
        %v1467 = vpack.c.b16 %v1455, %v1454
        %v1468 = vpack.c.b16 %v1457, %v1456
        %v1469 = vpack.c.b16 %v1459, %v1458
        %v1470 = vpack.c.b16 %v1461, %v1460
        %v1471 = vpack.c.b16 %v1463, %v1462
        %1480 = vmatpush.bf16.msra.mxu0 %v1471
        %1481 = vmatpush.bf16.msra.mxu0 %v1470
        %1482 = vmatpush.bf16.msra.mxu0 %v1469
        %1483 = vmatpush.bf16.msra.mxu0 %v1468
        %1484 = vmatpush.bf16.msra.mxu0 %v1467
        %1485 = vmatpush.bf16.msra.mxu0 %v1466
        %1486 = vmatpush.bf16.msra.mxu0 %v1465
        %1487 = vmatpush.bf16.msra.mxu0 %v1464
        %1488 = vmatmul.bf16.gmra.mxu0 %v1411
        %v1489 = vpop.f32.mrf.mxu0
        %v1490 = vadd.f32 %v1430, %v1489
        %v1491 = vpop.f32.mrf.mxu0
        %v1492 = vadd.f32 %v1430, %v1491
        %1493 = vdwg.mxu0
        %v1494 = vadd.f32 %v612, %v1490
        %v1495 = vadd.f32 %v613, %v1492
        %v1496 = vld [vmem:[%s8] sm:$0x1]
        %v1497 = vld [vmem:[%s9] sm:$0x1]
        %1498 = vadd.xlane.f32.xlu0 %v1494
        %v1499 = vpop.xlane.xlu0 %1498
        %1500 = vadd.xlane.f32.xlu0 %v1495
        %v1501 = vpop.xlane.xlu0 %1500
        %v1502 = vmul.f32 %v1499, %v626
        %v1503 = vmul.f32 %v1501, %v626
        %v1504 = vsub.f32 %v1494, %v1502
        %v1505 = vsub.f32 %v1495, %v1503
        %v1506 = vmul.f32 %v1504, %v1504
        %v1507 = vmul.f32 %v1505, %v1505
        %1508 = vadd.xlane.f32.xlu0 %v1506
        %v1509 = vpop.xlane.xlu0 %1508
        %1510 = vadd.xlane.f32.xlu0 %v1507
        %v1511 = vpop.xlane.xlu0 %1510
        %v1512 = vmul.f32 %v1509, %v626
        %v1513 = vmul.f32 %v1511, %v626
        %v1514 = vadd.f32 %v1512, 1e-06
        %v1515 = vadd.f32 %v1513, 1e-06
        %v1516 = vrsqrt.pop %v1514
        %v1517 = vmul.f32 %v1516, %v1514
        %v1518 = vmul.f32 %v1517, %v1516
        %v1519 = vmul.f32 0.5, %v1518
        %v1520 = vsub.f32 1.5, %v1519
        %v1521 = vmul.f32 %v1516, %v1520
        %vm1522 = vweird.f32 %v1514
        %vm1523 = vweird.f32 %v1516
        %vm1524 = vmor %vm1522, %vm1523
        %v1525 = vsel %vm1524, %v1516, %v1521
        %v1526 = vrsqrt.pop %v1515
        %v1527 = vmul.f32 %v1526, %v1515
        %v1528 = vmul.f32 %v1527, %v1526
        %v1529 = vmul.f32 0.5, %v1528
        %v1530 = vsub.f32 1.5, %v1529
        %v1531 = vmul.f32 %v1526, %v1530
        %vm1532 = vweird.f32 %v1515
        %vm1533 = vweird.f32 %v1526
        %vm1534 = vmor %vm1532, %vm1533
        %v1535 = vsel %vm1534, %v1526, %v1531
        %v1536 = vmul.f32 %v1504, %v1525
        %v1537 = vmul.f32 %v1505, %v1535
        %v1539 = vperm.slane %v1496, 0
        %v1541 = vmul.f32 %v1536, %v1539
        %v1542 = vmul.f32 %v1537, %v1539
        %v1544 = vperm.slane %v1497, 0
        %v1546 = vadd.f32 %v1541, %v1544
        %v1547 = vadd.f32 %v1542, %v1544
        %v1548 = vpack.c.bf16 %v1547, %v1546
        %v1549 = vld [vmem:[#allocation7] sm:$0xff]
        %v1550 = vld [vmem:[#allocation7 + $0x8] sm:$0xff]
        %v1551 = vld [vmem:[#allocation7 + $0x10] sm:$0xff]
        %v1552 = vld [vmem:[#allocation7 + $0x18] sm:$0xff]
        %v1553 = vld [vmem:[#allocation7 + $0x20] sm:$0xff]
        %v1554 = vld [vmem:[#allocation7 + $0x28] sm:$0xff]
        %v1555 = vld [vmem:[#allocation7 + $0x30] sm:$0xff]
        %v1556 = vld [vmem:[#allocation7 + $0x38] sm:$0xff]
        %v1557 = vld [vmem:[#allocation7 + $0x40] sm:$0xff]
        %v1558 = vld [vmem:[#allocation7 + $0x48] sm:$0xff]
        %v1559 = vld [vmem:[#allocation7 + $0x50] sm:$0xff]
        %v1560 = vld [vmem:[#allocation7 + $0x58] sm:$0xff]
        %v1561 = vld [vmem:[#allocation7 + $0x60] sm:$0xff]
        %v1562 = vld [vmem:[#allocation7 + $0x68] sm:$0xff]
        %v1563 = vld [vmem:[#allocation7 + $0x70] sm:$0xff]
        %v1564 = vld [vmem:[#allocation7 + $0x78] sm:$0xff]
        %v1565 = vld [vmem:[%s11] sm:$0x3]
        %v1567 = vperm.slane %v1565, 0
        %v1568 = vperm.slane %v1565, 1
        %v1587 = vunpack.c.l.b16 %v1549
        %v1588 = vunpack.c.h.b16 %v1549
        %v1589 = vunpack.c.l.b16 %v1550
        %v1590 = vunpack.c.h.b16 %v1550
        %v1591 = vunpack.c.l.b16 %v1551
        %v1592 = vunpack.c.h.b16 %v1551
        %v1593 = vunpack.c.l.b16 %v1552
        %v1594 = vunpack.c.h.b16 %v1552
        %v1595 = vunpack.c.l.b16 %v1553
        %v1596 = vunpack.c.h.b16 %v1553
        %v1597 = vunpack.c.l.b16 %v1554
        %v1598 = vunpack.c.h.b16 %v1554
        %v1599 = vunpack.c.l.b16 %v1555
        %v1600 = vunpack.c.h.b16 %v1555
        %v1601 = vunpack.c.l.b16 %v1556
        %v1602 = vunpack.c.h.b16 %v1556
        %v1603 = vunpack.c.l.b16 %v1557
        %v1604 = vunpack.c.h.b16 %v1557
        %v1605 = vunpack.c.l.b16 %v1558
        %v1606 = vunpack.c.h.b16 %v1558
        %v1607 = vunpack.c.l.b16 %v1559
        %v1608 = vunpack.c.h.b16 %v1559
        %v1609 = vunpack.c.l.b16 %v1560
        %v1610 = vunpack.c.h.b16 %v1560
        %v1611 = vunpack.c.l.b16 %v1561
        %v1612 = vunpack.c.h.b16 %v1561
        %v1613 = vunpack.c.l.b16 %v1562
        %v1614 = vunpack.c.h.b16 %v1562
        %v1615 = vunpack.c.l.b16 %v1563
        %v1616 = vunpack.c.h.b16 %v1563
        %v1617 = vunpack.c.l.b16 %v1564
        %v1618 = vunpack.c.h.b16 %v1564
        %v1619 = vpack.c.b16 %v1589, %v1587
        %v1620 = vpack.c.b16 %v1590, %v1588
        %v1621 = vpack.c.b16 %v1593, %v1591
        %v1622 = vpack.c.b16 %v1594, %v1592
        %v1623 = vpack.c.b16 %v1597, %v1595
        %v1624 = vpack.c.b16 %v1598, %v1596
        %v1625 = vpack.c.b16 %v1601, %v1599
        %v1626 = vpack.c.b16 %v1602, %v1600
        %v1627 = vpack.c.b16 %v1605, %v1603
        %v1628 = vpack.c.b16 %v1606, %v1604
        %v1629 = vpack.c.b16 %v1609, %v1607
        %v1630 = vpack.c.b16 %v1610, %v1608
        %v1631 = vpack.c.b16 %v1613, %v1611
        %v1632 = vpack.c.b16 %v1614, %v1612
        %v1633 = vpack.c.b16 %v1617, %v1615
        %v1634 = vpack.c.b16 %v1618, %v1616
        %1651 = vmatpush.bf16.msra.mxu0 %v1633
        %1652 = vmatpush.bf16.msra.mxu0 %v1631
        %1653 = vmatpush.bf16.msra.mxu0 %v1629
        %1654 = vmatpush.bf16.msra.mxu0 %v1627
        %1655 = vmatpush.bf16.msra.mxu0 %v1625
        %1656 = vmatpush.bf16.msra.mxu0 %v1623
        %1657 = vmatpush.bf16.msra.mxu0 %v1621
        %1658 = vmatpush.bf16.msra.mxu0 %v1619
        %1659 = vmatmul.bf16.gmra.mxu0 %v1548
        %v1660 = vpop.f32.mrf.mxu0
        %v1661 = vadd.f32 %v1567, %v1660
        %v1662 = vpop.f32.mrf.mxu0
        %v1663 = vadd.f32 %v1567, %v1662
        %1664 = vdwg.mxu0
        %1665 = vmatpush.bf16.msra.mxu0 %v1634
        %1666 = vmatpush.bf16.msra.mxu0 %v1632
        %1667 = vmatpush.bf16.msra.mxu0 %v1630
        %1668 = vmatpush.bf16.msra.mxu0 %v1628
        %1669 = vmatpush.bf16.msra.mxu0 %v1626
        %1670 = vmatpush.bf16.msra.mxu0 %v1624
        %1671 = vmatpush.bf16.msra.mxu0 %v1622
        %1672 = vmatpush.bf16.msra.mxu0 %v1620
        %1673 = vmatmul.bf16.gmra.mxu0 %v1548
        %v1674 = vpop.f32.mrf.mxu0
        %v1675 = vadd.f32 %v1568, %v1674
        %v1676 = vpop.f32.mrf.mxu0
        %v1677 = vadd.f32 %v1568, %v1676
        %1678 = vdwg.mxu0
        %v1679 = vmax.f32 %v1661, 0.0
        %v1680 = vmax.f32 %v1675, 0.0
        %v1681 = vmax.f32 %v1663, 0.0
        %v1682 = vmax.f32 %v1677, 0.0
        %v1683 = vpack.c.bf16 %v1681, %v1679
        %v1684 = vpack.c.bf16 %v1682, %v1680
        %v1685 = vld [vmem:[#allocation8] sm:$0xf]
        %v1686 = vld [vmem:[#allocation8 + $0x4] sm:$0xf]
        %v1687 = vld [vmem:[#allocation8 + $0x8] sm:$0xf]
        %v1688 = vld [vmem:[#allocation8 + $0xc] sm:$0xf]
        %v1689 = vld [vmem:[#allocation8 + $0x10] sm:$0xf]
        %v1690 = vld [vmem:[#allocation8 + $0x14] sm:$0xf]
        %v1691 = vld [vmem:[#allocation8 + $0x18] sm:$0xf]
        %v1692 = vld [vmem:[#allocation8 + $0x1c] sm:$0xf]
        %v1693 = vld [vmem:[#allocation8 + $0x20] sm:$0xf]
        %v1694 = vld [vmem:[#allocation8 + $0x24] sm:$0xf]
        %v1695 = vld [vmem:[#allocation8 + $0x28] sm:$0xf]
        %v1696 = vld [vmem:[#allocation8 + $0x2c] sm:$0xf]
        %v1697 = vld [vmem:[#allocation8 + $0x30] sm:$0xf]
        %v1698 = vld [vmem:[#allocation8 + $0x34] sm:$0xf]
        %v1699 = vld [vmem:[#allocation8 + $0x38] sm:$0xf]
        %v1700 = vld [vmem:[#allocation8 + $0x3c] sm:$0xf]
        %v1701 = vld [vmem:[#allocation8 + $0x40] sm:$0xf]
        %v1702 = vld [vmem:[#allocation8 + $0x44] sm:$0xf]
        %v1703 = vld [vmem:[#allocation8 + $0x48] sm:$0xf]
        %v1704 = vld [vmem:[#allocation8 + $0x4c] sm:$0xf]
        %v1705 = vld [vmem:[#allocation8 + $0x50] sm:$0xf]
        %v1706 = vld [vmem:[#allocation8 + $0x54] sm:$0xf]
        %v1707 = vld [vmem:[#allocation8 + $0x58] sm:$0xf]
        %v1708 = vld [vmem:[#allocation8 + $0x5c] sm:$0xf]
        %v1709 = vld [vmem:[#allocation8 + $0x60] sm:$0xf]
        %v1710 = vld [vmem:[#allocation8 + $0x64] sm:$0xf]
        %v1711 = vld [vmem:[#allocation8 + $0x68] sm:$0xf]
        %v1712 = vld [vmem:[#allocation8 + $0x6c] sm:$0xf]
        %v1713 = vld [vmem:[#allocation8 + $0x70] sm:$0xf]
        %v1714 = vld [vmem:[#allocation8 + $0x74] sm:$0xf]
        %v1715 = vld [vmem:[#allocation8 + $0x78] sm:$0xf]
        %v1716 = vld [vmem:[#allocation8 + $0x7c] sm:$0xf]
        %v1717 = vld [vmem:[%s13] sm:$0x1]
        %v1719 = vperm.slane %v1717, 0
        %v1753 = vunpack.c.l.b16 %v1685
        %v1754 = vunpack.c.l.b16 %v1686
        %v1755 = vunpack.c.l.b16 %v1687
        %v1756 = vunpack.c.l.b16 %v1688
        %v1757 = vunpack.c.l.b16 %v1689
        %v1758 = vunpack.c.l.b16 %v1690
        %v1759 = vunpack.c.l.b16 %v1691
        %v1760 = vunpack.c.l.b16 %v1692
        %v1761 = vunpack.c.l.b16 %v1693
        %v1762 = vunpack.c.l.b16 %v1694
        %v1763 = vunpack.c.l.b16 %v1695
        %v1764 = vunpack.c.l.b16 %v1696
        %v1765 = vunpack.c.l.b16 %v1697
        %v1766 = vunpack.c.l.b16 %v1698
        %v1767 = vunpack.c.l.b16 %v1699
        %v1768 = vunpack.c.l.b16 %v1700
        %v1769 = vunpack.c.l.b16 %v1701
        %v1770 = vunpack.c.l.b16 %v1702
        %v1771 = vunpack.c.l.b16 %v1703
        %v1772 = vunpack.c.l.b16 %v1704
        %v1773 = vunpack.c.l.b16 %v1705
        %v1774 = vunpack.c.l.b16 %v1706
        %v1775 = vunpack.c.l.b16 %v1707
        %v1776 = vunpack.c.l.b16 %v1708
        %v1777 = vunpack.c.l.b16 %v1709
        %v1778 = vunpack.c.l.b16 %v1710
        %v1779 = vunpack.c.l.b16 %v1711
        %v1780 = vunpack.c.l.b16 %v1712
        %v1781 = vunpack.c.l.b16 %v1713
        %v1782 = vunpack.c.l.b16 %v1714
        %v1783 = vunpack.c.l.b16 %v1715
        %v1784 = vunpack.c.l.b16 %v1716
        %v1785 = vpack.c.b16 %v1754, %v1753
        %v1786 = vpack.c.b16 %v1756, %v1755
        %v1787 = vpack.c.b16 %v1758, %v1757
        %v1788 = vpack.c.b16 %v1760, %v1759
        %v1789 = vpack.c.b16 %v1762, %v1761
        %v1790 = vpack.c.b16 %v1764, %v1763
        %v1791 = vpack.c.b16 %v1766, %v1765
        %v1792 = vpack.c.b16 %v1768, %v1767
        %v1793 = vpack.c.b16 %v1770, %v1769
        %v1794 = vpack.c.b16 %v1772, %v1771
        %v1795 = vpack.c.b16 %v1774, %v1773
        %v1796 = vpack.c.b16 %v1776, %v1775
        %v1797 = vpack.c.b16 %v1778, %v1777
        %v1798 = vpack.c.b16 %v1780, %v1779
        %v1799 = vpack.c.b16 %v1782, %v1781
        %v1800 = vpack.c.b16 %v1784, %v1783
        %1817 = vmatpush.bf16.msra.mxu0 %v1792
        %1818 = vmatpush.bf16.msra.mxu0 %v1791
        %1819 = vmatpush.bf16.msra.mxu0 %v1790
        %1820 = vmatpush.bf16.msra.mxu0 %v1789
        %1821 = vmatpush.bf16.msra.mxu0 %v1788
        %1822 = vmatpush.bf16.msra.mxu0 %v1787
        %1823 = vmatpush.bf16.msra.mxu0 %v1786
        %1824 = vmatpush.bf16.msra.mxu0 %v1785
        %1825 = vmatmul.bf16.gmra.mxu0 %v1683
        %v1826 = vpop.f32.mrf.mxu0
        %v1827 = vadd.f32 %v1719, %v1826
        %v1828 = vpop.f32.mrf.mxu0
        %v1829 = vadd.f32 %v1719, %v1828
        %1830 = vdwg.mxu0
        %1831 = vmatpush.bf16.msra.mxu0 %v1800
        %1832 = vmatpush.bf16.msra.mxu0 %v1799
        %1833 = vmatpush.bf16.msra.mxu0 %v1798
        %1834 = vmatpush.bf16.msra.mxu0 %v1797
        %1835 = vmatpush.bf16.msra.mxu0 %v1796
        %1836 = vmatpush.bf16.msra.mxu0 %v1795
        %1837 = vmatpush.bf16.msra.mxu0 %v1794
        %1838 = vmatpush.bf16.msra.mxu0 %v1793
        %1839 = vmatmul.bf16.gmra.mxu0 %v1684
        %v1840 = vpop.f32.mrf.mxu0
        %v1841 = vadd.f32 %v1827, %v1840
        %v1842 = vpop.f32.mrf.mxu0
        %v1843 = vadd.f32 %v1829, %v1842
        %1844 = vdwg.mxu0
        %v1845 = vadd.f32 %v1494, %v1841
        %v1846 = vadd.f32 %v1495, %v1843
        %v1847 = vld [vmem:[%s14] sm:$0x1]
        %v1848 = vld [vmem:[%s15] sm:$0x1]
        %1849 = vadd.xlane.f32.xlu0 %v1845
        %v1850 = vpop.xlane.xlu0 %1849
        %1851 = vadd.xlane.f32.xlu0 %v1846
        %v1852 = vpop.xlane.xlu0 %1851
        %v1853 = vmul.f32 %v1850, %v626
        %v1854 = vmul.f32 %v1852, %v626
        %v1855 = vsub.f32 %v1845, %v1853
        %v1856 = vsub.f32 %v1846, %v1854
        %v1857 = vmul.f32 %v1855, %v1855
        %v1858 = vmul.f32 %v1856, %v1856
        %1859 = vadd.xlane.f32.xlu0 %v1857
        %v1860 = vpop.xlane.xlu0 %1859
        %1861 = vadd.xlane.f32.xlu0 %v1858
        %v1862 = vpop.xlane.xlu0 %1861
        %v1863 = vmul.f32 %v1860, %v626
        %v1864 = vmul.f32 %v1862, %v626
        %v1865 = vadd.f32 %v1863, 1e-06
        %v1866 = vadd.f32 %v1864, 1e-06
        %v1867 = vrsqrt.pop %v1865
        %v1868 = vmul.f32 %v1867, %v1865
        %v1869 = vmul.f32 %v1868, %v1867
        %v1870 = vmul.f32 0.5, %v1869
        %v1871 = vsub.f32 1.5, %v1870
        %v1872 = vmul.f32 %v1867, %v1871
        %vm1873 = vweird.f32 %v1865
        %vm1874 = vweird.f32 %v1867
        %vm1875 = vmor %vm1873, %vm1874
        %v1876 = vsel %vm1875, %v1867, %v1872
        %v1877 = vrsqrt.pop %v1866
        %v1878 = vmul.f32 %v1877, %v1866
        %v1879 = vmul.f32 %v1878, %v1877
        %v1880 = vmul.f32 0.5, %v1879
        %v1881 = vsub.f32 1.5, %v1880
        %v1882 = vmul.f32 %v1877, %v1881
        %vm1883 = vweird.f32 %v1866
        %vm1884 = vweird.f32 %v1877
        %vm1885 = vmor %vm1883, %vm1884
        %v1886 = vsel %vm1885, %v1877, %v1882
        %v1887 = vmul.f32 %v1855, %v1876
        %v1888 = vmul.f32 %v1856, %v1886
        %v1890 = vperm.slane %v1847, 0
        %v1892 = vmul.f32 %v1887, %v1890
        %v1893 = vmul.f32 %v1888, %v1890
        %v1895 = vperm.slane %v1848, 0
        %v1897 = vadd.f32 %v1892, %v1895
        %v1898 = vadd.f32 %v1893, %v1895
        %1899 = vst [vmem:[%s596] sm:$0xff] %v1897
        %1900 = vst [vmem:[%s596 + $0x8] sm:$0xff] %v1898
        %s1901 = sand.u32 %s387, 1
        %s1902 = scalar_lea.sflag [#allocation4], %s1901
        %s1903 = sand.u32 %s387, 1
        %s1904 = smul.addr %s1903, 16
        %s1905 = scalar_lea.vmem [#allocation10], %s1904
        // Predicated region
        $region101: #{transformer_encoder_forward.5} parent=83 // pred_check
          %p1906 = pneg %p397
        $region102: #{transformer_encoder_forward.5} parent=83 // pred_check_branch
          %1908 = sbr.rel (%p1906) target = $region104
        $region103: #{transformer_encoder_forward.5} parent=83 // pred_region
          %s1909 = smul.u32 2, %s33
          %1911 = vsyncadd %s1902, 0
          %s1912 = smul.addr %s1909, 8
          %s1913 = scalar_lea.hbm %s16, %s1912
          %s1914 = sshll.u32 %s1905, 4
          %s1915 = int_to_ptr.vmem [resolvable:$true] %s1914
          %s1916 = sshll.u32 %s1913, 4
          %s1917 = int_to_ptr.hbm [resolvable:$true] %s1916
          %1922 = dma.vmem_to_hbm [thread:$0]  %s1915, 256, %s1917, %s1902, 128, 128, 8
        $region104: #{transformer_encoder_forward.5} parent=83 // pred_fallthru
          _
      $region84: #{transformer_encoder_forward.5} parent=5 // pred_fallthru
        _
      %p1923 = scmp.le.s32.totalorder 2, %s28
      // Predicated region
      $region105: #{transformer_encoder_forward.5} parent=5 // pred_check
        %p1924 = pneg %p1923
      $region106: #{transformer_encoder_forward.5} parent=5 // pred_check_branch
        %1926 = sbr.rel (%p1924) target = $region108
      $region107: #{transformer_encoder_forward.5} parent=5 // pred_region
        %s1927 = ssub.s32 %s28, 2
        // Predicated region
        $region109: #{transformer_encoder_forward.5} parent=107 // pred_check
          %p1928 = pneg %p403
        $region110: #{transformer_encoder_forward.5} parent=107 // pred_check_branch
          %1930 = sbr.rel (%p1928) target = $region112
        $region111: #{transformer_encoder_forward.5} parent=107 // pred_region
          %s1931 = sand.u32 %s388, 1
          %s1932 = scalar_lea.sflag [#allocation4], %s1931
          %s1933 = sand.u32 %s388, 1
          %s1934 = smul.addr %s1933, 16
          %s1935 = scalar_lea.vmem [#allocation10], %s1934
          %1937 = dma.done %s1932, 256
        $region112: #{transformer_encoder_forward.5} parent=107 // pred_fallthru
          _
      $region108: #{transformer_encoder_forward.5} parent=5 // pred_fallthru
        _
    $region6: #{transformer_encoder_forward.5} parent=1 // loop_footer
      %s32 = sadd.s32 1, %s28
    $region7: #{transformer_encoder_forward.5} parent=1 // loop_footer_branch
      %27 = sbr.rel target = $region3
    $region8: #{transformer_encoder_forward.5} parent=1 // loop_exit
      _
    %1938 = vsyncpa [#allocation3], 1
    %s1939 = scalar_lea.sflag [#allocation3], 1
    %1940 = vsyncpa %s1939, 1
    %1941 = vsyncpa [#allocation6], 1
    %1942 = vsyncpa [#allocation9], 1
    %1943 = vsyncpa [#allocation4], 1
    %s1944 = scalar_lea.sflag [#allocation4], 1
    %1945 = vsyncpa %s1944, 1

</llo_original>
